<compile_context>
chip_gen: v7x
topology: tpu7x:2x2x1
jax: 0.10.0
libtpu: 0.0.40
codegen_flags: <defaults>
</compile_context>

<pallas_src>
import numpy as np
import jax
import jax.numpy as jnp
from jax import lax
from jax.experimental import pallas as pl
from jax.experimental.pallas import tpu as pltpu

# Geometry implied by the module: fc1 expects 128*5*3 features after three
# padded 3x3 convs, so the input is (N, 3, 5, 3) NCHW.
IMG_H, IMG_W = 5, 3
HW = IMG_H * IMG_W            # 15 spatial positions
C_IN = 3
CP = 128                      # padded channel / lane width (lane-dense)
SPB = 8                       # samples per grid block (multiple of 8; raise for
                              # large-batch throughput on v6e/v7x, e.g. 64)
BLK_ROWS = HW * SPB           # 120 rows per block, row = pos*SPB + local_sample
EPS = 1e-5


# ------------------------------ in-kernel helpers ---------------------------- #
def _shift_rows(a, d):
    """s[r] = a[(r + d) % BLK_ROWS].

    d is a positive multiple of SPB(=8), so both pieces are sublane-aligned:
    this is a whole-vreg sublane rotation (== pltpu.roll(a, BLK_ROWS - d, 0)),
    costing only vreg moves -- no MXU work, no layout shuffles.
    """
    return jnp.concatenate([a[d:, :], a[:d, :]], axis=0)


def _conv_bn_relu(a, m_ref, w_ref, b_ref):
    """One conv3x3(+folded BN)+ReLU layer as a single K=1152 im2col matmul.

    a: (BLK_ROWS, CP) f32, row = pos*SPB + sample, lanes = input channels.
    m_ref: (9, BLK_ROWS, CP) f32 0/1 boundary masks (one per tap).
    w_ref: (9*CP, CP) bf16 weight, row index = tap*CP + ci, BN scale folded.
    b_ref: (1, CP) f32 folded bias/shift.
    """
    bf16, f32 = jnp.bfloat16, jnp.float32
    taps = []
    for t in range(9):
        oh, ow = t // 3 - 1, t % 3 - 1
        delta = oh * IMG_W + ow            # tap offset in spatial positions
        if delta == 0:                      # centre tap: no shift, no mask
            taps.append(a.astype(bf16))
        else:
            s = _shift_rows(a, (SPB * delta) % BLK_ROWS)
            taps.append((s * m_ref[t]).astype(bf16))      # VPU mask, one cast
    patches = jnp.concatenate(taps, axis=1)               # (BLK_ROWS, 9*CP) bf16
    acc = jnp.dot(patches, w_ref[...], preferred_element_type=f32)
    return jnp.maximum(acc + b_ref[...], 0.0)              # f32 epilogue


# --------------------------------- kernel ------------------------------------ #
def _cnn_kernel(x_ref, m_ref, w1_ref, b1_ref, w2_ref, b2_ref, w3_ref, b3_ref,
                wf1_ref, bf1_ref, wf2_ref, bf2_ref, o_ref):
    bf16, f32 = jnp.bfloat16, jnp.float32

    a = x_ref[...]                                          # (120, 128) f32
    a = _conv_bn_relu(a, m_ref, w1_ref, b1_ref)
    a = _conv_bn_relu(a, m_ref, w2_ref, b2_ref)
    a = _conv_bn_relu(a, m_ref, w3_ref, b3_ref)

    # fc1: the NCHW flatten (k = c*15 + p) is realised by lane-concatenating the
    # 15 contiguous 8-row position slices -> (SPB, 15*128); wf1 is pre-packed as
    # [p*128 + c, j] so this is ONE K=1920 matmul.
    x1 = jnp.concatenate(
        [a[p * SPB:(p + 1) * SPB, :] for p in range(HW)], axis=1).astype(bf16)
    y1 = jnp.dot(x1, wf1_ref[...], preferred_element_type=f32)
    y1 = jnp.maximum(y1 + bf1_ref[...], 0.0)

    # fc2 (output lanes padded 10 -> 128 so the store is a full, unmasked vst).
    y2 = jnp.dot(y1.astype(bf16), wf2_ref[...],
                 preferred_element_type=f32) + bf2_ref[...]
    o_ref[...] = y2.astype(o_ref.dtype)


# --------------------------- parameter preparation --------------------------- #
def _pack_conv(w_oihw, conv_b, bn):
    """Fold eval-mode BN into the im2col weight/bias; pack as (9*128, 128) bf16."""
    gamma, beta, mean, var = bn
    co, ci = int(w_oihw.shape[0]), int(w_oihw.shape[1])
    scale = gamma / jnp.sqrt(var + EPS)                      # (co,)
    shift = (conv_b - mean) * scale + beta                   # (co,)
    wt = jnp.transpose(w_oihw, (2, 3, 1, 0)) * scale         # (kh, kw, ci, co)
    wt = wt.reshape(9, ci, co)                               # tap t = kh*3 + kw
    w_pad = jnp.zeros((9, CP, CP), jnp.float32).at[:, :ci, :co].set(wt)
    b_pad = jnp.zeros((1, CP), jnp.float32).at[0, :co].set(shift)
    return w_pad.reshape(9 * CP, CP).astype(jnp.bfloat16), b_pad


def _make_tap_masks():
    """(9, BLK_ROWS, CP) 0/1 masks; batch-independent (depends only on (h,w))."""
    m = np.zeros((9, BLK_ROWS, CP), np.float32)
    for t in range(9):
        oh, ow = t // 3 - 1, t % 3 - 1
        for p in range(HW):
            h, w = divmod(p, IMG_W)
            if 0 <= h + oh < IMG_H and 0 <= w + ow < IMG_W:
                m[t, p * SPB:(p + 1) * SPB, :] = 1.0
    return jnp.asarray(m)


def prepare_params(raw):
    """One-time, batch-size-independent packing (BN folding, transposes, padding)."""
    prep = {"mask": _make_tap_masks()}
    prep["w1"], prep["b1"] = _pack_conv(raw["conv1_w"], raw["conv1_b"], raw["bn1"])
    prep["w2"], prep["b2"] = _pack_conv(raw["conv2_w"], raw["conv2_b"], raw["bn2"])
    prep["w3"], prep["b3"] = _pack_conv(raw["conv3_w"], raw["conv3_b"], raw["bn3"])
    # fc1: PyTorch weight (128, 1920), input index k = c*15 + p  ->  [p*128 + c, j]
    wf1 = raw["fc1_w"].reshape(128, CP, HW)                  # (j, c, p)
    wf1 = jnp.transpose(wf1, (2, 1, 0)).reshape(HW * CP, 128)
    prep["wf1"] = wf1.astype(jnp.bfloat16)
    prep["bf1"] = raw["fc1_b"].reshape(1, 128).astype(jnp.float32)
    # fc2: (10, 128) -> (128, 128) with output lanes padded 10 -> 128
    wf2 = jnp.zeros((128, CP), jnp.float32).at[:, :10].set(raw["fc2_w"].T)
    prep["wf2"] = wf2.astype(jnp.bfloat16)
    prep["bf2"] = jnp.zeros((1, CP), jnp.float32).at[0, :10].set(raw["fc2_b"])
    return prep


def _resident_spec(arr):
    """Full-array block with a constant index_map: stays VMEM-resident across grid."""
    nd = arr.ndim
    return pl.BlockSpec(arr.shape, lambda *_: (0,) * nd)


# ----------------------------------- forward --------------------------------- #
def cnn_forward(prep, x_nchw):
    """x_nchw: (N, 3, 5, 3) float32 (PyTorch NCHW). Returns (N, 10) logits."""
    n = x_nchw.shape[0]
    nblocks = -(-n // SPB)
    npad = nblocks * SPB

    # NCHW -> (n, pos, c); pad samples to a whole number of blocks and lanes to
    # 128; then reorder rows position-major inside each block: row = pos*8 + n.
    a0 = jnp.transpose(x_nchw, (0, 2, 3, 1)).reshape(n, HW, C_IN).astype(jnp.float32)
    a0 = jnp.pad(a0, ((0, npad - n), (0, 0), (0, CP - C_IN)))
    a0 = a0.reshape(nblocks, SPB, HW, CP).transpose(0, 2, 1, 3)
    a0 = a0.reshape(nblocks * BLK_ROWS, CP)

    flops = (2 * nblocks * BLK_ROWS * 3 * (9 * CP) * CP        # three convs
             + 2 * npad * (HW * CP) * CP                       # fc1
             + 2 * npad * CP * CP)                             # fc2
    bytes_accessed = (a0.size * 4 + 9 * BLK_ROWS * CP * 4
                      + (3 * 9 * CP * CP + HW * CP * CP + CP * CP) * 2
                      + 4 * CP * 4 + npad * CP * 4)

    out = pl.pallas_call(
        _cnn_kernel,
        out_shape=jax.ShapeDtypeStruct((npad, CP), jnp.float32),
        grid=(nblocks,),
        in_specs=[
            pl.BlockSpec((BLK_ROWS, CP), lambda i: (i, 0)),    # x rows (pipelined)
            _resident_spec(prep["mask"]),
            _resident_spec(prep["w1"]), _resident_spec(prep["b1"]),
            _resident_spec(prep["w2"]), _resident_spec(prep["b2"]),
            _resident_spec(prep["w3"]), _resident_spec(prep["b3"]),
            _resident_spec(prep["wf1"]), _resident_spec(prep["bf1"]),
            _resident_spec(prep["wf2"]), _resident_spec(prep["bf2"]),
        ],
        out_specs=pl.BlockSpec((SPB, CP), lambda i: (i, 0)),
        compiler_params=pltpu.CompilerParams(
            dimension_semantics=("parallel",),                 # megacore / v7x 2 TCs
        ),
        cost_estimate=pl.CostEstimate(flops=int(flops), transcendentals=0,
                                      bytes_accessed=int(bytes_accessed)),
    )(a0, prep["mask"],
      prep["w1"], prep["b1"], prep["w2"], prep["b2"], prep["w3"], prep["b3"],
      prep["wf1"], prep["bf1"], prep["wf2"], prep["bf2"])
    return out[:n, :10]


# ------------------------------- raw parameters ------------------------------ #
def init_raw_params(key):
    ks = jax.random.split(key, 20)
    p = {}
    p["conv1_w"] = 0.1 * jax.random.normal(ks[0], (32, 3, 3, 3), jnp.float32)
    p["conv1_b"] = 0.1 * jax.random.normal(ks[1], (32,), jnp.float32)
    p["bn1"] = (jax.random.uniform(ks[2], (32,), minval=0.5, maxval=1.5),
                0.1 * jax.random.normal(ks[3], (32,)),
                0.1 * jax.random.normal(ks[4], (32,)),
                jax.random.uniform(ks[5], (32,), minval=0.5, maxval=1.5))
    p["conv2_w"] = 0.05 * jax.random.normal(ks[6], (64, 32, 3, 3), jnp.float32)
    p["conv2_b"] = 0.1 * jax.random.normal(ks[7], (64,), jnp.float32)
    p["bn2"] = (jax.random.uniform(ks[8], (64,), minval=0.5, maxval=1.5),
                0.1 * jax.random.normal(ks[9], (64,)),
                0.1 * jax.random.normal(ks[10], (64,)),
                jax.random.uniform(ks[11], (64,), minval=0.5, maxval=1.5))
    p["conv3_w"] = 0.05 * jax.random.normal(ks[12], (128, 64, 3, 3), jnp.float32)
    p["conv3_b"] = 0.1 * jax.random.normal(ks[13], (128,), jnp.float32)
    p["bn3"] = (jax.random.uniform(ks[14], (128,), minval=0.5, maxval=1.5),
                0.1 * jax.random.normal(ks[15], (128,)),
                0.1 * jax.random.normal(ks[16], (128,)),
                jax.random.uniform(ks[17], (128,), minval=0.5, maxval=1.5))
    p["fc1_w"] = 0.02 * jax.random.normal(ks[18], (128, 128 * 5 * 3), jnp.float32)
    p["fc1_b"] = jnp.zeros((128,), jnp.float32)
    p["fc2_w"] = 0.05 * jax.random.normal(ks[19], (10, 128), jnp.float32)
    p["fc2_b"] = jnp.zeros((10,), jnp.float32)
    return p


# -------------------------- pure-JAX reference (f32) ------------------------- #
def reference_forward(raw, x_nchw):
    def conv_bn_relu(x, w, b, bn):
        gamma, beta, mean, var = bn
        y = lax.conv_general_dilated(x, w, (1, 1), ((1, 1), (1, 1)),
                                     dimension_numbers=("NCHW", "OIHW", "NCHW"))
        y = y + b[None, :, None, None]
        y = (y - mean[None, :, None, None]) / jnp.sqrt(var[None, :, None, None] + EPS)
        y = gamma[None, :, None, None] * y + beta[None, :, None, None]
        return jnp.maximum(y, 0.0)

    x = conv_bn_relu(x_nchw, raw["conv1_w"], raw["conv1_b"], raw["bn1"])
    x = conv_bn_relu(x, raw["conv2_w"], raw["conv2_b"], raw["bn2"])
    x = conv_bn_relu(x, raw["conv3_w"], raw["conv3_b"], raw["bn3"])
    x = x.reshape(x.shape[0], -1)                    # NCHW flatten == view(-1, 1920)
    x = jnp.maximum(x @ raw["fc1_w"].T + raw["fc1_b"], 0.0)
    return x @ raw["fc2_w"].T + raw["fc2_b"]


if __name__ == "__main__":
    key = jax.random.PRNGKey(0)
    kx, kp = jax.random.split(key)
    x = jax.random.normal(kx, (2, 3, 5, 3), jnp.float32)     # NCHW, like PyTorch
    raw = init_raw_params(kp)
    prep = prepare_params(raw)                               # batch-size independent

    fwd = jax.jit(cnn_forward)
    out = jax.block_until_ready(fwd(prep, x))
    assert out.shape == (2, 10), out.shape
    assert bool(jnp.all(jnp.isfinite(out)))

    ref = reference_forward(raw, x)                          # f32 reference
    err = float(jnp.max(jnp.abs(out - ref)))
    assert bool(jnp.allclose(out, ref, rtol=5e-2, atol=5e-2)), err
    print("KERNEL_OK")
</pallas_src>

<mosaic_0001>
module attributes {stable_mosaic.version = 11 : i64} {
  func.func @_cnn_kernel(%arg0: i32, %arg1: memref<120x128xf32, #tpu.memory_space<vmem>>, %arg2: memref<9x120x128xf32, #tpu.memory_space<vmem>>, %arg3: memref<1152x128xbf16, #tpu.memory_space<vmem>>, %arg4: memref<1x128xf32, #tpu.memory_space<vmem>>, %arg5: memref<1152x128xbf16, #tpu.memory_space<vmem>>, %arg6: memref<1x128xf32, #tpu.memory_space<vmem>>, %arg7: memref<1152x128xbf16, #tpu.memory_space<vmem>>, %arg8: memref<1x128xf32, #tpu.memory_space<vmem>>, %arg9: memref<1920x128xbf16, #tpu.memory_space<vmem>>, %arg10: memref<1x128xf32, #tpu.memory_space<vmem>>, %arg11: memref<128x128xbf16, #tpu.memory_space<vmem>>, %arg12: memref<1x128xf32, #tpu.memory_space<vmem>>, %arg13: memref<8x128xf32, #tpu.memory_space<vmem>>) attributes {dimension_semantics = [#tpu.dimension_semantics<parallel>], iteration_bounds = array<i64: 1>, scalar_prefetch = 0 : i64, scratch_operands = 0 : i64, tpu.core_type = #tpu.core_type<tc>, window_params = [{transform_indices = @transform_0, window_bounds = array<i64: 120, 128>}, {pipeline_mode = #tpu.pipeline_mode<synchronous>, transform_indices = @transform_1, window_bounds = array<i64: 9, 120, 128>}, {pipeline_mode = #tpu.pipeline_mode<synchronous>, transform_indices = @transform_2, window_bounds = array<i64: 1152, 128>}, {pipeline_mode = #tpu.pipeline_mode<synchronous>, transform_indices = @transform_3, window_bounds = array<i64: 1, 128>}, {pipeline_mode = #tpu.pipeline_mode<synchronous>, transform_indices = @transform_4, window_bounds = array<i64: 1152, 128>}, {pipeline_mode = #tpu.pipeline_mode<synchronous>, transform_indices = @transform_5, window_bounds = array<i64: 1, 128>}, {pipeline_mode = #tpu.pipeline_mode<synchronous>, transform_indices = @transform_6, window_bounds = array<i64: 1152, 128>}, {pipeline_mode = #tpu.pipeline_mode<synchronous>, transform_indices = @transform_7, window_bounds = array<i64: 1, 128>}, {pipeline_mode = #tpu.pipeline_mode<synchronous>, transform_indices = @transform_8, window_bounds = array<i64: 1920, 128>}, {pipeline_mode = #tpu.pipeline_mode<synchronous>, transform_indices = @transform_9, window_bounds = array<i64: 1, 128>}, {pipeline_mode = #tpu.pipeline_mode<synchronous>, transform_indices = @transform_10, window_bounds = array<i64: 128, 128>}, {pipeline_mode = #tpu.pipeline_mode<synchronous>, transform_indices = @transform_11, window_bounds = array<i64: 1, 128>}, {transform_indices = @transform_12, window_bounds = array<i64: 8, 128>}]} {
    %c0 = arith.constant 0 : index
    %c0_0 = arith.constant 0 : index
    %0 = vector.load %arg1[%c0, %c0_0] : memref<120x128xf32, #tpu.memory_space<vmem>>, vector<120x128xf32>
    %1 = vector.extract_strided_slice %0 {offsets = [88, 0], sizes = [32, 128], strides = [1, 1]} : vector<120x128xf32> to vector<32x128xf32>
    %2 = vector.extract_strided_slice %0 {offsets = [0, 0], sizes = [88, 128], strides = [1, 1]} : vector<120x128xf32> to vector<88x128xf32>
    %3 = tpu.concatenate %1, %2 in 0 : vector<32x128xf32>, vector<88x128xf32> -> vector<120x128xf32>
    %c0_1 = arith.constant 0 : index
    %c0_2 = arith.constant 0 : index
    %c0_3 = arith.constant 0 : index
    %4 = vector.load %arg2[%c0_1, %c0_2, %c0_3] : memref<9x120x128xf32, #tpu.memory_space<vmem>>, vector<1x120x128xf32>
    %5 = vector.shape_cast %4 : vector<1x120x128xf32> to vector<120x128xf32>
    %6 = arith.mulf %3, %5 : vector<120x128xf32>
    %7 = arith.truncf %6 : vector<120x128xf32> to vector<120x128xbf16>
    %8 = vector.extract_strided_slice %0 {offsets = [96, 0], sizes = [24, 128], strides = [1, 1]} : vector<120x128xf32> to vector<24x128xf32>
    %9 = vector.extract_strided_slice %0 {offsets = [0, 0], sizes = [96, 128], strides = [1, 1]} : vector<120x128xf32> to vector<96x128xf32>
    %10 = tpu.concatenate %8, %9 in 0 : vector<24x128xf32>, vector<96x128xf32> -> vector<120x128xf32>
    %c1 = arith.constant 1 : index
    %c0_4 = arith.constant 0 : index
    %c0_5 = arith.constant 0 : index
    %11 = vector.load %arg2[%c1, %c0_4, %c0_5] : memref<9x120x128xf32, #tpu.memory_space<vmem>>, vector<1x120x128xf32>
    %12 = vector.shape_cast %11 : vector<1x120x128xf32> to vector<120x128xf32>
    %13 = arith.mulf %10, %12 : vector<120x128xf32>
    %14 = arith.truncf %13 : vector<120x128xf32> to vector<120x128xbf16>
    %15 = vector.extract_strided_slice %0 {offsets = [104, 0], sizes = [16, 128], strides = [1, 1]} : vector<120x128xf32> to vector<16x128xf32>
    %16 = vector.extract_strided_slice %0 {offsets = [0, 0], sizes = [104, 128], strides = [1, 1]} : vector<120x128xf32> to vector<104x128xf32>
    %17 = tpu.concatenate %15, %16 in 0 : vector<16x128xf32>, vector<104x128xf32> -> vector<120x128xf32>
    %c2 = arith.constant 2 : index
    %c0_6 = arith.constant 0 : index
    %c0_7 = arith.constant 0 : index
    %18 = vector.load %arg2[%c2, %c0_6, %c0_7] : memref<9x120x128xf32, #tpu.memory_space<vmem>>, vector<1x120x128xf32>
    %19 = vector.shape_cast %18 : vector<1x120x128xf32> to vector<120x128xf32>
    %20 = arith.mulf %17, %19 : vector<120x128xf32>
    %21 = arith.truncf %20 : vector<120x128xf32> to vector<120x128xbf16>
    %22 = vector.extract_strided_slice %0 {offsets = [112, 0], sizes = [8, 128], strides = [1, 1]} : vector<120x128xf32> to vector<8x128xf32>
    %23 = vector.extract_strided_slice %0 {offsets = [0, 0], sizes = [112, 128], strides = [1, 1]} : vector<120x128xf32> to vector<112x128xf32>
    %24 = tpu.concatenate %22, %23 in 0 : vector<8x128xf32>, vector<112x128xf32> -> vector<120x128xf32>
    %c3 = arith.constant 3 : index
    %c0_8 = arith.constant 0 : index
    %c0_9 = arith.constant 0 : index
    %25 = vector.load %arg2[%c3, %c0_8, %c0_9] : memref<9x120x128xf32, #tpu.memory_space<vmem>>, vector<1x120x128xf32>
    %26 = vector.shape_cast %25 : vector<1x120x128xf32> to vector<120x128xf32>
    %27 = arith.mulf %24, %26 : vector<120x128xf32>
    %28 = arith.truncf %27 : vector<120x128xf32> to vector<120x128xbf16>
    %29 = arith.truncf %0 : vector<120x128xf32> to vector<120x128xbf16>
    %30 = vector.extract_strided_slice %0 {offsets = [8, 0], sizes = [112, 128], strides = [1, 1]} : vector<120x128xf32> to vector<112x128xf32>
    %31 = vector.extract_strided_slice %0 {offsets = [0, 0], sizes = [8, 128], strides = [1, 1]} : vector<120x128xf32> to vector<8x128xf32>
    %32 = tpu.concatenate %30, %31 in 0 : vector<112x128xf32>, vector<8x128xf32> -> vector<120x128xf32>
    %c5 = arith.constant 5 : index
    %c0_10 = arith.constant 0 : index
    %c0_11 = arith.constant 0 : index
    %33 = vector.load %arg2[%c5, %c0_10, %c0_11] : memref<9x120x128xf32, #tpu.memory_space<vmem>>, vector<1x120x128xf32>
    %34 = vector.shape_cast %33 : vector<1x120x128xf32> to vector<120x128xf32>
    %35 = arith.mulf %32, %34 : vector<120x128xf32>
    %36 = arith.truncf %35 : vector<120x128xf32> to vector<120x128xbf16>
    %37 = vector.extract_strided_slice %0 {offsets = [16, 0], sizes = [104, 128], strides = [1, 1]} : vector<120x128xf32> to vector<104x128xf32>
    %38 = vector.extract_strided_slice %0 {offsets = [0, 0], sizes = [16, 128], strides = [1, 1]} : vector<120x128xf32> to vector<16x128xf32>
    %39 = tpu.concatenate %37, %38 in 0 : vector<104x128xf32>, vector<16x128xf32> -> vector<120x128xf32>
    %c6 = arith.constant 6 : index
    %c0_12 = arith.constant 0 : index
    %c0_13 = arith.constant 0 : index
    %40 = vector.load %arg2[%c6, %c0_12, %c0_13] : memref<9x120x128xf32, #tpu.memory_space<vmem>>, vector<1x120x128xf32>
    %41 = vector.shape_cast %40 : vector<1x120x128xf32> to vector<120x128xf32>
    %42 = arith.mulf %39, %41 : vector<120x128xf32>
    %43 = arith.truncf %42 : vector<120x128xf32> to vector<120x128xbf16>
    %44 = vector.extract_strided_slice %0 {offsets = [24, 0], sizes = [96, 128], strides = [1, 1]} : vector<120x128xf32> to vector<96x128xf32>
    %45 = vector.extract_strided_slice %0 {offsets = [0, 0], sizes = [24, 128], strides = [1, 1]} : vector<120x128xf32> to vector<24x128xf32>
    %46 = tpu.concatenate %44, %45 in 0 : vector<96x128xf32>, vector<24x128xf32> -> vector<120x128xf32>
    %c7 = arith.constant 7 : index
    %c0_14 = arith.constant 0 : index
    %c0_15 = arith.constant 0 : index
    %47 = vector.load %arg2[%c7, %c0_14, %c0_15] : memref<9x120x128xf32, #tpu.memory_space<vmem>>, vector<1x120x128xf32>
    %48 = vector.shape_cast %47 : vector<1x120x128xf32> to vector<120x128xf32>
    %49 = arith.mulf %46, %48 : vector<120x128xf32>
    %50 = arith.truncf %49 : vector<120x128xf32> to vector<120x128xbf16>
    %51 = vector.extract_strided_slice %0 {offsets = [32, 0], sizes = [88, 128], strides = [1, 1]} : vector<120x128xf32> to vector<88x128xf32>
    %52 = vector.extract_strided_slice %0 {offsets = [0, 0], sizes = [32, 128], strides = [1, 1]} : vector<120x128xf32> to vector<32x128xf32>
    %53 = tpu.concatenate %51, %52 in 0 : vector<88x128xf32>, vector<32x128xf32> -> vector<120x128xf32>
    %c8 = arith.constant 8 : index
    %c0_16 = arith.constant 0 : index
    %c0_17 = arith.constant 0 : index
    %54 = vector.load %arg2[%c8, %c0_16, %c0_17] : memref<9x120x128xf32, #tpu.memory_space<vmem>>, vector<1x120x128xf32>
    %55 = vector.shape_cast %54 : vector<1x120x128xf32> to vector<120x128xf32>
    %56 = arith.mulf %53, %55 : vector<120x128xf32>
    %57 = arith.truncf %56 : vector<120x128xf32> to vector<120x128xbf16>
    %58 = tpu.concatenate %7, %14, %21, %28, %29, %36, %43, %50, %57 in 1 : vector<120x128xbf16>, vector<120x128xbf16>, vector<120x128xbf16>, vector<120x128xbf16>, vector<120x128xbf16>, vector<120x128xbf16>, vector<120x128xbf16>, vector<120x128xbf16>, vector<120x128xbf16> -> vector<120x1152xbf16>
    %c0_18 = arith.constant 0 : index
    %c0_19 = arith.constant 0 : index
    %59 = vector.load %arg3[%c0_18, %c0_19] : memref<1152x128xbf16, #tpu.memory_space<vmem>>, vector<1152x128xbf16>
    %cst = arith.constant dense<0.000000e+00> : vector<120x128xf32>
    %60 = tpu.matmul %58, %59, %cst {dimension_numbers = #tpu.dot_dimension_numbers<[1], [0], [0], [1], [0, 0, 1, 1], [], []>} : vector<120x1152xbf16>, vector<1152x128xbf16>, vector<120x128xf32> -> vector<120x128xf32>
    %c0_20 = arith.constant 0 : index
    %c0_21 = arith.constant 0 : index
    %61 = vector.load %arg4[%c0_20, %c0_21] : memref<1x128xf32, #tpu.memory_space<vmem>>, vector<1x128xf32>
    %62 = vector.broadcast %61 : vector<1x128xf32> to vector<120x128xf32>
    %63 = arith.addf %60, %62 : vector<120x128xf32>
    %cst_22 = arith.constant 0.000000e+00 : f32
    %64 = vector.broadcast %cst_22 : f32 to vector<120x128xf32>
    %65 = arith.maximumf %63, %64 : vector<120x128xf32>
    %66 = vector.extract_strided_slice %65 {offsets = [88, 0], sizes = [32, 128], strides = [1, 1]} : vector<120x128xf32> to vector<32x128xf32>
    %67 = vector.extract_strided_slice %65 {offsets = [0, 0], sizes = [88, 128], strides = [1, 1]} : vector<120x128xf32> to vector<88x128xf32>
    %68 = tpu.concatenate %66, %67 in 0 : vector<32x128xf32>, vector<88x128xf32> -> vector<120x128xf32>
    %c0_23 = arith.constant 0 : index
    %c0_24 = arith.constant 0 : index
    %c0_25 = arith.constant 0 : index
    %69 = vector.load %arg2[%c0_23, %c0_24, %c0_25] : memref<9x120x128xf32, #tpu.memory_space<vmem>>, vector<1x120x128xf32>
    %70 = vector.shape_cast %69 : vector<1x120x128xf32> to vector<120x128xf32>
    %71 = arith.mulf %68, %70 : vector<120x128xf32>
    %72 = arith.truncf %71 : vector<120x128xf32> to vector<120x128xbf16>
    %73 = vector.extract_strided_slice %65 {offsets = [96, 0], sizes = [24, 128], strides = [1, 1]} : vector<120x128xf32> to vector<24x128xf32>
    %74 = vector.extract_strided_slice %65 {offsets = [0, 0], sizes = [96, 128], strides = [1, 1]} : vector<120x128xf32> to vector<96x128xf32>
    %75 = tpu.concatenate %73, %74 in 0 : vector<24x128xf32>, vector<96x128xf32> -> vector<120x128xf32>
    %c1_26 = arith.constant 1 : index
    %c0_27 = arith.constant 0 : index
    %c0_28 = arith.constant 0 : index
    %76 = vector.load %arg2[%c1_26, %c0_27, %c0_28] : memref<9x120x128xf32, #tpu.memory_space<vmem>>, vector<1x120x128xf32>
    %77 = vector.shape_cast %76 : vector<1x120x128xf32> to vector<120x128xf32>
    %78 = arith.mulf %75, %77 : vector<120x128xf32>
    %79 = arith.truncf %78 : vector<120x128xf32> to vector<120x128xbf16>
    %80 = vector.extract_strided_slice %65 {offsets = [104, 0], sizes = [16, 128], strides = [1, 1]} : vector<120x128xf32> to vector<16x128xf32>
    %81 = vector.extract_strided_slice %65 {offsets = [0, 0], sizes = [104, 128], strides = [1, 1]} : vector<120x128xf32> to vector<104x128xf32>
    %82 = tpu.concatenate %80, %81 in 0 : vector<16x128xf32>, vector<104x128xf32> -> vector<120x128xf32>
    %c2_29 = arith.constant 2 : index
    %c0_30 = arith.constant 0 : index
    %c0_31 = arith.constant 0 : index
    %83 = vector.load %arg2[%c2_29, %c0_30, %c0_31] : memref<9x120x128xf32, #tpu.memory_space<vmem>>, vector<1x120x128xf32>
    %84 = vector.shape_cast %83 : vector<1x120x128xf32> to vector<120x128xf32>
    %85 = arith.mulf %82, %84 : vector<120x128xf32>
    %86 = arith.truncf %85 : vector<120x128xf32> to vector<120x128xbf16>
    %87 = vector.extract_strided_slice %65 {offsets = [112, 0], sizes = [8, 128], strides = [1, 1]} : vector<120x128xf32> to vector<8x128xf32>
    %88 = vector.extract_strided_slice %65 {offsets = [0, 0], sizes = [112, 128], strides = [1, 1]} : vector<120x128xf32> to vector<112x128xf32>
    %89 = tpu.concatenate %87, %88 in 0 : vector<8x128xf32>, vector<112x128xf32> -> vector<120x128xf32>
    %c3_32 = arith.constant 3 : index
    %c0_33 = arith.constant 0 : index
    %c0_34 = arith.constant 0 : index
    %90 = vector.load %arg2[%c3_32, %c0_33, %c0_34] : memref<9x120x128xf32, #tpu.memory_space<vmem>>, vector<1x120x128xf32>
    %91 = vector.shape_cast %90 : vector<1x120x128xf32> to vector<120x128xf32>
    %92 = arith.mulf %89, %91 : vector<120x128xf32>
    %93 = arith.truncf %92 : vector<120x128xf32> to vector<120x128xbf16>
    %94 = arith.truncf %65 : vector<120x128xf32> to vector<120x128xbf16>
    %95 = vector.extract_strided_slice %65 {offsets = [8, 0], sizes = [112, 128], strides = [1, 1]} : vector<120x128xf32> to vector<112x128xf32>
    %96 = vector.extract_strided_slice %65 {offsets = [0, 0], sizes = [8, 128], strides = [1, 1]} : vector<120x128xf32> to vector<8x128xf32>
    %97 = tpu.concatenate %95, %96 in 0 : vector<112x128xf32>, vector<8x128xf32> -> vector<120x128xf32>
    %c5_35 = arith.constant 5 : index
    %c0_36 = arith.constant 0 : index
    %c0_37 = arith.constant 0 : index
    %98 = vector.load %arg2[%c5_35, %c0_36, %c0_37] : memref<9x120x128xf32, #tpu.memory_space<vmem>>, vector<1x120x128xf32>
    %99 = vector.shape_cast %98 : vector<1x120x128xf32> to vector<120x128xf32>
    %100 = arith.mulf %97, %99 : vector<120x128xf32>
    %101 = arith.truncf %100 : vector<120x128xf32> to vector<120x128xbf16>
    %102 = vector.extract_strided_slice %65 {offsets = [16, 0], sizes = [104, 128], strides = [1, 1]} : vector<120x128xf32> to vector<104x128xf32>
    %103 = vector.extract_strided_slice %65 {offsets = [0, 0], sizes = [16, 128], strides = [1, 1]} : vector<120x128xf32> to vector<16x128xf32>
    %104 = tpu.concatenate %102, %103 in 0 : vector<104x128xf32>, vector<16x128xf32> -> vector<120x128xf32>
    %c6_38 = arith.constant 6 : index
    %c0_39 = arith.constant 0 : index
    %c0_40 = arith.constant 0 : index
    %105 = vector.load %arg2[%c6_38, %c0_39, %c0_40] : memref<9x120x128xf32, #tpu.memory_space<vmem>>, vector<1x120x128xf32>
    %106 = vector.shape_cast %105 : vector<1x120x128xf32> to vector<120x128xf32>
    %107 = arith.mulf %104, %106 : vector<120x128xf32>
    %108 = arith.truncf %107 : vector<120x128xf32> to vector<120x128xbf16>
    %109 = vector.extract_strided_slice %65 {offsets = [24, 0], sizes = [96, 128], strides = [1, 1]} : vector<120x128xf32> to vector<96x128xf32>
    %110 = vector.extract_strided_slice %65 {offsets = [0, 0], sizes = [24, 128], strides = [1, 1]} : vector<120x128xf32> to vector<24x128xf32>
    %111 = tpu.concatenate %109, %110 in 0 : vector<96x128xf32>, vector<24x128xf32> -> vector<120x128xf32>
    %c7_41 = arith.constant 7 : index
    %c0_42 = arith.constant 0 : index
    %c0_43 = arith.constant 0 : index
    %112 = vector.load %arg2[%c7_41, %c0_42, %c0_43] : memref<9x120x128xf32, #tpu.memory_space<vmem>>, vector<1x120x128xf32>
    %113 = vector.shape_cast %112 : vector<1x120x128xf32> to vector<120x128xf32>
    %114 = arith.mulf %111, %113 : vector<120x128xf32>
    %115 = arith.truncf %114 : vector<120x128xf32> to vector<120x128xbf16>
    %116 = vector.extract_strided_slice %65 {offsets = [32, 0], sizes = [88, 128], strides = [1, 1]} : vector<120x128xf32> to vector<88x128xf32>
    %117 = vector.extract_strided_slice %65 {offsets = [0, 0], sizes = [32, 128], strides = [1, 1]} : vector<120x128xf32> to vector<32x128xf32>
    %118 = tpu.concatenate %116, %117 in 0 : vector<88x128xf32>, vector<32x128xf32> -> vector<120x128xf32>
    %c8_44 = arith.constant 8 : index
    %c0_45 = arith.constant 0 : index
    %c0_46 = arith.constant 0 : index
    %119 = vector.load %arg2[%c8_44, %c0_45, %c0_46] : memref<9x120x128xf32, #tpu.memory_space<vmem>>, vector<1x120x128xf32>
    %120 = vector.shape_cast %119 : vector<1x120x128xf32> to vector<120x128xf32>
    %121 = arith.mulf %118, %120 : vector<120x128xf32>
    %122 = arith.truncf %121 : vector<120x128xf32> to vector<120x128xbf16>
    %123 = tpu.concatenate %72, %79, %86, %93, %94, %101, %108, %115, %122 in 1 : vector<120x128xbf16>, vector<120x128xbf16>, vector<120x128xbf16>, vector<120x128xbf16>, vector<120x128xbf16>, vector<120x128xbf16>, vector<120x128xbf16>, vector<120x128xbf16>, vector<120x128xbf16> -> vector<120x1152xbf16>
    %c0_47 = arith.constant 0 : index
    %c0_48 = arith.constant 0 : index
    %124 = vector.load %arg5[%c0_47, %c0_48] : memref<1152x128xbf16, #tpu.memory_space<vmem>>, vector<1152x128xbf16>
    %cst_49 = arith.constant dense<0.000000e+00> : vector<120x128xf32>
    %125 = tpu.matmul %123, %124, %cst_49 {dimension_numbers = #tpu.dot_dimension_numbers<[1], [0], [0], [1], [0, 0, 1, 1], [], []>} : vector<120x1152xbf16>, vector<1152x128xbf16>, vector<120x128xf32> -> vector<120x128xf32>
    %c0_50 = arith.constant 0 : index
    %c0_51 = arith.constant 0 : index
    %126 = vector.load %arg6[%c0_50, %c0_51] : memref<1x128xf32, #tpu.memory_space<vmem>>, vector<1x128xf32>
    %127 = vector.broadcast %126 : vector<1x128xf32> to vector<120x128xf32>
    %128 = arith.addf %125, %127 : vector<120x128xf32>
    %cst_52 = arith.constant 0.000000e+00 : f32
    %129 = vector.broadcast %cst_52 : f32 to vector<120x128xf32>
    %130 = arith.maximumf %128, %129 : vector<120x128xf32>
    %131 = vector.extract_strided_slice %130 {offsets = [88, 0], sizes = [32, 128], strides = [1, 1]} : vector<120x128xf32> to vector<32x128xf32>
    %132 = vector.extract_strided_slice %130 {offsets = [0, 0], sizes = [88, 128], strides = [1, 1]} : vector<120x128xf32> to vector<88x128xf32>
    %133 = tpu.concatenate %131, %132 in 0 : vector<32x128xf32>, vector<88x128xf32> -> vector<120x128xf32>
    %c0_53 = arith.constant 0 : index
    %c0_54 = arith.constant 0 : index
    %c0_55 = arith.constant 0 : index
    %134 = vector.load %arg2[%c0_53, %c0_54, %c0_55] : memref<9x120x128xf32, #tpu.memory_space<vmem>>, vector<1x120x128xf32>
    %135 = vector.shape_cast %134 : vector<1x120x128xf32> to vector<120x128xf32>
    %136 = arith.mulf %133, %135 : vector<120x128xf32>
    %137 = arith.truncf %136 : vector<120x128xf32> to vector<120x128xbf16>
    %138 = vector.extract_strided_slice %130 {offsets = [96, 0], sizes = [24, 128], strides = [1, 1]} : vector<120x128xf32> to vector<24x128xf32>
    %139 = vector.extract_strided_slice %130 {offsets = [0, 0], sizes = [96, 128], strides = [1, 1]} : vector<120x128xf32> to vector<96x128xf32>
    %140 = tpu.concatenate %138, %139 in 0 : vector<24x128xf32>, vector<96x128xf32> -> vector<120x128xf32>
    %c1_56 = arith.constant 1 : index
    %c0_57 = arith.constant 0 : index
    %c0_58 = arith.constant 0 : index
    %141 = vector.load %arg2[%c1_56, %c0_57, %c0_58] : memref<9x120x128xf32, #tpu.memory_space<vmem>>, vector<1x120x128xf32>
    %142 = vector.shape_cast %141 : vector<1x120x128xf32> to vector<120x128xf32>
    %143 = arith.mulf %140, %142 : vector<120x128xf32>
    %144 = arith.truncf %143 : vector<120x128xf32> to vector<120x128xbf16>
    %145 = vector.extract_strided_slice %130 {offsets = [104, 0], sizes = [16, 128], strides = [1, 1]} : vector<120x128xf32> to vector<16x128xf32>
    %146 = vector.extract_strided_slice %130 {offsets = [0, 0], sizes = [104, 128], strides = [1, 1]} : vector<120x128xf32> to vector<104x128xf32>
    %147 = tpu.concatenate %145, %146 in 0 : vector<16x128xf32>, vector<104x128xf32> -> vector<120x128xf32>
    %c2_59 = arith.constant 2 : index
    %c0_60 = arith.constant 0 : index
    %c0_61 = arith.constant 0 : index
    %148 = vector.load %arg2[%c2_59, %c0_60, %c0_61] : memref<9x120x128xf32, #tpu.memory_space<vmem>>, vector<1x120x128xf32>
    %149 = vector.shape_cast %148 : vector<1x120x128xf32> to vector<120x128xf32>
    %150 = arith.mulf %147, %149 : vector<120x128xf32>
    %151 = arith.truncf %150 : vector<120x128xf32> to vector<120x128xbf16>
    %152 = vector.extract_strided_slice %130 {offsets = [112, 0], sizes = [8, 128], strides = [1, 1]} : vector<120x128xf32> to vector<8x128xf32>
    %153 = vector.extract_strided_slice %130 {offsets = [0, 0], sizes = [112, 128], strides = [1, 1]} : vector<120x128xf32> to vector<112x128xf32>
    %154 = tpu.concatenate %152, %153 in 0 : vector<8x128xf32>, vector<112x128xf32> -> vector<120x128xf32>
    %c3_62 = arith.constant 3 : index
    %c0_63 = arith.constant 0 : index
    %c0_64 = arith.constant 0 : index
    %155 = vector.load %arg2[%c3_62, %c0_63, %c0_64] : memref<9x120x128xf32, #tpu.memory_space<vmem>>, vector<1x120x128xf32>
    %156 = vector.shape_cast %155 : vector<1x120x128xf32> to vector<120x128xf32>
    %157 = arith.mulf %154, %156 : vector<120x128xf32>
    %158 = arith.truncf %157 : vector<120x128xf32> to vector<120x128xbf16>
    %159 = arith.truncf %130 : vector<120x128xf32> to vector<120x128xbf16>
    %160 = vector.extract_strided_slice %130 {offsets = [8, 0], sizes = [112, 128], strides = [1, 1]} : vector<120x128xf32> to vector<112x128xf32>
    %161 = vector.extract_strided_slice %130 {offsets = [0, 0], sizes = [8, 128], strides = [1, 1]} : vector<120x128xf32> to vector<8x128xf32>
    %162 = tpu.concatenate %160, %161 in 0 : vector<112x128xf32>, vector<8x128xf32> -> vector<120x128xf32>
    %c5_65 = arith.constant 5 : index
    %c0_66 = arith.constant 0 : index
    %c0_67 = arith.constant 0 : index
    %163 = vector.load %arg2[%c5_65, %c0_66, %c0_67] : memref<9x120x128xf32, #tpu.memory_space<vmem>>, vector<1x120x128xf32>
    %164 = vector.shape_cast %163 : vector<1x120x128xf32> to vector<120x128xf32>
    %165 = arith.mulf %162, %164 : vector<120x128xf32>
    %166 = arith.truncf %165 : vector<120x128xf32> to vector<120x128xbf16>
    %167 = vector.extract_strided_slice %130 {offsets = [16, 0], sizes = [104, 128], strides = [1, 1]} : vector<120x128xf32> to vector<104x128xf32>
    %168 = vector.extract_strided_slice %130 {offsets = [0, 0], sizes = [16, 128], strides = [1, 1]} : vector<120x128xf32> to vector<16x128xf32>
    %169 = tpu.concatenate %167, %168 in 0 : vector<104x128xf32>, vector<16x128xf32> -> vector<120x128xf32>
    %c6_68 = arith.constant 6 : index
    %c0_69 = arith.constant 0 : index
    %c0_70 = arith.constant 0 : index
    %170 = vector.load %arg2[%c6_68, %c0_69, %c0_70] : memref<9x120x128xf32, #tpu.memory_space<vmem>>, vector<1x120x128xf32>
    %171 = vector.shape_cast %170 : vector<1x120x128xf32> to vector<120x128xf32>
    %172 = arith.mulf %169, %171 : vector<120x128xf32>
    %173 = arith.truncf %172 : vector<120x128xf32> to vector<120x128xbf16>
    %174 = vector.extract_strided_slice %130 {offsets = [24, 0], sizes = [96, 128], strides = [1, 1]} : vector<120x128xf32> to vector<96x128xf32>
    %175 = vector.extract_strided_slice %130 {offsets = [0, 0], sizes = [24, 128], strides = [1, 1]} : vector<120x128xf32> to vector<24x128xf32>
    %176 = tpu.concatenate %174, %175 in 0 : vector<96x128xf32>, vector<24x128xf32> -> vector<120x128xf32>
    %c7_71 = arith.constant 7 : index
    %c0_72 = arith.constant 0 : index
    %c0_73 = arith.constant 0 : index
    %177 = vector.load %arg2[%c7_71, %c0_72, %c0_73] : memref<9x120x128xf32, #tpu.memory_space<vmem>>, vector<1x120x128xf32>
    %178 = vector.shape_cast %177 : vector<1x120x128xf32> to vector<120x128xf32>
    %179 = arith.mulf %176, %178 : vector<120x128xf32>
    %180 = arith.truncf %179 : vector<120x128xf32> to vector<120x128xbf16>
    %181 = vector.extract_strided_slice %130 {offsets = [32, 0], sizes = [88, 128], strides = [1, 1]} : vector<120x128xf32> to vector<88x128xf32>
    %182 = vector.extract_strided_slice %130 {offsets = [0, 0], sizes = [32, 128], strides = [1, 1]} : vector<120x128xf32> to vector<32x128xf32>
    %183 = tpu.concatenate %181, %182 in 0 : vector<88x128xf32>, vector<32x128xf32> -> vector<120x128xf32>
    %c8_74 = arith.constant 8 : index
    %c0_75 = arith.constant 0 : index
    %c0_76 = arith.constant 0 : index
    %184 = vector.load %arg2[%c8_74, %c0_75, %c0_76] : memref<9x120x128xf32, #tpu.memory_space<vmem>>, vector<1x120x128xf32>
    %185 = vector.shape_cast %184 : vector<1x120x128xf32> to vector<120x128xf32>
    %186 = arith.mulf %183, %185 : vector<120x128xf32>
    %187 = arith.truncf %186 : vector<120x128xf32> to vector<120x128xbf16>
    %188 = tpu.concatenate %137, %144, %151, %158, %159, %166, %173, %180, %187 in 1 : vector<120x128xbf16>, vector<120x128xbf16>, vector<120x128xbf16>, vector<120x128xbf16>, vector<120x128xbf16>, vector<120x128xbf16>, vector<120x128xbf16>, vector<120x128xbf16>, vector<120x128xbf16> -> vector<120x1152xbf16>
    %c0_77 = arith.constant 0 : index
    %c0_78 = arith.constant 0 : index
    %189 = vector.load %arg7[%c0_77, %c0_78] : memref<1152x128xbf16, #tpu.memory_space<vmem>>, vector<1152x128xbf16>
    %cst_79 = arith.constant dense<0.000000e+00> : vector<120x128xf32>
    %190 = tpu.matmul %188, %189, %cst_79 {dimension_numbers = #tpu.dot_dimension_numbers<[1], [0], [0], [1], [0, 0, 1, 1], [], []>} : vector<120x1152xbf16>, vector<1152x128xbf16>, vector<120x128xf32> -> vector<120x128xf32>
    %c0_80 = arith.constant 0 : index
    %c0_81 = arith.constant 0 : index
    %191 = vector.load %arg8[%c0_80, %c0_81] : memref<1x128xf32, #tpu.memory_space<vmem>>, vector<1x128xf32>
    %192 = vector.broadcast %191 : vector<1x128xf32> to vector<120x128xf32>
    %193 = arith.addf %190, %192 : vector<120x128xf32>
    %cst_82 = arith.constant 0.000000e+00 : f32
    %194 = vector.broadcast %cst_82 : f32 to vector<120x128xf32>
    %195 = arith.maximumf %193, %194 : vector<120x128xf32>
    %196 = vector.extract_strided_slice %195 {offsets = [0, 0], sizes = [8, 128], strides = [1, 1]} : vector<120x128xf32> to vector<8x128xf32>
    %197 = vector.extract_strided_slice %195 {offsets = [8, 0], sizes = [8, 128], strides = [1, 1]} : vector<120x128xf32> to vector<8x128xf32>
    %198 = vector.extract_strided_slice %195 {offsets = [16, 0], sizes = [8, 128], strides = [1, 1]} : vector<120x128xf32> to vector<8x128xf32>
    %199 = vector.extract_strided_slice %195 {offsets = [24, 0], sizes = [8, 128], strides = [1, 1]} : vector<120x128xf32> to vector<8x128xf32>
    %200 = vector.extract_strided_slice %195 {offsets = [32, 0], sizes = [8, 128], strides = [1, 1]} : vector<120x128xf32> to vector<8x128xf32>
    %201 = vector.extract_strided_slice %195 {offsets = [40, 0], sizes = [8, 128], strides = [1, 1]} : vector<120x128xf32> to vector<8x128xf32>
    %202 = vector.extract_strided_slice %195 {offsets = [48, 0], sizes = [8, 128], strides = [1, 1]} : vector<120x128xf32> to vector<8x128xf32>
    %203 = vector.extract_strided_slice %195 {offsets = [56, 0], sizes = [8, 128], strides = [1, 1]} : vector<120x128xf32> to vector<8x128xf32>
    %204 = vector.extract_strided_slice %195 {offsets = [64, 0], sizes = [8, 128], strides = [1, 1]} : vector<120x128xf32> to vector<8x128xf32>
    %205 = vector.extract_strided_slice %195 {offsets = [72, 0], sizes = [8, 128], strides = [1, 1]} : vector<120x128xf32> to vector<8x128xf32>
    %206 = vector.extract_strided_slice %195 {offsets = [80, 0], sizes = [8, 128], strides = [1, 1]} : vector<120x128xf32> to vector<8x128xf32>
    %207 = vector.extract_strided_slice %195 {offsets = [88, 0], sizes = [8, 128], strides = [1, 1]} : vector<120x128xf32> to vector<8x128xf32>
    %208 = vector.extract_strided_slice %195 {offsets = [96, 0], sizes = [8, 128], strides = [1, 1]} : vector<120x128xf32> to vector<8x128xf32>
    %209 = vector.extract_strided_slice %195 {offsets = [104, 0], sizes = [8, 128], strides = [1, 1]} : vector<120x128xf32> to vector<8x128xf32>
    %210 = vector.extract_strided_slice %195 {offsets = [112, 0], sizes = [8, 128], strides = [1, 1]} : vector<120x128xf32> to vector<8x128xf32>
    %211 = tpu.concatenate %196, %197, %198, %199, %200, %201, %202, %203, %204, %205, %206, %207, %208, %209, %210 in 1 : vector<8x128xf32>, vector<8x128xf32>, vector<8x128xf32>, vector<8x128xf32>, vector<8x128xf32>, vector<8x128xf32>, vector<8x128xf32>, vector<8x128xf32>, vector<8x128xf32>, vector<8x128xf32>, vector<8x128xf32>, vector<8x128xf32>, vector<8x128xf32>, vector<8x128xf32>, vector<8x128xf32> -> vector<8x1920xf32>
    %212 = arith.truncf %211 : vector<8x1920xf32> to vector<8x1920xbf16>
    %c0_83 = arith.constant 0 : index
    %c0_84 = arith.constant 0 : index
    %213 = vector.load %arg9[%c0_83, %c0_84] : memref<1920x128xbf16, #tpu.memory_space<vmem>>, vector<1920x128xbf16>
    %cst_85 = arith.constant dense<0.000000e+00> : vector<8x128xf32>
    %214 = tpu.matmul %212, %213, %cst_85 {dimension_numbers = #tpu.dot_dimension_numbers<[1], [0], [0], [1], [0, 0, 1, 1], [], []>} : vector<8x1920xbf16>, vector<1920x128xbf16>, vector<8x128xf32> -> vector<8x128xf32>
    %c0_86 = arith.constant 0 : index
    %c0_87 = arith.constant 0 : index
    %215 = vector.load %arg10[%c0_86, %c0_87] : memref<1x128xf32, #tpu.memory_space<vmem>>, vector<1x128xf32>
    %216 = vector.broadcast %215 : vector<1x128xf32> to vector<8x128xf32>
    %217 = arith.addf %214, %216 : vector<8x128xf32>
    %cst_88 = arith.constant 0.000000e+00 : f32
    %218 = vector.broadcast %cst_88 : f32 to vector<8x128xf32>
    %219 = arith.maximumf %217, %218 : vector<8x128xf32>
    %220 = arith.truncf %219 : vector<8x128xf32> to vector<8x128xbf16>
    %c0_89 = arith.constant 0 : index
    %c0_90 = arith.constant 0 : index
    %221 = vector.load %arg11[%c0_89, %c0_90] : memref<128x128xbf16, #tpu.memory_space<vmem>>, vector<128x128xbf16>
    %cst_91 = arith.constant dense<0.000000e+00> : vector<8x128xf32>
    %222 = tpu.matmul %220, %221, %cst_91 {dimension_numbers = #tpu.dot_dimension_numbers<[1], [0], [0], [1], [0, 0, 1, 1], [], []>} : vector<8x128xbf16>, vector<128x128xbf16>, vector<8x128xf32> -> vector<8x128xf32>
    %c0_92 = arith.constant 0 : index
    %c0_93 = arith.constant 0 : index
    %223 = vector.load %arg12[%c0_92, %c0_93] : memref<1x128xf32, #tpu.memory_space<vmem>>, vector<1x128xf32>
    %224 = vector.broadcast %223 : vector<1x128xf32> to vector<8x128xf32>
    %225 = arith.addf %222, %224 : vector<8x128xf32>
    %c0_94 = arith.constant 0 : index
    %c0_95 = arith.constant 0 : index
    %226 = vector.load %arg13[%c0_94, %c0_95] : memref<8x128xf32, #tpu.memory_space<vmem>>, vector<8x128xf32>
    tpu.vector_store %arg13[%c0_94, %c0_95], %225 {strides = array<i32>} : memref<8x128xf32, #tpu.memory_space<vmem>>, vector<8x128xf32>,
    return
  }
  func.func @transform_0(%arg0: i32) -> (i32, i32) {
    %c0_i32 = arith.constant 0 : i32
    %c0_i32_0 = arith.constant 0 : i32
    return %arg0, %c0_i32 : i32, i32
  }
  func.func @transform_1(%arg0: i32) -> (i32, i32, i32) {
    %c0_i32 = arith.constant 0 : i32
    %c0_i32_0 = arith.constant 0 : i32
    %c0_i32_1 = arith.constant 0 : i32
    %c0_i32_2 = arith.constant 0 : i32
    return %c0_i32, %c0_i32_0, %c0_i32_1 : i32, i32, i32
  }
  func.func @transform_2(%arg0: i32) -> (i32, i32) {
    %c0_i32 = arith.constant 0 : i32
    %c0_i32_0 = arith.constant 0 : i32
    %c0_i32_1 = arith.constant 0 : i32
    return %c0_i32, %c0_i32_0 : i32, i32
  }
  func.func @transform_3(%arg0: i32) -> (i32, i32) {
    %c0_i32 = arith.constant 0 : i32
    %c0_i32_0 = arith.constant 0 : i32
    %c0_i32_1 = arith.constant 0 : i32
    return %c0_i32, %c0_i32_0 : i32, i32
  }
  func.func @transform_4(%arg0: i32) -> (i32, i32) {
    %c0_i32 = arith.constant 0 : i32
    %c0_i32_0 = arith.constant 0 : i32
    %c0_i32_1 = arith.constant 0 : i32
    return %c0_i32, %c0_i32_0 : i32, i32
  }
  func.func @transform_5(%arg0: i32) -> (i32, i32) {
    %c0_i32 = arith.constant 0 : i32
    %c0_i32_0 = arith.constant 0 : i32
    %c0_i32_1 = arith.constant 0 : i32
    return %c0_i32, %c0_i32_0 : i32, i32
  }
  func.func @transform_6(%arg0: i32) -> (i32, i32) {
    %c0_i32 = arith.constant 0 : i32
    %c0_i32_0 = arith.constant 0 : i32
    %c0_i32_1 = arith.constant 0 : i32
    return %c0_i32, %c0_i32_0 : i32, i32
  }
  func.func @transform_7(%arg0: i32) -> (i32, i32) {
    %c0_i32 = arith.constant 0 : i32
    %c0_i32_0 = arith.constant 0 : i32
    %c0_i32_1 = arith.constant 0 : i32
    return %c0_i32, %c0_i32_0 : i32, i32
  }
  func.func @transform_8(%arg0: i32) -> (i32, i32) {
    %c0_i32 = arith.constant 0 : i32
    %c0_i32_0 = arith.constant 0 : i32
    %c0_i32_1 = arith.constant 0 : i32
    return %c0_i32, %c0_i32_0 : i32, i32
  }
  func.func @transform_9(%arg0: i32) -> (i32, i32) {
    %c0_i32 = arith.constant 0 : i32
    %c0_i32_0 = arith.constant 0 : i32
    %c0_i32_1 = arith.constant 0 : i32
    return %c0_i32, %c0_i32_0 : i32, i32
  }
  func.func @transform_10(%arg0: i32) -> (i32, i32) {
    %c0_i32 = arith.constant 0 : i32
    %c0_i32_0 = arith.constant 0 : i32
    %c0_i32_1 = arith.constant 0 : i32
    return %c0_i32, %c0_i32_0 : i32, i32
  }
  func.func @transform_11(%arg0: i32) -> (i32, i32) {
    %c0_i32 = arith.constant 0 : i32
    %c0_i32_0 = arith.constant 0 : i32
    %c0_i32_1 = arith.constant 0 : i32
    return %c0_i32, %c0_i32_0 : i32, i32
  }
  func.func @transform_12(%arg0: i32) -> (i32, i32) {
    %c0_i32 = arith.constant 0 : i32
    %c0_i32_0 = arith.constant 0 : i32
    return %arg0, %c0_i32 : i32, i32
  }
}

</mosaic_0001>

<llo_original>
// kernel: cnn_forward.1
$region0: #{cnn_forward.1}
  #allocation0 [shape = 'u32[]', space=smem, size = 0x4, offset = 0x4, fixed_abs, tag = 'smem constant byte address 0x4 - core index']
  #allocation1 [shape = 'u32[144,128]{1,0:T(1,128)}', space=vmem, size = 0x12000, scoped, tag = 'internal scratch']
  %s0 = inlined_call_operand.vmem [shape: f32[120,128], index: 0, kind: input, shape index: {}]
  %s1 = inlined_call_operand.vmem [shape: f32[9,120,128], index: 1, kind: input, shape index: {}]
  %s2 = inlined_call_operand.hbm [shape: bf16[1152,128], index: 2, kind: input, shape index: {}]
  %s3 = inlined_call_operand.vmem [shape: f32[1,128], index: 3, kind: input, shape index: {}]
  %s4 = inlined_call_operand.hbm [shape: bf16[1152,128], index: 4, kind: input, shape index: {}]
  %s5 = inlined_call_operand.vmem [shape: f32[1,128], index: 5, kind: input, shape index: {}]
  %s6 = inlined_call_operand.hbm [shape: bf16[1152,128], index: 6, kind: input, shape index: {}]
  %s7 = inlined_call_operand.vmem [shape: f32[1,128], index: 7, kind: input, shape index: {}]
  %s8 = inlined_call_operand.vmem [shape: bf16[1920,128], index: 8, kind: input, shape index: {}]
  %s9 = inlined_call_operand.vmem [shape: f32[1,128], index: 9, kind: input, shape index: {}]
  %s10 = inlined_call_operand.vmem [shape: bf16[128,128], index: 10, kind: input, shape index: {}]
  %s11 = inlined_call_operand.vmem [shape: f32[1,128], index: 11, kind: input, shape index: {}]
  %s12 = inlined_call_operand.vmem [shape: f32[8,128], index: 12, kind: output, shape index: {}]
  %s13 = sld [smem:[#allocation0]]
  $region70: #{cnn_forward.1} parent=0
    _
  %s15 = ssub.s32 1, %s13
  %s16 = scalar_select 0, %s15, %s13
  $region1: #{cnn_forward.1} parent=0
    #allocation2 [shape = 'u8[294912]{0}', space=vmem, size = 0x48000, scoped, tag = 'input window, operand 2, single buffered']
    #allocation3 [shape = 's32[1]{0}', space=sflag, size = 0x4, scoped, tag = 'scoped memory for cnn_forward.1']
    #allocation4 [shape = 'u8[294912]{0}', space=vmem, size = 0x48000, scoped, tag = 'input window, operand 4, single buffered']
    #allocation5 [shape = 's32[1]{0}', space=sflag, size = 0x4, scoped, tag = 'scoped memory for cnn_forward.1']
    #allocation6 [shape = 'u8[294912]{0}', space=vmem, size = 0x48000, scoped, tag = 'input window, operand 6, single buffered']
    %17 = vsyncpa [#allocation3], 0
    %18 = vsyncpa [#allocation5], 0
    // Predicated region
    $region2: #{cnn_forward.1} parent=1 // pred_check
      _
    $region3: #{cnn_forward.1} parent=1 // pred_check_branch
      %20 = sbr.rel (0) target = $region5
    $region4: #{cnn_forward.1} parent=1 // pred_region
      _
    $region5: #{cnn_forward.1} parent=1 // pred_fallthru
      _
    // Predicated region
    $region6: #{cnn_forward.1} parent=1 // pred_check
      _
    $region7: #{cnn_forward.1} parent=1 // pred_check_branch
      %22 = sbr.rel (0) target = $region9
    $region8: #{cnn_forward.1} parent=1 // pred_region
      _
    $region9: #{cnn_forward.1} parent=1 // pred_fallthru
      _
    // Predicated region
    $region10: #{cnn_forward.1} parent=1 // pred_check
      _
    $region11: #{cnn_forward.1} parent=1 // pred_check_branch
      %24 = sbr.rel (0) target = $region13
    $region12: #{cnn_forward.1} parent=1 // pred_region
      %s26 = ssub.s32 9216, 9216
      %27 = vsyncadd [#allocation3], %s26
      %s28 = sshll.u32 [#allocation2], 4
      %s29 = int_to_ptr.vmem [resolvable:$true] %s28
      %34 = dma.hbm_to_vmem [thread:$0]  %s2, 9216, %s29, [#allocation3], 64, 64, 4
    $region13: #{cnn_forward.1} parent=1 // pred_fallthru
      _
    // Predicated region
    $region14: #{cnn_forward.1} parent=1 // pred_check
      _
    $region15: #{cnn_forward.1} parent=1 // pred_check_branch
      %36 = sbr.rel (0) target = $region17
    $region16: #{cnn_forward.1} parent=1 // pred_region
      _
    $region17: #{cnn_forward.1} parent=1 // pred_fallthru
      _
    // Predicated region
    $region18: #{cnn_forward.1} parent=1 // pred_check
      _
    $region19: #{cnn_forward.1} parent=1 // pred_check_branch
      %38 = sbr.rel (0) target = $region21
    $region20: #{cnn_forward.1} parent=1 // pred_region
      %s40 = ssub.s32 9216, 9216
      %41 = vsyncadd [#allocation5], %s40
      %s42 = sshll.u32 [#allocation4], 4
      %s43 = int_to_ptr.vmem [resolvable:$true] %s42
      %48 = dma.hbm_to_vmem [thread:$0]  %s4, 9216, %s43, [#allocation5], 64, 64, 4
    $region21: #{cnn_forward.1} parent=1 // pred_fallthru
      _
    // Predicated region
    $region22: #{cnn_forward.1} parent=1 // pred_check
      _
    $region23: #{cnn_forward.1} parent=1 // pred_check_branch
      %50 = sbr.rel (0) target = $region25
    $region24: #{cnn_forward.1} parent=1 // pred_region
      _
    $region25: #{cnn_forward.1} parent=1 // pred_fallthru
      _
    // Predicated region
    $region26: #{cnn_forward.1} parent=1 // pred_check
      _
    $region27: #{cnn_forward.1} parent=1 // pred_check_branch
      %52 = sbr.rel (0) target = $region29
    $region28: #{cnn_forward.1} parent=1 // pred_region
      %s54 = ssub.s32 9216, 9216
      %55 = vsyncadd [#allocation5], %s54
      %s56 = sshll.u32 [#allocation6], 4
      %s57 = int_to_ptr.vmem [resolvable:$true] %s56
      %62 = dma.hbm_to_vmem [thread:$0]  %s6, 9216, %s57, [#allocation5], 64, 64, 4
    $region29: #{cnn_forward.1} parent=1 // pred_fallthru
      _
    // Predicated region
    $region30: #{cnn_forward.1} parent=1 // pred_check
      _
    $region31: #{cnn_forward.1} parent=1 // pred_check_branch
      %64 = sbr.rel (0) target = $region33
    $region32: #{cnn_forward.1} parent=1 // pred_region
      _
    $region33: #{cnn_forward.1} parent=1 // pred_fallthru
      _
    // Predicated region
    $region34: #{cnn_forward.1} parent=1 // pred_check
      _
    $region35: #{cnn_forward.1} parent=1 // pred_check_branch
      %66 = sbr.rel (0) target = $region37
    $region36: #{cnn_forward.1} parent=1 // pred_region
      _
    $region37: #{cnn_forward.1} parent=1 // pred_fallthru
      _
    // Predicated region
    $region38: #{cnn_forward.1} parent=1 // pred_check
      _
    $region39: #{cnn_forward.1} parent=1 // pred_check_branch
      %68 = sbr.rel (0) target = $region41
    $region40: #{cnn_forward.1} parent=1 // pred_region
      _
    $region41: #{cnn_forward.1} parent=1 // pred_fallthru
      _
    // Predicated region
    $region42: #{cnn_forward.1} parent=1 // pred_check
      _
    $region43: #{cnn_forward.1} parent=1 // pred_check_branch
      %70 = sbr.rel (0) target = $region45
    $region44: #{cnn_forward.1} parent=1 // pred_region
      _
    $region45: #{cnn_forward.1} parent=1 // pred_fallthru
      _
    // Predicated region
    $region46: #{cnn_forward.1} parent=1 // pred_check
      _
    $region47: #{cnn_forward.1} parent=1 // pred_check_branch
      %72 = sbr.rel (0) target = $region49
    $region48: #{cnn_forward.1} parent=1 // pred_region
      _
    $region49: #{cnn_forward.1} parent=1 // pred_fallthru
      _
    // Predicated region
    $region50: #{cnn_forward.1} parent=1 // pred_check
      _
    $region51: #{cnn_forward.1} parent=1 // pred_check_branch
      %74 = sbr.rel (0) target = $region53
    $region52: #{cnn_forward.1} parent=1 // pred_region
      %75 = dma.done [#allocation3], 9216
    $region53: #{cnn_forward.1} parent=1 // pred_fallthru
      _
    // Predicated region
    $region54: #{cnn_forward.1} parent=1 // pred_check
      _
    $region55: #{cnn_forward.1} parent=1 // pred_check_branch
      %77 = sbr.rel (0) target = $region57
    $region56: #{cnn_forward.1} parent=1 // pred_region
      %78 = dma.done [#allocation5], 9216
    $region57: #{cnn_forward.1} parent=1 // pred_fallthru
      _
    // Predicated region
    $region58: #{cnn_forward.1} parent=1 // pred_check
      _
    $region59: #{cnn_forward.1} parent=1 // pred_check_branch
      %80 = sbr.rel (0) target = $region61
    $region60: #{cnn_forward.1} parent=1 // pred_region
      %81 = dma.done [#allocation5], 9216
    $region61: #{cnn_forward.1} parent=1 // pred_fallthru
      _
    %v83 = vld [vmem:[%s0] sm:$0xff]
    %v84 = vld [vmem:[%s0 + $0x8] sm:$0xff]
    %v85 = vld [vmem:[%s0 + $0x10] sm:$0xff]
    %v86 = vld [vmem:[%s0 + $0x18] sm:$0xff]
    %v87 = vld [vmem:[%s0 + $0x20] sm:$0xff]
    %v88 = vld [vmem:[%s0 + $0x28] sm:$0xff]
    %v89 = vld [vmem:[%s0 + $0x30] sm:$0xff]
    %v90 = vld [vmem:[%s0 + $0x38] sm:$0xff]
    %v91 = vld [vmem:[%s0 + $0x40] sm:$0xff]
    %v92 = vld [vmem:[%s0 + $0x48] sm:$0xff]
    %v93 = vld [vmem:[%s0 + $0x50] sm:$0xff]
    %v94 = vld [vmem:[%s0 + $0x58] sm:$0xff]
    %v95 = vld [vmem:[%s0 + $0x60] sm:$0xff]
    %v96 = vld [vmem:[%s0 + $0x68] sm:$0xff]
    %v97 = vld [vmem:[%s0 + $0x70] sm:$0xff]
    %v98 = vld [vmem:[%s1] sm:$0xff]
    %v99 = vld [vmem:[%s1 + $0x8] sm:$0xff]
    %v100 = vld [vmem:[%s1 + $0x10] sm:$0xff]
    %v101 = vld [vmem:[%s1 + $0x18] sm:$0xff]
    %v102 = vld [vmem:[%s1 + $0x20] sm:$0xff]
    %v103 = vld [vmem:[%s1 + $0x28] sm:$0xff]
    %v104 = vld [vmem:[%s1 + $0x30] sm:$0xff]
    %v105 = vld [vmem:[%s1 + $0x38] sm:$0xff]
    %v106 = vld [vmem:[%s1 + $0x40] sm:$0xff]
    %v107 = vld [vmem:[%s1 + $0x48] sm:$0xff]
    %v108 = vld [vmem:[%s1 + $0x50] sm:$0xff]
    %v109 = vld [vmem:[%s1 + $0x58] sm:$0xff]
    %v110 = vld [vmem:[%s1 + $0x60] sm:$0xff]
    %v111 = vld [vmem:[%s1 + $0x68] sm:$0xff]
    %v112 = vld [vmem:[%s1 + $0x70] sm:$0xff]
    %v113 = vmul.f32 %v94, %v98
    %v114 = vmul.f32 %v95, %v99
    %v115 = vmul.f32 %v96, %v100
    %v116 = vmul.f32 %v97, %v101
    %v117 = vmul.f32 %v83, %v102
    %v118 = vmul.f32 %v84, %v103
    %v119 = vmul.f32 %v85, %v104
    %v120 = vmul.f32 %v86, %v105
    %v121 = vmul.f32 %v87, %v106
    %v122 = vmul.f32 %v88, %v107
    %v123 = vmul.f32 %v89, %v108
    %v124 = vmul.f32 %v90, %v109
    %v125 = vmul.f32 %v91, %v110
    %v126 = vmul.f32 %v92, %v111
    %v127 = vmul.f32 %v93, %v112
    %v128 = vpack.c.bf16 %v114, %v113
    %v129 = vpack.c.bf16 %v116, %v115
    %v130 = vpack.c.bf16 %v118, %v117
    %v131 = vpack.c.bf16 %v120, %v119
    %v132 = vpack.c.bf16 %v122, %v121
    %v133 = vpack.c.bf16 %v124, %v123
    %v134 = vpack.c.bf16 %v126, %v125
    %v135 = vpack.c.bf16 %v127, %v127
    %s136 = scalar_lea.vmem %s1, 120
    %v137 = vld [vmem:[%s136] sm:$0xff]
    %v138 = vld [vmem:[%s136 + $0x8] sm:$0xff]
    %v139 = vld [vmem:[%s136 + $0x10] sm:$0xff]
    %v140 = vld [vmem:[%s136 + $0x18] sm:$0xff]
    %v141 = vld [vmem:[%s136 + $0x20] sm:$0xff]
    %v142 = vld [vmem:[%s136 + $0x28] sm:$0xff]
    %v143 = vld [vmem:[%s136 + $0x30] sm:$0xff]
    %v144 = vld [vmem:[%s136 + $0x38] sm:$0xff]
    %v145 = vld [vmem:[%s136 + $0x40] sm:$0xff]
    %v146 = vld [vmem:[%s136 + $0x48] sm:$0xff]
    %v147 = vld [vmem:[%s136 + $0x50] sm:$0xff]
    %v148 = vld [vmem:[%s136 + $0x58] sm:$0xff]
    %v149 = vld [vmem:[%s136 + $0x60] sm:$0xff]
    %v150 = vld [vmem:[%s136 + $0x68] sm:$0xff]
    %v151 = vld [vmem:[%s136 + $0x70] sm:$0xff]
    %v152 = vmul.f32 %v95, %v137
    %v153 = vmul.f32 %v96, %v138
    %v154 = vmul.f32 %v97, %v139
    %v155 = vmul.f32 %v83, %v140
    %v156 = vmul.f32 %v84, %v141
    %v157 = vmul.f32 %v85, %v142
    %v158 = vmul.f32 %v86, %v143
    %v159 = vmul.f32 %v87, %v144
    %v160 = vmul.f32 %v88, %v145
    %v161 = vmul.f32 %v89, %v146
    %v162 = vmul.f32 %v90, %v147
    %v163 = vmul.f32 %v91, %v148
    %v164 = vmul.f32 %v92, %v149
    %v165 = vmul.f32 %v93, %v150
    %v166 = vmul.f32 %v94, %v151
    %v167 = vpack.c.bf16 %v153, %v152
    %v168 = vpack.c.bf16 %v155, %v154
    %v169 = vpack.c.bf16 %v157, %v156
    %v170 = vpack.c.bf16 %v159, %v158
    %v171 = vpack.c.bf16 %v161, %v160
    %v172 = vpack.c.bf16 %v163, %v162
    %v173 = vpack.c.bf16 %v165, %v164
    %v174 = vpack.c.bf16 %v166, %v166
    %s175 = scalar_lea.vmem %s1, 240
    %v176 = vld [vmem:[%s175] sm:$0xff]
    %v177 = vld [vmem:[%s175 + $0x8] sm:$0xff]
    %v178 = vld [vmem:[%s175 + $0x10] sm:$0xff]
    %v179 = vld [vmem:[%s175 + $0x18] sm:$0xff]
    %v180 = vld [vmem:[%s175 + $0x20] sm:$0xff]
    %v181 = vld [vmem:[%s175 + $0x28] sm:$0xff]
    %v182 = vld [vmem:[%s175 + $0x30] sm:$0xff]
    %v183 = vld [vmem:[%s175 + $0x38] sm:$0xff]
    %v184 = vld [vmem:[%s175 + $0x40] sm:$0xff]
    %v185 = vld [vmem:[%s175 + $0x48] sm:$0xff]
    %v186 = vld [vmem:[%s175 + $0x50] sm:$0xff]
    %v187 = vld [vmem:[%s175 + $0x58] sm:$0xff]
    %v188 = vld [vmem:[%s175 + $0x60] sm:$0xff]
    %v189 = vld [vmem:[%s175 + $0x68] sm:$0xff]
    %v190 = vld [vmem:[%s175 + $0x70] sm:$0xff]
    %v191 = vmul.f32 %v96, %v176
    %v192 = vmul.f32 %v97, %v177
    %v193 = vmul.f32 %v83, %v178
    %v194 = vmul.f32 %v84, %v179
    %v195 = vmul.f32 %v85, %v180
    %v196 = vmul.f32 %v86, %v181
    %v197 = vmul.f32 %v87, %v182
    %v198 = vmul.f32 %v88, %v183
    %v199 = vmul.f32 %v89, %v184
    %v200 = vmul.f32 %v90, %v185
    %v201 = vmul.f32 %v91, %v186
    %v202 = vmul.f32 %v92, %v187
    %v203 = vmul.f32 %v93, %v188
    %v204 = vmul.f32 %v94, %v189
    %v205 = vmul.f32 %v95, %v190
    %v206 = vpack.c.bf16 %v192, %v191
    %v207 = vpack.c.bf16 %v194, %v193
    %v208 = vpack.c.bf16 %v196, %v195
    %v209 = vpack.c.bf16 %v198, %v197
    %v210 = vpack.c.bf16 %v200, %v199
    %v211 = vpack.c.bf16 %v202, %v201
    %v212 = vpack.c.bf16 %v204, %v203
    %v213 = vpack.c.bf16 %v205, %v205
    %s214 = scalar_lea.vmem %s1, 360
    %v215 = vld [vmem:[%s214] sm:$0xff]
    %v216 = vld [vmem:[%s214 + $0x8] sm:$0xff]
    %v217 = vld [vmem:[%s214 + $0x10] sm:$0xff]
    %v218 = vld [vmem:[%s214 + $0x18] sm:$0xff]
    %v219 = vld [vmem:[%s214 + $0x20] sm:$0xff]
    %v220 = vld [vmem:[%s214 + $0x28] sm:$0xff]
    %v221 = vld [vmem:[%s214 + $0x30] sm:$0xff]
    %v222 = vld [vmem:[%s214 + $0x38] sm:$0xff]
    %v223 = vld [vmem:[%s214 + $0x40] sm:$0xff]
    %v224 = vld [vmem:[%s214 + $0x48] sm:$0xff]
    %v225 = vld [vmem:[%s214 + $0x50] sm:$0xff]
    %v226 = vld [vmem:[%s214 + $0x58] sm:$0xff]
    %v227 = vld [vmem:[%s214 + $0x60] sm:$0xff]
    %v228 = vld [vmem:[%s214 + $0x68] sm:$0xff]
    %v229 = vld [vmem:[%s214 + $0x70] sm:$0xff]
    %v230 = vmul.f32 %v97, %v215
    %v231 = vmul.f32 %v83, %v216
    %v232 = vmul.f32 %v84, %v217
    %v233 = vmul.f32 %v85, %v218
    %v234 = vmul.f32 %v86, %v219
    %v235 = vmul.f32 %v87, %v220
    %v236 = vmul.f32 %v88, %v221
    %v237 = vmul.f32 %v89, %v222
    %v238 = vmul.f32 %v90, %v223
    %v239 = vmul.f32 %v91, %v224
    %v240 = vmul.f32 %v92, %v225
    %v241 = vmul.f32 %v93, %v226
    %v242 = vmul.f32 %v94, %v227
    %v243 = vmul.f32 %v95, %v228
    %v244 = vmul.f32 %v96, %v229
    %v245 = vpack.c.bf16 %v231, %v230
    %v246 = vpack.c.bf16 %v233, %v232
    %v247 = vpack.c.bf16 %v235, %v234
    %v248 = vpack.c.bf16 %v237, %v236
    %v249 = vpack.c.bf16 %v239, %v238
    %v250 = vpack.c.bf16 %v241, %v240
    %v251 = vpack.c.bf16 %v243, %v242
    %v252 = vpack.c.bf16 %v244, %v244
    %v253 = vpack.c.bf16 %v84, %v83
    %v254 = vpack.c.bf16 %v86, %v85
    %v255 = vpack.c.bf16 %v88, %v87
    %v256 = vpack.c.bf16 %v90, %v89
    %v257 = vpack.c.bf16 %v92, %v91
    %v258 = vpack.c.bf16 %v94, %v93
    %v259 = vpack.c.bf16 %v96, %v95
    %v260 = vpack.c.bf16 %v97, %v97
    %s261 = scalar_lea.vmem %s1, 600
    %v262 = vld [vmem:[%s261] sm:$0xff]
    %v263 = vld [vmem:[%s261 + $0x8] sm:$0xff]
    %v264 = vld [vmem:[%s261 + $0x10] sm:$0xff]
    %v265 = vld [vmem:[%s261 + $0x18] sm:$0xff]
    %v266 = vld [vmem:[%s261 + $0x20] sm:$0xff]
    %v267 = vld [vmem:[%s261 + $0x28] sm:$0xff]
    %v268 = vld [vmem:[%s261 + $0x30] sm:$0xff]
    %v269 = vld [vmem:[%s261 + $0x38] sm:$0xff]
    %v270 = vld [vmem:[%s261 + $0x40] sm:$0xff]
    %v271 = vld [vmem:[%s261 + $0x48] sm:$0xff]
    %v272 = vld [vmem:[%s261 + $0x50] sm:$0xff]
    %v273 = vld [vmem:[%s261 + $0x58] sm:$0xff]
    %v274 = vld [vmem:[%s261 + $0x60] sm:$0xff]
    %v275 = vld [vmem:[%s261 + $0x68] sm:$0xff]
    %v276 = vld [vmem:[%s261 + $0x70] sm:$0xff]
    %v277 = vmul.f32 %v84, %v262
    %v278 = vmul.f32 %v85, %v263
    %v279 = vmul.f32 %v86, %v264
    %v280 = vmul.f32 %v87, %v265
    %v281 = vmul.f32 %v88, %v266
    %v282 = vmul.f32 %v89, %v267
    %v283 = vmul.f32 %v90, %v268
    %v284 = vmul.f32 %v91, %v269
    %v285 = vmul.f32 %v92, %v270
    %v286 = vmul.f32 %v93, %v271
    %v287 = vmul.f32 %v94, %v272
    %v288 = vmul.f32 %v95, %v273
    %v289 = vmul.f32 %v96, %v274
    %v290 = vmul.f32 %v97, %v275
    %v291 = vmul.f32 %v83, %v276
    %v292 = vpack.c.bf16 %v278, %v277
    %v293 = vpack.c.bf16 %v280, %v279
    %v294 = vpack.c.bf16 %v282, %v281
    %v295 = vpack.c.bf16 %v284, %v283
    %v296 = vpack.c.bf16 %v286, %v285
    %v297 = vpack.c.bf16 %v288, %v287
    %v298 = vpack.c.bf16 %v290, %v289
    %v299 = vpack.c.bf16 %v291, %v291
    %s300 = scalar_lea.vmem %s1, 720
    %v301 = vld [vmem:[%s300] sm:$0xff]
    %v302 = vld [vmem:[%s300 + $0x8] sm:$0xff]
    %v303 = vld [vmem:[%s300 + $0x10] sm:$0xff]
    %v304 = vld [vmem:[%s300 + $0x18] sm:$0xff]
    %v305 = vld [vmem:[%s300 + $0x20] sm:$0xff]
    %v306 = vld [vmem:[%s300 + $0x28] sm:$0xff]
    %v307 = vld [vmem:[%s300 + $0x30] sm:$0xff]
    %v308 = vld [vmem:[%s300 + $0x38] sm:$0xff]
    %v309 = vld [vmem:[%s300 + $0x40] sm:$0xff]
    %v310 = vld [vmem:[%s300 + $0x48] sm:$0xff]
    %v311 = vld [vmem:[%s300 + $0x50] sm:$0xff]
    %v312 = vld [vmem:[%s300 + $0x58] sm:$0xff]
    %v313 = vld [vmem:[%s300 + $0x60] sm:$0xff]
    %v314 = vld [vmem:[%s300 + $0x68] sm:$0xff]
    %v315 = vld [vmem:[%s300 + $0x70] sm:$0xff]
    %v316 = vmul.f32 %v85, %v301
    %v317 = vmul.f32 %v86, %v302
    %v318 = vmul.f32 %v87, %v303
    %v319 = vmul.f32 %v88, %v304
    %v320 = vmul.f32 %v89, %v305
    %v321 = vmul.f32 %v90, %v306
    %v322 = vmul.f32 %v91, %v307
    %v323 = vmul.f32 %v92, %v308
    %v324 = vmul.f32 %v93, %v309
    %v325 = vmul.f32 %v94, %v310
    %v326 = vmul.f32 %v95, %v311
    %v327 = vmul.f32 %v96, %v312
    %v328 = vmul.f32 %v97, %v313
    %v329 = vmul.f32 %v83, %v314
    %v330 = vmul.f32 %v84, %v315
    %v331 = vpack.c.bf16 %v317, %v316
    %v332 = vpack.c.bf16 %v319, %v318
    %v333 = vpack.c.bf16 %v321, %v320
    %v334 = vpack.c.bf16 %v323, %v322
    %v335 = vpack.c.bf16 %v325, %v324
    %v336 = vpack.c.bf16 %v327, %v326
    %v337 = vpack.c.bf16 %v329, %v328
    %v338 = vpack.c.bf16 %v330, %v330
    %s339 = scalar_lea.vmem %s1, 840
    %v340 = vld [vmem:[%s339] sm:$0xff]
    %v341 = vld [vmem:[%s339 + $0x8] sm:$0xff]
    %v342 = vld [vmem:[%s339 + $0x10] sm:$0xff]
    %v343 = vld [vmem:[%s339 + $0x18] sm:$0xff]
    %v344 = vld [vmem:[%s339 + $0x20] sm:$0xff]
    %v345 = vld [vmem:[%s339 + $0x28] sm:$0xff]
    %v346 = vld [vmem:[%s339 + $0x30] sm:$0xff]
    %v347 = vld [vmem:[%s339 + $0x38] sm:$0xff]
    %v348 = vld [vmem:[%s339 + $0x40] sm:$0xff]
    %v349 = vld [vmem:[%s339 + $0x48] sm:$0xff]
    %v350 = vld [vmem:[%s339 + $0x50] sm:$0xff]
    %v351 = vld [vmem:[%s339 + $0x58] sm:$0xff]
    %v352 = vld [vmem:[%s339 + $0x60] sm:$0xff]
    %v353 = vld [vmem:[%s339 + $0x68] sm:$0xff]
    %v354 = vld [vmem:[%s339 + $0x70] sm:$0xff]
    %v355 = vmul.f32 %v86, %v340
    %v356 = vmul.f32 %v87, %v341
    %v357 = vmul.f32 %v88, %v342
    %v358 = vmul.f32 %v89, %v343
    %v359 = vmul.f32 %v90, %v344
    %v360 = vmul.f32 %v91, %v345
    %v361 = vmul.f32 %v92, %v346
    %v362 = vmul.f32 %v93, %v347
    %v363 = vmul.f32 %v94, %v348
    %v364 = vmul.f32 %v95, %v349
    %v365 = vmul.f32 %v96, %v350
    %v366 = vmul.f32 %v97, %v351
    %v367 = vmul.f32 %v83, %v352
    %v368 = vmul.f32 %v84, %v353
    %v369 = vmul.f32 %v85, %v354
    %v370 = vpack.c.bf16 %v356, %v355
    %v371 = vpack.c.bf16 %v358, %v357
    %v372 = vpack.c.bf16 %v360, %v359
    %v373 = vpack.c.bf16 %v362, %v361
    %v374 = vpack.c.bf16 %v364, %v363
    %v375 = vpack.c.bf16 %v366, %v365
    %v376 = vpack.c.bf16 %v368, %v367
    %v377 = vpack.c.bf16 %v369, %v369
    %s378 = scalar_lea.vmem %s1, 960
    %v379 = vld [vmem:[%s378] sm:$0xff]
    %v380 = vld [vmem:[%s378 + $0x8] sm:$0xff]
    %v381 = vld [vmem:[%s378 + $0x10] sm:$0xff]
    %v382 = vld [vmem:[%s378 + $0x18] sm:$0xff]
    %v383 = vld [vmem:[%s378 + $0x20] sm:$0xff]
    %v384 = vld [vmem:[%s378 + $0x28] sm:$0xff]
    %v385 = vld [vmem:[%s378 + $0x30] sm:$0xff]
    %v386 = vld [vmem:[%s378 + $0x38] sm:$0xff]
    %v387 = vld [vmem:[%s378 + $0x40] sm:$0xff]
    %v388 = vld [vmem:[%s378 + $0x48] sm:$0xff]
    %v389 = vld [vmem:[%s378 + $0x50] sm:$0xff]
    %v390 = vld [vmem:[%s378 + $0x58] sm:$0xff]
    %v391 = vld [vmem:[%s378 + $0x60] sm:$0xff]
    %v392 = vld [vmem:[%s378 + $0x68] sm:$0xff]
    %v393 = vld [vmem:[%s378 + $0x70] sm:$0xff]
    %v394 = vmul.f32 %v87, %v379
    %v395 = vmul.f32 %v88, %v380
    %v396 = vmul.f32 %v89, %v381
    %v397 = vmul.f32 %v90, %v382
    %v398 = vmul.f32 %v91, %v383
    %v399 = vmul.f32 %v92, %v384
    %v400 = vmul.f32 %v93, %v385
    %v401 = vmul.f32 %v94, %v386
    %v402 = vmul.f32 %v95, %v387
    %v403 = vmul.f32 %v96, %v388
    %v404 = vmul.f32 %v97, %v389
    %v405 = vmul.f32 %v83, %v390
    %v406 = vmul.f32 %v84, %v391
    %v407 = vmul.f32 %v85, %v392
    %v408 = vmul.f32 %v86, %v393
    %v409 = vpack.c.bf16 %v395, %v394
    %v410 = vpack.c.bf16 %v397, %v396
    %v411 = vpack.c.bf16 %v399, %v398
    %v412 = vpack.c.bf16 %v401, %v400
    %v413 = vpack.c.bf16 %v403, %v402
    %v414 = vpack.c.bf16 %v405, %v404
    %v415 = vpack.c.bf16 %v407, %v406
    %v416 = vpack.c.bf16 %v408, %v408
    %v417 = vld [vmem:[#allocation2] sm:$0xf]
    %v418 = vld [vmem:[#allocation2 + $0x4] sm:$0xf]
    %v419 = vld [vmem:[#allocation2 + $0x8] sm:$0xf]
    %v420 = vld [vmem:[#allocation2 + $0xc] sm:$0xf]
    %v421 = vld [vmem:[#allocation2 + $0x10] sm:$0xf]
    %v422 = vld [vmem:[#allocation2 + $0x14] sm:$0xf]
    %v423 = vld [vmem:[#allocation2 + $0x18] sm:$0xf]
    %v424 = vld [vmem:[#allocation2 + $0x1c] sm:$0xf]
    %v425 = vld [vmem:[#allocation2 + $0x20] sm:$0xf]
    %v426 = vld [vmem:[#allocation2 + $0x24] sm:$0xf]
    %v427 = vld [vmem:[#allocation2 + $0x28] sm:$0xf]
    %v428 = vld [vmem:[#allocation2 + $0x2c] sm:$0xf]
    %v429 = vld [vmem:[#allocation2 + $0x30] sm:$0xf]
    %v430 = vld [vmem:[#allocation2 + $0x34] sm:$0xf]
    %v431 = vld [vmem:[#allocation2 + $0x38] sm:$0xf]
    %v432 = vld [vmem:[#allocation2 + $0x3c] sm:$0xf]
    %v433 = vld [vmem:[#allocation2 + $0x40] sm:$0xf]
    %v434 = vld [vmem:[#allocation2 + $0x44] sm:$0xf]
    %v435 = vld [vmem:[#allocation2 + $0x48] sm:$0xf]
    %v436 = vld [vmem:[#allocation2 + $0x4c] sm:$0xf]
    %v437 = vld [vmem:[#allocation2 + $0x50] sm:$0xf]
    %v438 = vld [vmem:[#allocation2 + $0x54] sm:$0xf]
    %v439 = vld [vmem:[#allocation2 + $0x58] sm:$0xf]
    %v440 = vld [vmem:[#allocation2 + $0x5c] sm:$0xf]
    %v441 = vld [vmem:[#allocation2 + $0x60] sm:$0xf]
    %v442 = vld [vmem:[#allocation2 + $0x64] sm:$0xf]
    %v443 = vld [vmem:[#allocation2 + $0x68] sm:$0xf]
    %v444 = vld [vmem:[#allocation2 + $0x6c] sm:$0xf]
    %v445 = vld [vmem:[#allocation2 + $0x70] sm:$0xf]
    %v446 = vld [vmem:[#allocation2 + $0x74] sm:$0xf]
    %v447 = vld [vmem:[#allocation2 + $0x78] sm:$0xf]
    %v448 = vld [vmem:[#allocation2 + $0x7c] sm:$0xf]
    %v449 = vld [vmem:[#allocation2 + $0x80] sm:$0xf]
    %v450 = vld [vmem:[#allocation2 + $0x84] sm:$0xf]
    %v451 = vld [vmem:[#allocation2 + $0x88] sm:$0xf]
    %v452 = vld [vmem:[#allocation2 + $0x8c] sm:$0xf]
    %v453 = vld [vmem:[#allocation2 + $0x90] sm:$0xf]
    %v454 = vld [vmem:[#allocation2 + $0x94] sm:$0xf]
    %v455 = vld [vmem:[#allocation2 + $0x98] sm:$0xf]
    %v456 = vld [vmem:[#allocation2 + $0x9c] sm:$0xf]
    %v457 = vld [vmem:[#allocation2 + $0xa0] sm:$0xf]
    %v458 = vld [vmem:[#allocation2 + $0xa4] sm:$0xf]
    %v459 = vld [vmem:[#allocation2 + $0xa8] sm:$0xf]
    %v460 = vld [vmem:[#allocation2 + $0xac] sm:$0xf]
    %v461 = vld [vmem:[#allocation2 + $0xb0] sm:$0xf]
    %v462 = vld [vmem:[#allocation2 + $0xb4] sm:$0xf]
    %v463 = vld [vmem:[#allocation2 + $0xb8] sm:$0xf]
    %v464 = vld [vmem:[#allocation2 + $0xbc] sm:$0xf]
    %v465 = vld [vmem:[#allocation2 + $0xc0] sm:$0xf]
    %v466 = vld [vmem:[#allocation2 + $0xc4] sm:$0xf]
    %v467 = vld [vmem:[#allocation2 + $0xc8] sm:$0xf]
    %v468 = vld [vmem:[#allocation2 + $0xcc] sm:$0xf]
    %v469 = vld [vmem:[#allocation2 + $0xd0] sm:$0xf]
    %v470 = vld [vmem:[#allocation2 + $0xd4] sm:$0xf]
    %v471 = vld [vmem:[#allocation2 + $0xd8] sm:$0xf]
    %v472 = vld [vmem:[#allocation2 + $0xdc] sm:$0xf]
    %v473 = vld [vmem:[#allocation2 + $0xe0] sm:$0xf]
    %v474 = vld [vmem:[#allocation2 + $0xe4] sm:$0xf]
    %v475 = vld [vmem:[#allocation2 + $0xe8] sm:$0xf]
    %v476 = vld [vmem:[#allocation2 + $0xec] sm:$0xf]
    %v477 = vld [vmem:[#allocation2 + $0xf0] sm:$0xf]
    %v478 = vld [vmem:[#allocation2 + $0xf4] sm:$0xf]
    %v479 = vld [vmem:[#allocation2 + $0xf8] sm:$0xf]
    %v480 = vld [vmem:[#allocation2 + $0xfc] sm:$0xf]
    %v481 = vld [vmem:[#allocation2 + $0x100] sm:$0xf]
    %v482 = vld [vmem:[#allocation2 + $0x104] sm:$0xf]
    %v483 = vld [vmem:[#allocation2 + $0x108] sm:$0xf]
    %v484 = vld [vmem:[#allocation2 + $0x10c] sm:$0xf]
    %v485 = vld [vmem:[#allocation2 + $0x110] sm:$0xf]
    %v486 = vld [vmem:[#allocation2 + $0x114] sm:$0xf]
    %v487 = vld [vmem:[#allocation2 + $0x118] sm:$0xf]
    %v488 = vld [vmem:[#allocation2 + $0x11c] sm:$0xf]
    %v489 = vld [vmem:[#allocation2 + $0x120] sm:$0xf]
    %v490 = vld [vmem:[#allocation2 + $0x124] sm:$0xf]
    %v491 = vld [vmem:[#allocation2 + $0x128] sm:$0xf]
    %v492 = vld [vmem:[#allocation2 + $0x12c] sm:$0xf]
    %v493 = vld [vmem:[#allocation2 + $0x130] sm:$0xf]
    %v494 = vld [vmem:[#allocation2 + $0x134] sm:$0xf]
    %v495 = vld [vmem:[#allocation2 + $0x138] sm:$0xf]
    %v496 = vld [vmem:[#allocation2 + $0x13c] sm:$0xf]
    %v497 = vld [vmem:[#allocation2 + $0x140] sm:$0xf]
    %v498 = vld [vmem:[#allocation2 + $0x144] sm:$0xf]
    %v499 = vld [vmem:[#allocation2 + $0x148] sm:$0xf]
    %v500 = vld [vmem:[#allocation2 + $0x14c] sm:$0xf]
    %v501 = vld [vmem:[#allocation2 + $0x150] sm:$0xf]
    %v502 = vld [vmem:[#allocation2 + $0x154] sm:$0xf]
    %v503 = vld [vmem:[#allocation2 + $0x158] sm:$0xf]
    %v504 = vld [vmem:[#allocation2 + $0x15c] sm:$0xf]
    %v505 = vld [vmem:[#allocation2 + $0x160] sm:$0xf]
    %v506 = vld [vmem:[#allocation2 + $0x164] sm:$0xf]
    %v507 = vld [vmem:[#allocation2 + $0x168] sm:$0xf]
    %v508 = vld [vmem:[#allocation2 + $0x16c] sm:$0xf]
    %v509 = vld [vmem:[#allocation2 + $0x170] sm:$0xf]
    %v510 = vld [vmem:[#allocation2 + $0x174] sm:$0xf]
    %v511 = vld [vmem:[#allocation2 + $0x178] sm:$0xf]
    %v512 = vld [vmem:[#allocation2 + $0x17c] sm:$0xf]
    %v513 = vld [vmem:[#allocation2 + $0x180] sm:$0xf]
    %v514 = vld [vmem:[#allocation2 + $0x184] sm:$0xf]
    %v515 = vld [vmem:[#allocation2 + $0x188] sm:$0xf]
    %v516 = vld [vmem:[#allocation2 + $0x18c] sm:$0xf]
    %v517 = vld [vmem:[#allocation2 + $0x190] sm:$0xf]
    %v518 = vld [vmem:[#allocation2 + $0x194] sm:$0xf]
    %v519 = vld [vmem:[#allocation2 + $0x198] sm:$0xf]
    %v520 = vld [vmem:[#allocation2 + $0x19c] sm:$0xf]
    %v521 = vld [vmem:[#allocation2 + $0x1a0] sm:$0xf]
    %v522 = vld [vmem:[#allocation2 + $0x1a4] sm:$0xf]
    %v523 = vld [vmem:[#allocation2 + $0x1a8] sm:$0xf]
    %v524 = vld [vmem:[#allocation2 + $0x1ac] sm:$0xf]
    %v525 = vld [vmem:[#allocation2 + $0x1b0] sm:$0xf]
    %v526 = vld [vmem:[#allocation2 + $0x1b4] sm:$0xf]
    %v527 = vld [vmem:[#allocation2 + $0x1b8] sm:$0xf]
    %v528 = vld [vmem:[#allocation2 + $0x1bc] sm:$0xf]
    %v529 = vld [vmem:[#allocation2 + $0x1c0] sm:$0xf]
    %v530 = vld [vmem:[#allocation2 + $0x1c4] sm:$0xf]
    %v531 = vld [vmem:[#allocation2 + $0x1c8] sm:$0xf]
    %v532 = vld [vmem:[#allocation2 + $0x1cc] sm:$0xf]
    %v533 = vld [vmem:[#allocation2 + $0x1d0] sm:$0xf]
    %v534 = vld [vmem:[#allocation2 + $0x1d4] sm:$0xf]
    %v535 = vld [vmem:[#allocation2 + $0x1d8] sm:$0xf]
    %v536 = vld [vmem:[#allocation2 + $0x1dc] sm:$0xf]
    %v537 = vld [vmem:[#allocation2 + $0x1e0] sm:$0xf]
    %v538 = vld [vmem:[#allocation2 + $0x1e4] sm:$0xf]
    %v539 = vld [vmem:[#allocation2 + $0x1e8] sm:$0xf]
    %v540 = vld [vmem:[#allocation2 + $0x1ec] sm:$0xf]
    %v541 = vld [vmem:[#allocation2 + $0x1f0] sm:$0xf]
    %v542 = vld [vmem:[#allocation2 + $0x1f4] sm:$0xf]
    %v543 = vld [vmem:[#allocation2 + $0x1f8] sm:$0xf]
    %v544 = vld [vmem:[#allocation2 + $0x1fc] sm:$0xf]
    %v545 = vld [vmem:[#allocation2 + $0x200] sm:$0xf]
    %v546 = vld [vmem:[#allocation2 + $0x204] sm:$0xf]
    %v547 = vld [vmem:[#allocation2 + $0x208] sm:$0xf]
    %v548 = vld [vmem:[#allocation2 + $0x20c] sm:$0xf]
    %v549 = vld [vmem:[#allocation2 + $0x210] sm:$0xf]
    %v550 = vld [vmem:[#allocation2 + $0x214] sm:$0xf]
    %v551 = vld [vmem:[#allocation2 + $0x218] sm:$0xf]
    %v552 = vld [vmem:[#allocation2 + $0x21c] sm:$0xf]
    %v553 = vld [vmem:[#allocation2 + $0x220] sm:$0xf]
    %v554 = vld [vmem:[#allocation2 + $0x224] sm:$0xf]
    %v555 = vld [vmem:[#allocation2 + $0x228] sm:$0xf]
    %v556 = vld [vmem:[#allocation2 + $0x22c] sm:$0xf]
    %v557 = vld [vmem:[#allocation2 + $0x230] sm:$0xf]
    %v558 = vld [vmem:[#allocation2 + $0x234] sm:$0xf]
    %v559 = vld [vmem:[#allocation2 + $0x238] sm:$0xf]
    %v560 = vld [vmem:[#allocation2 + $0x23c] sm:$0xf]
    %v561 = vld [vmem:[%s3] sm:$0x1]
    %v563 = vlaneseq
    %v564 = vshrl.u32 %v563, 7
    %v565 = vsub.s32 0, %v564
    %v566 = vrot.slane %v561, %v565
    %v712 = vunpack.c.l.b16 %v417
    %v713 = vunpack.c.l.b16 %v418
    %v714 = vunpack.c.l.b16 %v419
    %v715 = vunpack.c.l.b16 %v420
    %v716 = vunpack.c.l.b16 %v421
    %v717 = vunpack.c.l.b16 %v422
    %v718 = vunpack.c.l.b16 %v423
    %v719 = vunpack.c.l.b16 %v424
    %v720 = vunpack.c.l.b16 %v425
    %v721 = vunpack.c.l.b16 %v426
    %v722 = vunpack.c.l.b16 %v427
    %v723 = vunpack.c.l.b16 %v428
    %v724 = vunpack.c.l.b16 %v429
    %v725 = vunpack.c.l.b16 %v430
    %v726 = vunpack.c.l.b16 %v431
    %v727 = vunpack.c.l.b16 %v432
    %v728 = vunpack.c.l.b16 %v433
    %v729 = vunpack.c.l.b16 %v434
    %v730 = vunpack.c.l.b16 %v435
    %v731 = vunpack.c.l.b16 %v436
    %v732 = vunpack.c.l.b16 %v437
    %v733 = vunpack.c.l.b16 %v438
    %v734 = vunpack.c.l.b16 %v439
    %v735 = vunpack.c.l.b16 %v440
    %v736 = vunpack.c.l.b16 %v441
    %v737 = vunpack.c.l.b16 %v442
    %v738 = vunpack.c.l.b16 %v443
    %v739 = vunpack.c.l.b16 %v444
    %v740 = vunpack.c.l.b16 %v445
    %v741 = vunpack.c.l.b16 %v446
    %v742 = vunpack.c.l.b16 %v447
    %v743 = vunpack.c.l.b16 %v448
    %v744 = vunpack.c.l.b16 %v449
    %v745 = vunpack.c.l.b16 %v450
    %v746 = vunpack.c.l.b16 %v451
    %v747 = vunpack.c.l.b16 %v452
    %v748 = vunpack.c.l.b16 %v453
    %v749 = vunpack.c.l.b16 %v454
    %v750 = vunpack.c.l.b16 %v455
    %v751 = vunpack.c.l.b16 %v456
    %v752 = vunpack.c.l.b16 %v457
    %v753 = vunpack.c.l.b16 %v458
    %v754 = vunpack.c.l.b16 %v459
    %v755 = vunpack.c.l.b16 %v460
    %v756 = vunpack.c.l.b16 %v461
    %v757 = vunpack.c.l.b16 %v462
    %v758 = vunpack.c.l.b16 %v463
    %v759 = vunpack.c.l.b16 %v464
    %v760 = vunpack.c.l.b16 %v465
    %v761 = vunpack.c.l.b16 %v466
    %v762 = vunpack.c.l.b16 %v467
    %v763 = vunpack.c.l.b16 %v468
    %v764 = vunpack.c.l.b16 %v469
    %v765 = vunpack.c.l.b16 %v470
    %v766 = vunpack.c.l.b16 %v471
    %v767 = vunpack.c.l.b16 %v472
    %v768 = vunpack.c.l.b16 %v473
    %v769 = vunpack.c.l.b16 %v474
    %v770 = vunpack.c.l.b16 %v475
    %v771 = vunpack.c.l.b16 %v476
    %v772 = vunpack.c.l.b16 %v477
    %v773 = vunpack.c.l.b16 %v478
    %v774 = vunpack.c.l.b16 %v479
    %v775 = vunpack.c.l.b16 %v480
    %v776 = vunpack.c.l.b16 %v481
    %v777 = vunpack.c.l.b16 %v482
    %v778 = vunpack.c.l.b16 %v483
    %v779 = vunpack.c.l.b16 %v484
    %v780 = vunpack.c.l.b16 %v485
    %v781 = vunpack.c.l.b16 %v486
    %v782 = vunpack.c.l.b16 %v487
    %v783 = vunpack.c.l.b16 %v488
    %v784 = vunpack.c.l.b16 %v489
    %v785 = vunpack.c.l.b16 %v490
    %v786 = vunpack.c.l.b16 %v491
    %v787 = vunpack.c.l.b16 %v492
    %v788 = vunpack.c.l.b16 %v493
    %v789 = vunpack.c.l.b16 %v494
    %v790 = vunpack.c.l.b16 %v495
    %v791 = vunpack.c.l.b16 %v496
    %v792 = vunpack.c.l.b16 %v497
    %v793 = vunpack.c.l.b16 %v498
    %v794 = vunpack.c.l.b16 %v499
    %v795 = vunpack.c.l.b16 %v500
    %v796 = vunpack.c.l.b16 %v501
    %v797 = vunpack.c.l.b16 %v502
    %v798 = vunpack.c.l.b16 %v503
    %v799 = vunpack.c.l.b16 %v504
    %v800 = vunpack.c.l.b16 %v505
    %v801 = vunpack.c.l.b16 %v506
    %v802 = vunpack.c.l.b16 %v507
    %v803 = vunpack.c.l.b16 %v508
    %v804 = vunpack.c.l.b16 %v509
    %v805 = vunpack.c.l.b16 %v510
    %v806 = vunpack.c.l.b16 %v511
    %v807 = vunpack.c.l.b16 %v512
    %v808 = vunpack.c.l.b16 %v513
    %v809 = vunpack.c.l.b16 %v514
    %v810 = vunpack.c.l.b16 %v515
    %v811 = vunpack.c.l.b16 %v516
    %v812 = vunpack.c.l.b16 %v517
    %v813 = vunpack.c.l.b16 %v518
    %v814 = vunpack.c.l.b16 %v519
    %v815 = vunpack.c.l.b16 %v520
    %v816 = vunpack.c.l.b16 %v521
    %v817 = vunpack.c.l.b16 %v522
    %v818 = vunpack.c.l.b16 %v523
    %v819 = vunpack.c.l.b16 %v524
    %v820 = vunpack.c.l.b16 %v525
    %v821 = vunpack.c.l.b16 %v526
    %v822 = vunpack.c.l.b16 %v527
    %v823 = vunpack.c.l.b16 %v528
    %v824 = vunpack.c.l.b16 %v529
    %v825 = vunpack.c.l.b16 %v530
    %v826 = vunpack.c.l.b16 %v531
    %v827 = vunpack.c.l.b16 %v532
    %v828 = vunpack.c.l.b16 %v533
    %v829 = vunpack.c.l.b16 %v534
    %v830 = vunpack.c.l.b16 %v535
    %v831 = vunpack.c.l.b16 %v536
    %v832 = vunpack.c.l.b16 %v537
    %v833 = vunpack.c.l.b16 %v538
    %v834 = vunpack.c.l.b16 %v539
    %v835 = vunpack.c.l.b16 %v540
    %v836 = vunpack.c.l.b16 %v541
    %v837 = vunpack.c.l.b16 %v542
    %v838 = vunpack.c.l.b16 %v543
    %v839 = vunpack.c.l.b16 %v544
    %v840 = vunpack.c.l.b16 %v545
    %v841 = vunpack.c.l.b16 %v546
    %v842 = vunpack.c.l.b16 %v547
    %v843 = vunpack.c.l.b16 %v548
    %v844 = vunpack.c.l.b16 %v549
    %v845 = vunpack.c.l.b16 %v550
    %v846 = vunpack.c.l.b16 %v551
    %v847 = vunpack.c.l.b16 %v552
    %v848 = vunpack.c.l.b16 %v553
    %v849 = vunpack.c.l.b16 %v554
    %v850 = vunpack.c.l.b16 %v555
    %v851 = vunpack.c.l.b16 %v556
    %v852 = vunpack.c.l.b16 %v557
    %v853 = vunpack.c.l.b16 %v558
    %v854 = vunpack.c.l.b16 %v559
    %v855 = vunpack.c.l.b16 %v560
    %v856 = vpack.c.b16 %v713, %v712
    %v857 = vpack.c.b16 %v715, %v714
    %v858 = vpack.c.b16 %v717, %v716
    %v859 = vpack.c.b16 %v719, %v718
    %v860 = vpack.c.b16 %v721, %v720
    %v861 = vpack.c.b16 %v723, %v722
    %v862 = vpack.c.b16 %v725, %v724
    %v863 = vpack.c.b16 %v727, %v726
    %v864 = vpack.c.b16 %v729, %v728
    %v865 = vpack.c.b16 %v731, %v730
    %v866 = vpack.c.b16 %v733, %v732
    %v867 = vpack.c.b16 %v735, %v734
    %v868 = vpack.c.b16 %v737, %v736
    %v869 = vpack.c.b16 %v739, %v738
    %v870 = vpack.c.b16 %v741, %v740
    %v871 = vpack.c.b16 %v743, %v742
    %v872 = vpack.c.b16 %v745, %v744
    %v873 = vpack.c.b16 %v747, %v746
    %v874 = vpack.c.b16 %v749, %v748
    %v875 = vpack.c.b16 %v751, %v750
    %v876 = vpack.c.b16 %v753, %v752
    %v877 = vpack.c.b16 %v755, %v754
    %v878 = vpack.c.b16 %v757, %v756
    %v879 = vpack.c.b16 %v759, %v758
    %v880 = vpack.c.b16 %v761, %v760
    %v881 = vpack.c.b16 %v763, %v762
    %v882 = vpack.c.b16 %v765, %v764
    %v883 = vpack.c.b16 %v767, %v766
    %v884 = vpack.c.b16 %v769, %v768
    %v885 = vpack.c.b16 %v771, %v770
    %v886 = vpack.c.b16 %v773, %v772
    %v887 = vpack.c.b16 %v775, %v774
    %v888 = vpack.c.b16 %v777, %v776
    %v889 = vpack.c.b16 %v779, %v778
    %v890 = vpack.c.b16 %v781, %v780
    %v891 = vpack.c.b16 %v783, %v782
    %v892 = vpack.c.b16 %v785, %v784
    %v893 = vpack.c.b16 %v787, %v786
    %v894 = vpack.c.b16 %v789, %v788
    %v895 = vpack.c.b16 %v791, %v790
    %v896 = vpack.c.b16 %v793, %v792
    %v897 = vpack.c.b16 %v795, %v794
    %v898 = vpack.c.b16 %v797, %v796
    %v899 = vpack.c.b16 %v799, %v798
    %v900 = vpack.c.b16 %v801, %v800
    %v901 = vpack.c.b16 %v803, %v802
    %v902 = vpack.c.b16 %v805, %v804
    %v903 = vpack.c.b16 %v807, %v806
    %v904 = vpack.c.b16 %v809, %v808
    %v905 = vpack.c.b16 %v811, %v810
    %v906 = vpack.c.b16 %v813, %v812
    %v907 = vpack.c.b16 %v815, %v814
    %v908 = vpack.c.b16 %v817, %v816
    %v909 = vpack.c.b16 %v819, %v818
    %v910 = vpack.c.b16 %v821, %v820
    %v911 = vpack.c.b16 %v823, %v822
    %v912 = vpack.c.b16 %v825, %v824
    %v913 = vpack.c.b16 %v827, %v826
    %v914 = vpack.c.b16 %v829, %v828
    %v915 = vpack.c.b16 %v831, %v830
    %v916 = vpack.c.b16 %v833, %v832
    %v917 = vpack.c.b16 %v835, %v834
    %v918 = vpack.c.b16 %v837, %v836
    %v919 = vpack.c.b16 %v839, %v838
    %v920 = vpack.c.b16 %v841, %v840
    %v921 = vpack.c.b16 %v843, %v842
    %v922 = vpack.c.b16 %v845, %v844
    %v923 = vpack.c.b16 %v847, %v846
    %v924 = vpack.c.b16 %v849, %v848
    %v925 = vpack.c.b16 %v851, %v850
    %v926 = vpack.c.b16 %v853, %v852
    %v927 = vpack.c.b16 %v855, %v854
    %1000 = vmatprep.subr.bf16.mxu0 0
    %1001 = vmatpush1.bf16.msra.mxu0 %v856
    %1002 = vmatprep.subr.bf16.mxu0 0
    %1003 = vmatpush1.bf16.msra.mxu0 %v857
    %1004 = vmatprep.subr.bf16.mxu0 0
    %1005 = vmatpush1.bf16.msra.mxu0 %v858
    %1006 = vmatprep.subr.bf16.mxu0 0
    %1007 = vmatpush1.bf16.msra.mxu0 %v859
    %1008 = vmatprep.subr.bf16.mxu0 0
    %1009 = vmatpush1.bf16.msra.mxu0 %v860
    %1010 = vmatprep.subr.bf16.mxu0 0
    %1011 = vmatpush1.bf16.msra.mxu0 %v861
    %1012 = vmatprep.subr.bf16.mxu0 0
    %1013 = vmatpush1.bf16.msra.mxu0 %v862
    %1014 = vmatprep.subr.bf16.mxu0 0
    %1015 = vmatpush1.bf16.msra.mxu0 %v863
    %1016 = vmatprep.subr.bf16.mxu0 0
    %1017 = vmatpush1.bf16.msra.mxu0 %v864
    %1018 = vmatprep.subr.bf16.mxu0 0
    %1019 = vmatpush1.bf16.msra.mxu0 %v865
    %1020 = vmatprep.subr.bf16.mxu0 0
    %1021 = vmatpush1.bf16.msra.mxu0 %v866
    %1022 = vmatprep.subr.bf16.mxu0 0
    %1023 = vmatpush1.bf16.msra.mxu0 %v867
    %1024 = vmatprep.subr.bf16.mxu0 0
    %1025 = vmatpush1.bf16.msra.mxu0 %v868
    %1026 = vmatprep.subr.bf16.mxu0 0
    %1027 = vmatpush1.bf16.msra.mxu0 %v869
    %1028 = vmatprep.subr.bf16.mxu0 0
    %1029 = vmatpush1.bf16.msra.mxu0 %v870
    %1030 = vmatprep.subr.bf16.mxu0 0
    %1031 = vmatpush1.bf16.msra.mxu0 %v871
    %1032 = vmatprep.mubr.bf16.mxu0 %v167
    %1033 = vmatmul.mubr.bf16.gmra.mrb[0].mxu0 %v128
    %v1034 = vpop.f32.mrb[0].mxu0
    %v1035 = vadd.f32 %v566, %v1034
    %v1036 = vpop.f32.mrb[0].mxu0
    %v1037 = vpop.f32.mrb[0].mxu0
    %v1038 = vadd.f32 %v566, %v1037
    %v1039 = vpop.f32.mrb[0].mxu0
    %1040 = vmatprep.mubr.bf16.mxu0 %v168
    %1041 = vmatmul.mubr.bf16.gmra.mrb[0].mxu0 %v129
    %v1042 = vpop.f32.mrb[0].mxu0
    %v1043 = vadd.f32 %v566, %v1042
    %v1044 = vpop.f32.mrb[0].mxu0
    %v1045 = vpop.f32.mrb[0].mxu0
    %v1046 = vadd.f32 %v566, %v1045
    %v1047 = vpop.f32.mrb[0].mxu0
    %1048 = vmatprep.mubr.bf16.mxu0 %v169
    %1049 = vmatmul.mubr.bf16.gmra.mrb[0].mxu0 %v130
    %v1050 = vpop.f32.mrb[0].mxu0
    %v1051 = vadd.f32 %v566, %v1050
    %v1052 = vpop.f32.mrb[0].mxu0
    %v1053 = vpop.f32.mrb[0].mxu0
    %v1054 = vadd.f32 %v566, %v1053
    %v1055 = vpop.f32.mrb[0].mxu0
    %1056 = vmatprep.mubr.bf16.mxu0 %v170
    %1057 = vmatmul.mubr.bf16.gmra.mrb[0].mxu0 %v131
    %v1058 = vpop.f32.mrb[0].mxu0
    %v1059 = vadd.f32 %v566, %v1058
    %v1060 = vpop.f32.mrb[0].mxu0
    %v1061 = vpop.f32.mrb[0].mxu0
    %v1062 = vadd.f32 %v566, %v1061
    %v1063 = vpop.f32.mrb[0].mxu0
    %1064 = vmatprep.mubr.bf16.mxu0 %v171
    %1065 = vmatmul.mubr.bf16.gmra.mrb[0].mxu0 %v132
    %v1066 = vpop.f32.mrb[0].mxu0
    %v1067 = vadd.f32 %v566, %v1066
    %v1068 = vpop.f32.mrb[0].mxu0
    %v1069 = vpop.f32.mrb[0].mxu0
    %v1070 = vadd.f32 %v566, %v1069
    %v1071 = vpop.f32.mrb[0].mxu0
    %1072 = vmatprep.mubr.bf16.mxu0 %v172
    %1073 = vmatmul.mubr.bf16.gmra.mrb[0].mxu0 %v133
    %v1074 = vpop.f32.mrb[0].mxu0
    %v1075 = vadd.f32 %v566, %v1074
    %v1076 = vpop.f32.mrb[0].mxu0
    %v1077 = vpop.f32.mrb[0].mxu0
    %v1078 = vadd.f32 %v566, %v1077
    %v1079 = vpop.f32.mrb[0].mxu0
    %1080 = vmatprep.mubr.bf16.mxu0 %v173
    %1081 = vmatmul.mubr.bf16.gmra.mrb[0].mxu0 %v134
    %v1082 = vpop.f32.mrb[0].mxu0
    %v1083 = vadd.f32 %v566, %v1082
    %v1084 = vpop.f32.mrb[0].mxu0
    %v1085 = vpop.f32.mrb[0].mxu0
    %v1086 = vadd.f32 %v566, %v1085
    %v1087 = vpop.f32.mrb[0].mxu0
    %1088 = vmatprep.mubr.bf16.mxu0 %v174
    %1089 = vmatmul.mubr.bf16.gmra.mrb[0].mxu0 %v135
    %v1090 = vpop.f32.mrb[0].mxu0
    %v1091 = vadd.f32 %v566, %v1090
    %v1092 = vpop.f32.mrb[0].mxu0
    %v1093 = vpop.f32.mrb[0].mxu0
    %v1094 = vpop.f32.mrb[0].mxu0
    %1095 = vdwg.mxu0
    %1096 = vmatprep.subr.bf16.mxu0 0
    %1097 = vmatpush1.bf16.msra.mxu0 %v872
    %1098 = vmatprep.subr.bf16.mxu0 0
    %1099 = vmatpush1.bf16.msra.mxu0 %v873
    %1100 = vmatprep.subr.bf16.mxu0 0
    %1101 = vmatpush1.bf16.msra.mxu0 %v874
    %1102 = vmatprep.subr.bf16.mxu0 0
    %1103 = vmatpush1.bf16.msra.mxu0 %v875
    %1104 = vmatprep.subr.bf16.mxu0 0
    %1105 = vmatpush1.bf16.msra.mxu0 %v876
    %1106 = vmatprep.subr.bf16.mxu0 0
    %1107 = vmatpush1.bf16.msra.mxu0 %v877
    %1108 = vmatprep.subr.bf16.mxu0 0
    %1109 = vmatpush1.bf16.msra.mxu0 %v878
    %1110 = vmatprep.subr.bf16.mxu0 0
    %1111 = vmatpush1.bf16.msra.mxu0 %v879
    %1112 = vmatprep.subr.bf16.mxu0 0
    %1113 = vmatpush1.bf16.msra.mxu0 %v880
    %1114 = vmatprep.subr.bf16.mxu0 0
    %1115 = vmatpush1.bf16.msra.mxu0 %v881
    %1116 = vmatprep.subr.bf16.mxu0 0
    %1117 = vmatpush1.bf16.msra.mxu0 %v882
    %1118 = vmatprep.subr.bf16.mxu0 0
    %1119 = vmatpush1.bf16.msra.mxu0 %v883
    %1120 = vmatprep.subr.bf16.mxu0 0
    %1121 = vmatpush1.bf16.msra.mxu0 %v884
    %1122 = vmatprep.subr.bf16.mxu0 0
    %1123 = vmatpush1.bf16.msra.mxu0 %v885
    %1124 = vmatprep.subr.bf16.mxu0 0
    %1125 = vmatpush1.bf16.msra.mxu0 %v886
    %1126 = vmatprep.subr.bf16.mxu0 0
    %1127 = vmatpush1.bf16.msra.mxu0 %v887
    %1128 = vmatprep.mubr.bf16.mxu0 %v245
    %1129 = vmatmul.mubr.bf16.gmra.mrb[0].mxu0 %v206
    %v1130 = vpop.f32.mrb[0].mxu0
    %v1131 = vadd.f32 %v1035, %v1130
    %v1132 = vpop.f32.mrb[0].mxu0
    %v1133 = vpop.f32.mrb[0].mxu0
    %v1134 = vadd.f32 %v1038, %v1133
    %v1135 = vpop.f32.mrb[0].mxu0
    %1136 = vmatprep.mubr.bf16.mxu0 %v246
    %1137 = vmatmul.mubr.bf16.gmra.mrb[0].mxu0 %v207
    %v1138 = vpop.f32.mrb[0].mxu0
    %v1139 = vadd.f32 %v1043, %v1138
    %v1140 = vpop.f32.mrb[0].mxu0
    %v1141 = vpop.f32.mrb[0].mxu0
    %v1142 = vadd.f32 %v1046, %v1141
    %v1143 = vpop.f32.mrb[0].mxu0
    %1144 = vmatprep.mubr.bf16.mxu0 %v247
    %1145 = vmatmul.mubr.bf16.gmra.mrb[0].mxu0 %v208
    %v1146 = vpop.f32.mrb[0].mxu0
    %v1147 = vadd.f32 %v1051, %v1146
    %v1148 = vpop.f32.mrb[0].mxu0
    %v1149 = vpop.f32.mrb[0].mxu0
    %v1150 = vadd.f32 %v1054, %v1149
    %v1151 = vpop.f32.mrb[0].mxu0
    %1152 = vmatprep.mubr.bf16.mxu0 %v248
    %1153 = vmatmul.mubr.bf16.gmra.mrb[0].mxu0 %v209
    %v1154 = vpop.f32.mrb[0].mxu0
    %v1155 = vadd.f32 %v1059, %v1154
    %v1156 = vpop.f32.mrb[0].mxu0
    %v1157 = vpop.f32.mrb[0].mxu0
    %v1158 = vadd.f32 %v1062, %v1157
    %v1159 = vpop.f32.mrb[0].mxu0
    %1160 = vmatprep.mubr.bf16.mxu0 %v249
    %1161 = vmatmul.mubr.bf16.gmra.mrb[0].mxu0 %v210
    %v1162 = vpop.f32.mrb[0].mxu0
    %v1163 = vadd.f32 %v1067, %v1162
    %v1164 = vpop.f32.mrb[0].mxu0
    %v1165 = vpop.f32.mrb[0].mxu0
    %v1166 = vadd.f32 %v1070, %v1165
    %v1167 = vpop.f32.mrb[0].mxu0
    %1168 = vmatprep.mubr.bf16.mxu0 %v250
    %1169 = vmatmul.mubr.bf16.gmra.mrb[0].mxu0 %v211
    %v1170 = vpop.f32.mrb[0].mxu0
    %v1171 = vadd.f32 %v1075, %v1170
    %v1172 = vpop.f32.mrb[0].mxu0
    %v1173 = vpop.f32.mrb[0].mxu0
    %v1174 = vadd.f32 %v1078, %v1173
    %v1175 = vpop.f32.mrb[0].mxu0
    %1176 = vmatprep.mubr.bf16.mxu0 %v251
    %1177 = vmatmul.mubr.bf16.gmra.mrb[0].mxu0 %v212
    %v1178 = vpop.f32.mrb[0].mxu0
    %v1179 = vadd.f32 %v1083, %v1178
    %v1180 = vpop.f32.mrb[0].mxu0
    %v1181 = vpop.f32.mrb[0].mxu0
    %v1182 = vadd.f32 %v1086, %v1181
    %v1183 = vpop.f32.mrb[0].mxu0
    %1184 = vmatprep.mubr.bf16.mxu0 %v252
    %1185 = vmatmul.mubr.bf16.gmra.mrb[0].mxu0 %v213
    %v1186 = vpop.f32.mrb[0].mxu0
    %v1187 = vadd.f32 %v1091, %v1186
    %v1188 = vpop.f32.mrb[0].mxu0
    %v1189 = vpop.f32.mrb[0].mxu0
    %v1190 = vpop.f32.mrb[0].mxu0
    %1191 = vdwg.mxu0
    %1192 = vmatprep.subr.bf16.mxu0 0
    %1193 = vmatpush1.bf16.msra.mxu0 %v888
    %1194 = vmatprep.subr.bf16.mxu0 0
    %1195 = vmatpush1.bf16.msra.mxu0 %v889
    %1196 = vmatprep.subr.bf16.mxu0 0
    %1197 = vmatpush1.bf16.msra.mxu0 %v890
    %1198 = vmatprep.subr.bf16.mxu0 0
    %1199 = vmatpush1.bf16.msra.mxu0 %v891
    %1200 = vmatprep.subr.bf16.mxu0 0
    %1201 = vmatpush1.bf16.msra.mxu0 %v892
    %1202 = vmatprep.subr.bf16.mxu0 0
    %1203 = vmatpush1.bf16.msra.mxu0 %v893
    %1204 = vmatprep.subr.bf16.mxu0 0
    %1205 = vmatpush1.bf16.msra.mxu0 %v894
    %1206 = vmatprep.subr.bf16.mxu0 0
    %1207 = vmatpush1.bf16.msra.mxu0 %v895
    %1208 = vmatprep.subr.bf16.mxu0 0
    %1209 = vmatpush1.bf16.msra.mxu0 %v896
    %1210 = vmatprep.subr.bf16.mxu0 0
    %1211 = vmatpush1.bf16.msra.mxu0 %v897
    %1212 = vmatprep.subr.bf16.mxu0 0
    %1213 = vmatpush1.bf16.msra.mxu0 %v898
    %1214 = vmatprep.subr.bf16.mxu0 0
    %1215 = vmatpush1.bf16.msra.mxu0 %v899
    %1216 = vmatprep.subr.bf16.mxu0 0
    %1217 = vmatpush1.bf16.msra.mxu0 %v900
    %1218 = vmatprep.subr.bf16.mxu0 0
    %1219 = vmatpush1.bf16.msra.mxu0 %v901
    %1220 = vmatprep.subr.bf16.mxu0 0
    %1221 = vmatpush1.bf16.msra.mxu0 %v902
    %1222 = vmatprep.subr.bf16.mxu0 0
    %1223 = vmatpush1.bf16.msra.mxu0 %v903
    %1224 = vmatprep.mubr.bf16.mxu0 %v292
    %1225 = vmatmul.mubr.bf16.gmra.mrb[0].mxu0 %v253
    %v1226 = vpop.f32.mrb[0].mxu0
    %v1227 = vadd.f32 %v1131, %v1226
    %v1228 = vpop.f32.mrb[0].mxu0
    %v1229 = vpop.f32.mrb[0].mxu0
    %v1230 = vadd.f32 %v1134, %v1229
    %v1231 = vpop.f32.mrb[0].mxu0
    %1232 = vmatprep.mubr.bf16.mxu0 %v293
    %1233 = vmatmul.mubr.bf16.gmra.mrb[0].mxu0 %v254
    %v1234 = vpop.f32.mrb[0].mxu0
    %v1235 = vadd.f32 %v1139, %v1234
    %v1236 = vpop.f32.mrb[0].mxu0
    %v1237 = vpop.f32.mrb[0].mxu0
    %v1238 = vadd.f32 %v1142, %v1237
    %v1239 = vpop.f32.mrb[0].mxu0
    %1240 = vmatprep.mubr.bf16.mxu0 %v294
    %1241 = vmatmul.mubr.bf16.gmra.mrb[0].mxu0 %v255
    %v1242 = vpop.f32.mrb[0].mxu0
    %v1243 = vadd.f32 %v1147, %v1242
    %v1244 = vpop.f32.mrb[0].mxu0
    %v1245 = vpop.f32.mrb[0].mxu0
    %v1246 = vadd.f32 %v1150, %v1245
    %v1247 = vpop.f32.mrb[0].mxu0
    %1248 = vmatprep.mubr.bf16.mxu0 %v295
    %1249 = vmatmul.mubr.bf16.gmra.mrb[0].mxu0 %v256
    %v1250 = vpop.f32.mrb[0].mxu0
    %v1251 = vadd.f32 %v1155, %v1250
    %v1252 = vpop.f32.mrb[0].mxu0
    %v1253 = vpop.f32.mrb[0].mxu0
    %v1254 = vadd.f32 %v1158, %v1253
    %v1255 = vpop.f32.mrb[0].mxu0
    %1256 = vmatprep.mubr.bf16.mxu0 %v296
    %1257 = vmatmul.mubr.bf16.gmra.mrb[0].mxu0 %v257
    %v1258 = vpop.f32.mrb[0].mxu0
    %v1259 = vadd.f32 %v1163, %v1258
    %v1260 = vpop.f32.mrb[0].mxu0
    %v1261 = vpop.f32.mrb[0].mxu0
    %v1262 = vadd.f32 %v1166, %v1261
    %v1263 = vpop.f32.mrb[0].mxu0
    %1264 = vmatprep.mubr.bf16.mxu0 %v297
    %1265 = vmatmul.mubr.bf16.gmra.mrb[0].mxu0 %v258
    %v1266 = vpop.f32.mrb[0].mxu0
    %v1267 = vadd.f32 %v1171, %v1266
    %v1268 = vpop.f32.mrb[0].mxu0
    %v1269 = vpop.f32.mrb[0].mxu0
    %v1270 = vadd.f32 %v1174, %v1269
    %v1271 = vpop.f32.mrb[0].mxu0
    %1272 = vmatprep.mubr.bf16.mxu0 %v298
    %1273 = vmatmul.mubr.bf16.gmra.mrb[0].mxu0 %v259
    %v1274 = vpop.f32.mrb[0].mxu0
    %v1275 = vadd.f32 %v1179, %v1274
    %v1276 = vpop.f32.mrb[0].mxu0
    %v1277 = vpop.f32.mrb[0].mxu0
    %v1278 = vadd.f32 %v1182, %v1277
    %v1279 = vpop.f32.mrb[0].mxu0
    %1280 = vmatprep.mubr.bf16.mxu0 %v299
    %1281 = vmatmul.mubr.bf16.gmra.mrb[0].mxu0 %v260
    %v1282 = vpop.f32.mrb[0].mxu0
    %v1283 = vadd.f32 %v1187, %v1282
    %v1284 = vpop.f32.mrb[0].mxu0
    %v1285 = vpop.f32.mrb[0].mxu0
    %v1286 = vpop.f32.mrb[0].mxu0
    %1287 = vdwg.mxu0
    %1288 = vmatprep.subr.bf16.mxu0 0
    %1289 = vmatpush1.bf16.msra.mxu0 %v904
    %1290 = vmatprep.subr.bf16.mxu0 0
    %1291 = vmatpush1.bf16.msra.mxu0 %v905
    %1292 = vmatprep.subr.bf16.mxu0 0
    %1293 = vmatpush1.bf16.msra.mxu0 %v906
    %1294 = vmatprep.subr.bf16.mxu0 0
    %1295 = vmatpush1.bf16.msra.mxu0 %v907
    %1296 = vmatprep.subr.bf16.mxu0 0
    %1297 = vmatpush1.bf16.msra.mxu0 %v908
    %1298 = vmatprep.subr.bf16.mxu0 0
    %1299 = vmatpush1.bf16.msra.mxu0 %v909
    %1300 = vmatprep.subr.bf16.mxu0 0
    %1301 = vmatpush1.bf16.msra.mxu0 %v910
    %1302 = vmatprep.subr.bf16.mxu0 0
    %1303 = vmatpush1.bf16.msra.mxu0 %v911
    %1304 = vmatprep.subr.bf16.mxu0 0
    %1305 = vmatpush1.bf16.msra.mxu0 %v912
    %1306 = vmatprep.subr.bf16.mxu0 0
    %1307 = vmatpush1.bf16.msra.mxu0 %v913
    %1308 = vmatprep.subr.bf16.mxu0 0
    %1309 = vmatpush1.bf16.msra.mxu0 %v914
    %1310 = vmatprep.subr.bf16.mxu0 0
    %1311 = vmatpush1.bf16.msra.mxu0 %v915
    %1312 = vmatprep.subr.bf16.mxu0 0
    %1313 = vmatpush1.bf16.msra.mxu0 %v916
    %1314 = vmatprep.subr.bf16.mxu0 0
    %1315 = vmatpush1.bf16.msra.mxu0 %v917
    %1316 = vmatprep.subr.bf16.mxu0 0
    %1317 = vmatpush1.bf16.msra.mxu0 %v918
    %1318 = vmatprep.subr.bf16.mxu0 0
    %1319 = vmatpush1.bf16.msra.mxu0 %v919
    %1320 = vmatprep.mubr.bf16.mxu0 %v370
    %1321 = vmatmul.mubr.bf16.gmra.mrb[0].mxu0 %v331
    %v1322 = vpop.f32.mrb[0].mxu0
    %v1323 = vadd.f32 %v1227, %v1322
    %v1324 = vpop.f32.mrb[0].mxu0
    %v1325 = vpop.f32.mrb[0].mxu0
    %v1326 = vadd.f32 %v1230, %v1325
    %v1327 = vpop.f32.mrb[0].mxu0
    %1328 = vmatprep.mubr.bf16.mxu0 %v371
    %1329 = vmatmul.mubr.bf16.gmra.mrb[0].mxu0 %v332
    %v1330 = vpop.f32.mrb[0].mxu0
    %v1331 = vadd.f32 %v1235, %v1330
    %v1332 = vpop.f32.mrb[0].mxu0
    %v1333 = vpop.f32.mrb[0].mxu0
    %v1334 = vadd.f32 %v1238, %v1333
    %v1335 = vpop.f32.mrb[0].mxu0
    %1336 = vmatprep.mubr.bf16.mxu0 %v372
    %1337 = vmatmul.mubr.bf16.gmra.mrb[0].mxu0 %v333
    %v1338 = vpop.f32.mrb[0].mxu0
    %v1339 = vadd.f32 %v1243, %v1338
    %v1340 = vpop.f32.mrb[0].mxu0
    %v1341 = vpop.f32.mrb[0].mxu0
    %v1342 = vadd.f32 %v1246, %v1341
    %v1343 = vpop.f32.mrb[0].mxu0
    %1344 = vmatprep.mubr.bf16.mxu0 %v373
    %1345 = vmatmul.mubr.bf16.gmra.mrb[0].mxu0 %v334
    %v1346 = vpop.f32.mrb[0].mxu0
    %v1347 = vadd.f32 %v1251, %v1346
    %v1348 = vpop.f32.mrb[0].mxu0
    %v1349 = vpop.f32.mrb[0].mxu0
    %v1350 = vadd.f32 %v1254, %v1349
    %v1351 = vpop.f32.mrb[0].mxu0
    %1352 = vmatprep.mubr.bf16.mxu0 %v374
    %1353 = vmatmul.mubr.bf16.gmra.mrb[0].mxu0 %v335
    %v1354 = vpop.f32.mrb[0].mxu0
    %v1355 = vadd.f32 %v1259, %v1354
    %v1356 = vpop.f32.mrb[0].mxu0
    %v1357 = vpop.f32.mrb[0].mxu0
    %v1358 = vadd.f32 %v1262, %v1357
    %v1359 = vpop.f32.mrb[0].mxu0
    %1360 = vmatprep.mubr.bf16.mxu0 %v375
    %1361 = vmatmul.mubr.bf16.gmra.mrb[0].mxu0 %v336
    %v1362 = vpop.f32.mrb[0].mxu0
    %v1363 = vadd.f32 %v1267, %v1362
    %v1364 = vpop.f32.mrb[0].mxu0
    %v1365 = vpop.f32.mrb[0].mxu0
    %v1366 = vadd.f32 %v1270, %v1365
    %v1367 = vpop.f32.mrb[0].mxu0
    %1368 = vmatprep.mubr.bf16.mxu0 %v376
    %1369 = vmatmul.mubr.bf16.gmra.mrb[0].mxu0 %v337
    %v1370 = vpop.f32.mrb[0].mxu0
    %v1371 = vadd.f32 %v1275, %v1370
    %v1372 = vpop.f32.mrb[0].mxu0
    %v1373 = vpop.f32.mrb[0].mxu0
    %v1374 = vadd.f32 %v1278, %v1373
    %v1375 = vpop.f32.mrb[0].mxu0
    %1376 = vmatprep.mubr.bf16.mxu0 %v377
    %1377 = vmatmul.mubr.bf16.gmra.mrb[0].mxu0 %v338
    %v1378 = vpop.f32.mrb[0].mxu0
    %v1379 = vadd.f32 %v1283, %v1378
    %v1380 = vpop.f32.mrb[0].mxu0
    %v1381 = vpop.f32.mrb[0].mxu0
    %v1382 = vpop.f32.mrb[0].mxu0
    %1383 = vdwg.mxu0
    %1384 = vmatprep.subr.bf16.mxu0 0
    %1385 = vmatpush1.bf16.msra.mxu0 %v920
    %1386 = vmatprep.subr.bf16.mxu0 0
    %1387 = vmatpush1.bf16.msra.mxu0 %v921
    %1388 = vmatprep.subr.bf16.mxu0 0
    %1389 = vmatpush1.bf16.msra.mxu0 %v922
    %1390 = vmatprep.subr.bf16.mxu0 0
    %1391 = vmatpush1.bf16.msra.mxu0 %v923
    %1392 = vmatprep.subr.bf16.mxu0 0
    %1393 = vmatpush1.bf16.msra.mxu0 %v924
    %1394 = vmatprep.subr.bf16.mxu0 0
    %1395 = vmatpush1.bf16.msra.mxu0 %v925
    %1396 = vmatprep.subr.bf16.mxu0 0
    %1397 = vmatpush1.bf16.msra.mxu0 %v926
    %1398 = vmatprep.subr.bf16.mxu0 0
    %1399 = vmatpush1.bf16.msra.mxu0 %v927
    %1400 = vmatprep.subr.bf16.mxu0 0
    %1401 = vmatpush1.bf16.msra.mxu0 0
    %1402 = vmatprep.subr.bf16.mxu0 0
    %1403 = vmatpush1.bf16.msra.mxu0 0
    %1404 = vmatprep.subr.bf16.mxu0 0
    %1405 = vmatpush1.bf16.msra.mxu0 0
    %1406 = vmatprep.subr.bf16.mxu0 0
    %1407 = vmatpush1.bf16.msra.mxu0 0
    %1408 = vmatprep.subr.bf16.mxu0 0
    %1409 = vmatpush1.bf16.msra.mxu0 0
    %1410 = vmatprep.subr.bf16.mxu0 0
    %1411 = vmatpush1.bf16.msra.mxu0 0
    %1412 = vmatprep.subr.bf16.mxu0 0
    %1413 = vmatpush1.bf16.msra.mxu0 0
    %1414 = vmatprep.subr.bf16.mxu0 0
    %1415 = vmatpush1.bf16.msra.mxu0 0
    %1416 = vmatprep.mubr.bf16.mxu0 0
    %1417 = vmatmul.mubr.bf16.gmra.mrb[0].mxu0 %v409
    %v1418 = vpop.f32.mrb[0].mxu0
    %v1419 = vadd.f32 %v1323, %v1418
    %v1420 = vpop.f32.mrb[0].mxu0
    %v1421 = vpop.f32.mrb[0].mxu0
    %v1422 = vadd.f32 %v1326, %v1421
    %v1423 = vpop.f32.mrb[0].mxu0
    %1424 = vmatprep.mubr.bf16.mxu0 0
    %1425 = vmatmul.mubr.bf16.gmra.mrb[0].mxu0 %v410
    %v1426 = vpop.f32.mrb[0].mxu0
    %v1427 = vadd.f32 %v1331, %v1426
    %v1428 = vpop.f32.mrb[0].mxu0
    %v1429 = vpop.f32.mrb[0].mxu0
    %v1430 = vadd.f32 %v1334, %v1429
    %v1431 = vpop.f32.mrb[0].mxu0
    %1432 = vmatprep.mubr.bf16.mxu0 0
    %1433 = vmatmul.mubr.bf16.gmra.mrb[0].mxu0 %v411
    %v1434 = vpop.f32.mrb[0].mxu0
    %v1435 = vadd.f32 %v1339, %v1434
    %v1436 = vpop.f32.mrb[0].mxu0
    %v1437 = vpop.f32.mrb[0].mxu0
    %v1438 = vadd.f32 %v1342, %v1437
    %v1439 = vpop.f32.mrb[0].mxu0
    %1440 = vmatprep.mubr.bf16.mxu0 0
    %1441 = vmatmul.mubr.bf16.gmra.mrb[0].mxu0 %v412
    %v1442 = vpop.f32.mrb[0].mxu0
    %v1443 = vadd.f32 %v1347, %v1442
    %v1444 = vpop.f32.mrb[0].mxu0
    %v1445 = vpop.f32.mrb[0].mxu0
    %v1446 = vadd.f32 %v1350, %v1445
    %v1447 = vpop.f32.mrb[0].mxu0
    %1448 = vmatprep.mubr.bf16.mxu0 0
    %1449 = vmatmul.mubr.bf16.gmra.mrb[0].mxu0 %v413
    %v1450 = vpop.f32.mrb[0].mxu0
    %v1451 = vadd.f32 %v1355, %v1450
    %v1452 = vpop.f32.mrb[0].mxu0
    %v1453 = vpop.f32.mrb[0].mxu0
    %v1454 = vadd.f32 %v1358, %v1453
    %v1455 = vpop.f32.mrb[0].mxu0
    %1456 = vmatprep.mubr.bf16.mxu0 0
    %1457 = vmatmul.mubr.bf16.gmra.mrb[0].mxu0 %v414
    %v1458 = vpop.f32.mrb[0].mxu0
    %v1459 = vadd.f32 %v1363, %v1458
    %v1460 = vpop.f32.mrb[0].mxu0
    %v1461 = vpop.f32.mrb[0].mxu0
    %v1462 = vadd.f32 %v1366, %v1461
    %v1463 = vpop.f32.mrb[0].mxu0
    %1464 = vmatprep.mubr.bf16.mxu0 0
    %1465 = vmatmul.mubr.bf16.gmra.mrb[0].mxu0 %v415
    %v1466 = vpop.f32.mrb[0].mxu0
    %v1467 = vadd.f32 %v1371, %v1466
    %v1468 = vpop.f32.mrb[0].mxu0
    %v1469 = vpop.f32.mrb[0].mxu0
    %v1470 = vadd.f32 %v1374, %v1469
    %v1471 = vpop.f32.mrb[0].mxu0
    %1472 = vmatprep.mubr.bf16.mxu0 0
    %1473 = vmatmul.mubr.bf16.gmra.mrb[0].mxu0 %v416
    %v1474 = vpop.f32.mrb[0].mxu0
    %v1475 = vadd.f32 %v1379, %v1474
    %v1476 = vpop.f32.mrb[0].mxu0
    %v1477 = vpop.f32.mrb[0].mxu0
    %v1478 = vpop.f32.mrb[0].mxu0
    %1479 = vdwg.mxu0
    %v1480 = vmax.f32 %v1419, 0.0
    %v1481 = vmax.f32 %v1422, 0.0
    %v1482 = vmax.f32 %v1427, 0.0
    %v1483 = vmax.f32 %v1430, 0.0
    %v1484 = vmax.f32 %v1435, 0.0
    %v1485 = vmax.f32 %v1438, 0.0
    %v1486 = vmax.f32 %v1443, 0.0
    %v1487 = vmax.f32 %v1446, 0.0
    %v1488 = vmax.f32 %v1451, 0.0
    %v1489 = vmax.f32 %v1454, 0.0
    %v1490 = vmax.f32 %v1459, 0.0
    %v1491 = vmax.f32 %v1462, 0.0
    %v1492 = vmax.f32 %v1467, 0.0
    %v1493 = vmax.f32 %v1470, 0.0
    %v1494 = vmax.f32 %v1475, 0.0
    %v1495 = vmul.f32 %v1491, %v98
    %v1496 = vmul.f32 %v1492, %v99
    %v1497 = vmul.f32 %v1493, %v100
    %v1498 = vmul.f32 %v1494, %v101
    %v1499 = vmul.f32 %v1480, %v102
    %v1500 = vmul.f32 %v1481, %v103
    %v1501 = vmul.f32 %v1482, %v104
    %v1502 = vmul.f32 %v1483, %v105
    %v1503 = vmul.f32 %v1484, %v106
    %v1504 = vmul.f32 %v1485, %v107
    %v1505 = vmul.f32 %v1486, %v108
    %v1506 = vmul.f32 %v1487, %v109
    %v1507 = vmul.f32 %v1488, %v110
    %v1508 = vmul.f32 %v1489, %v111
    %v1509 = vmul.f32 %v1490, %v112
    %v1510 = vpack.c.bf16 %v1496, %v1495
    %v1511 = vpack.c.bf16 %v1498, %v1497
    %v1512 = vpack.c.bf16 %v1500, %v1499
    %v1513 = vpack.c.bf16 %v1502, %v1501
    %v1514 = vpack.c.bf16 %v1504, %v1503
    %v1515 = vpack.c.bf16 %v1506, %v1505
    %v1516 = vpack.c.bf16 %v1508, %v1507
    %v1517 = vpack.c.bf16 %v1509, %v1509
    %v1518 = vmul.f32 %v1492, %v137
    %v1519 = vmul.f32 %v1493, %v138
    %v1520 = vmul.f32 %v1494, %v139
    %v1521 = vmul.f32 %v1480, %v140
    %v1522 = vmul.f32 %v1481, %v141
    %v1523 = vmul.f32 %v1482, %v142
    %v1524 = vmul.f32 %v1483, %v143
    %v1525 = vmul.f32 %v1484, %v144
    %v1526 = vmul.f32 %v1485, %v145
    %v1527 = vmul.f32 %v1486, %v146
    %v1528 = vmul.f32 %v1487, %v147
    %v1529 = vmul.f32 %v1488, %v148
    %v1530 = vmul.f32 %v1489, %v149
    %v1531 = vmul.f32 %v1490, %v150
    %v1532 = vmul.f32 %v1491, %v151
    %v1533 = vpack.c.bf16 %v1519, %v1518
    %v1534 = vpack.c.bf16 %v1521, %v1520
    %v1535 = vpack.c.bf16 %v1523, %v1522
    %v1536 = vpack.c.bf16 %v1525, %v1524
    %v1537 = vpack.c.bf16 %v1527, %v1526
    %v1538 = vpack.c.bf16 %v1529, %v1528
    %v1539 = vpack.c.bf16 %v1531, %v1530
    %v1540 = vpack.c.bf16 %v1532, %v1532
    %v1541 = vmul.f32 %v1493, %v176
    %v1542 = vmul.f32 %v1494, %v177
    %v1543 = vmul.f32 %v1480, %v178
    %v1544 = vmul.f32 %v1481, %v179
    %v1545 = vmul.f32 %v1482, %v180
    %v1546 = vmul.f32 %v1483, %v181
    %v1547 = vmul.f32 %v1484, %v182
    %v1548 = vmul.f32 %v1485, %v183
    %v1549 = vmul.f32 %v1486, %v184
    %v1550 = vmul.f32 %v1487, %v185
    %v1551 = vmul.f32 %v1488, %v186
    %v1552 = vmul.f32 %v1489, %v187
    %v1553 = vmul.f32 %v1490, %v188
    %v1554 = vmul.f32 %v1491, %v189
    %v1555 = vmul.f32 %v1492, %v190
    %v1556 = vpack.c.bf16 %v1542, %v1541
    %v1557 = vpack.c.bf16 %v1544, %v1543
    %v1558 = vpack.c.bf16 %v1546, %v1545
    %v1559 = vpack.c.bf16 %v1548, %v1547
    %v1560 = vpack.c.bf16 %v1550, %v1549
    %v1561 = vpack.c.bf16 %v1552, %v1551
    %v1562 = vpack.c.bf16 %v1554, %v1553
    %v1563 = vpack.c.bf16 %v1555, %v1555
    %v1564 = vmul.f32 %v1494, %v215
    %v1565 = vmul.f32 %v1480, %v216
    %v1566 = vmul.f32 %v1481, %v217
    %v1567 = vmul.f32 %v1482, %v218
    %v1568 = vmul.f32 %v1483, %v219
    %v1569 = vmul.f32 %v1484, %v220
    %v1570 = vmul.f32 %v1485, %v221
    %v1571 = vmul.f32 %v1486, %v222
    %v1572 = vmul.f32 %v1487, %v223
    %v1573 = vmul.f32 %v1488, %v224
    %v1574 = vmul.f32 %v1489, %v225
    %v1575 = vmul.f32 %v1490, %v226
    %v1576 = vmul.f32 %v1491, %v227
    %v1577 = vmul.f32 %v1492, %v228
    %v1578 = vmul.f32 %v1493, %v229
    %v1579 = vpack.c.bf16 %v1565, %v1564
    %v1580 = vpack.c.bf16 %v1567, %v1566
    %v1581 = vpack.c.bf16 %v1569, %v1568
    %v1582 = vpack.c.bf16 %v1571, %v1570
    %v1583 = vpack.c.bf16 %v1573, %v1572
    %v1584 = vpack.c.bf16 %v1575, %v1574
    %v1585 = vpack.c.bf16 %v1577, %v1576
    %v1586 = vpack.c.bf16 %v1578, %v1578
    %v1587 = vpack.c.bf16 %v1481, %v1480
    %v1588 = vpack.c.bf16 %v1483, %v1482
    %v1589 = vpack.c.bf16 %v1485, %v1484
    %v1590 = vpack.c.bf16 %v1487, %v1486
    %v1591 = vpack.c.bf16 %v1489, %v1488
    %v1592 = vpack.c.bf16 %v1491, %v1490
    %v1593 = vpack.c.bf16 %v1493, %v1492
    %v1594 = vpack.c.bf16 %v1494, %v1494
    %v1595 = vmul.f32 %v1481, %v262
    %v1596 = vmul.f32 %v1482, %v263
    %v1597 = vmul.f32 %v1483, %v264
    %v1598 = vmul.f32 %v1484, %v265
    %v1599 = vmul.f32 %v1485, %v266
    %v1600 = vmul.f32 %v1486, %v267
    %v1601 = vmul.f32 %v1487, %v268
    %v1602 = vmul.f32 %v1488, %v269
    %v1603 = vmul.f32 %v1489, %v270
    %v1604 = vmul.f32 %v1490, %v271
    %v1605 = vmul.f32 %v1491, %v272
    %v1606 = vmul.f32 %v1492, %v273
    %v1607 = vmul.f32 %v1493, %v274
    %v1608 = vmul.f32 %v1494, %v275
    %v1609 = vmul.f32 %v1480, %v276
    %v1610 = vpack.c.bf16 %v1596, %v1595
    %v1611 = vpack.c.bf16 %v1598, %v1597
    %v1612 = vpack.c.bf16 %v1600, %v1599
    %v1613 = vpack.c.bf16 %v1602, %v1601
    %v1614 = vpack.c.bf16 %v1604, %v1603
    %v1615 = vpack.c.bf16 %v1606, %v1605
    %v1616 = vpack.c.bf16 %v1608, %v1607
    %v1617 = vpack.c.bf16 %v1609, %v1609
    %v1618 = vmul.f32 %v1482, %v301
    %v1619 = vmul.f32 %v1483, %v302
    %v1620 = vmul.f32 %v1484, %v303
    %v1621 = vmul.f32 %v1485, %v304
    %v1622 = vmul.f32 %v1486, %v305
    %v1623 = vmul.f32 %v1487, %v306
    %v1624 = vmul.f32 %v1488, %v307
    %v1625 = vmul.f32 %v1489, %v308
    %v1626 = vmul.f32 %v1490, %v309
    %v1627 = vmul.f32 %v1491, %v310
    %v1628 = vmul.f32 %v1492, %v311
    %v1629 = vmul.f32 %v1493, %v312
    %v1630 = vmul.f32 %v1494, %v313
    %v1631 = vmul.f32 %v1480, %v314
    %v1632 = vmul.f32 %v1481, %v315
    %v1633 = vpack.c.bf16 %v1619, %v1618
    %v1634 = vpack.c.bf16 %v1621, %v1620
    %v1635 = vpack.c.bf16 %v1623, %v1622
    %v1636 = vpack.c.bf16 %v1625, %v1624
    %v1637 = vpack.c.bf16 %v1627, %v1626
    %v1638 = vpack.c.bf16 %v1629, %v1628
    %v1639 = vpack.c.bf16 %v1631, %v1630
    %v1640 = vpack.c.bf16 %v1632, %v1632
    %v1641 = vmul.f32 %v1483, %v340
    %v1642 = vmul.f32 %v1484, %v341
    %v1643 = vmul.f32 %v1485, %v342
    %v1644 = vmul.f32 %v1486, %v343
    %v1645 = vmul.f32 %v1487, %v344
    %v1646 = vmul.f32 %v1488, %v345
    %v1647 = vmul.f32 %v1489, %v346
    %v1648 = vmul.f32 %v1490, %v347
    %v1649 = vmul.f32 %v1491, %v348
    %v1650 = vmul.f32 %v1492, %v349
    %v1651 = vmul.f32 %v1493, %v350
    %v1652 = vmul.f32 %v1494, %v351
    %v1653 = vmul.f32 %v1480, %v352
    %v1654 = vmul.f32 %v1481, %v353
    %v1655 = vmul.f32 %v1482, %v354
    %v1656 = vpack.c.bf16 %v1642, %v1641
    %v1657 = vpack.c.bf16 %v1644, %v1643
    %v1658 = vpack.c.bf16 %v1646, %v1645
    %v1659 = vpack.c.bf16 %v1648, %v1647
    %v1660 = vpack.c.bf16 %v1650, %v1649
    %v1661 = vpack.c.bf16 %v1652, %v1651
    %v1662 = vpack.c.bf16 %v1654, %v1653
    %v1663 = vpack.c.bf16 %v1655, %v1655
    %v1664 = vmul.f32 %v1484, %v379
    %v1665 = vmul.f32 %v1485, %v380
    %v1666 = vmul.f32 %v1486, %v381
    %v1667 = vmul.f32 %v1487, %v382
    %v1668 = vmul.f32 %v1488, %v383
    %v1669 = vmul.f32 %v1489, %v384
    %v1670 = vmul.f32 %v1490, %v385
    %v1671 = vmul.f32 %v1491, %v386
    %v1672 = vmul.f32 %v1492, %v387
    %v1673 = vmul.f32 %v1493, %v388
    %v1674 = vmul.f32 %v1494, %v389
    %v1675 = vmul.f32 %v1480, %v390
    %v1676 = vmul.f32 %v1481, %v391
    %v1677 = vmul.f32 %v1482, %v392
    %v1678 = vmul.f32 %v1483, %v393
    %v1679 = vpack.c.bf16 %v1665, %v1664
    %v1680 = vpack.c.bf16 %v1667, %v1666
    %v1681 = vpack.c.bf16 %v1669, %v1668
    %v1682 = vpack.c.bf16 %v1671, %v1670
    %v1683 = vpack.c.bf16 %v1673, %v1672
    %v1684 = vpack.c.bf16 %v1675, %v1674
    %v1685 = vpack.c.bf16 %v1677, %v1676
    %v1686 = vpack.c.bf16 %v1678, %v1678
    %v1687 = vld [vmem:[#allocation4] sm:$0xf]
    %v1688 = vld [vmem:[#allocation4 + $0x4] sm:$0xf]
    %v1689 = vld [vmem:[#allocation4 + $0x8] sm:$0xf]
    %v1690 = vld [vmem:[#allocation4 + $0xc] sm:$0xf]
    %v1691 = vld [vmem:[#allocation4 + $0x10] sm:$0xf]
    %v1692 = vld [vmem:[#allocation4 + $0x14] sm:$0xf]
    %v1693 = vld [vmem:[#allocation4 + $0x18] sm:$0xf]
    %v1694 = vld [vmem:[#allocation4 + $0x1c] sm:$0xf]
    %v1695 = vld [vmem:[#allocation4 + $0x20] sm:$0xf]
    %v1696 = vld [vmem:[#allocation4 + $0x24] sm:$0xf]
    %v1697 = vld [vmem:[#allocation4 + $0x28] sm:$0xf]
    %v1698 = vld [vmem:[#allocation4 + $0x2c] sm:$0xf]
    %v1699 = vld [vmem:[#allocation4 + $0x30] sm:$0xf]
    %v1700 = vld [vmem:[#allocation4 + $0x34] sm:$0xf]
    %v1701 = vld [vmem:[#allocation4 + $0x38] sm:$0xf]
    %v1702 = vld [vmem:[#allocation4 + $0x3c] sm:$0xf]
    %v1703 = vld [vmem:[#allocation4 + $0x40] sm:$0xf]
    %v1704 = vld [vmem:[#allocation4 + $0x44] sm:$0xf]
    %v1705 = vld [vmem:[#allocation4 + $0x48] sm:$0xf]
    %v1706 = vld [vmem:[#allocation4 + $0x4c] sm:$0xf]
    %v1707 = vld [vmem:[#allocation4 + $0x50] sm:$0xf]
    %v1708 = vld [vmem:[#allocation4 + $0x54] sm:$0xf]
    %v1709 = vld [vmem:[#allocation4 + $0x58] sm:$0xf]
    %v1710 = vld [vmem:[#allocation4 + $0x5c] sm:$0xf]
    %v1711 = vld [vmem:[#allocation4 + $0x60] sm:$0xf]
    %v1712 = vld [vmem:[#allocation4 + $0x64] sm:$0xf]
    %v1713 = vld [vmem:[#allocation4 + $0x68] sm:$0xf]
    %v1714 = vld [vmem:[#allocation4 + $0x6c] sm:$0xf]
    %v1715 = vld [vmem:[#allocation4 + $0x70] sm:$0xf]
    %v1716 = vld [vmem:[#allocation4 + $0x74] sm:$0xf]
    %v1717 = vld [vmem:[#allocation4 + $0x78] sm:$0xf]
    %v1718 = vld [vmem:[#allocation4 + $0x7c] sm:$0xf]
    %v1719 = vld [vmem:[#allocation4 + $0x80] sm:$0xf]
    %v1720 = vld [vmem:[#allocation4 + $0x84] sm:$0xf]
    %v1721 = vld [vmem:[#allocation4 + $0x88] sm:$0xf]
    %v1722 = vld [vmem:[#allocation4 + $0x8c] sm:$0xf]
    %v1723 = vld [vmem:[#allocation4 + $0x90] sm:$0xf]
    %v1724 = vld [vmem:[#allocation4 + $0x94] sm:$0xf]
    %v1725 = vld [vmem:[#allocation4 + $0x98] sm:$0xf]
    %v1726 = vld [vmem:[#allocation4 + $0x9c] sm:$0xf]
    %v1727 = vld [vmem:[#allocation4 + $0xa0] sm:$0xf]
    %v1728 = vld [vmem:[#allocation4 + $0xa4] sm:$0xf]
    %v1729 = vld [vmem:[#allocation4 + $0xa8] sm:$0xf]
    %v1730 = vld [vmem:[#allocation4 + $0xac] sm:$0xf]
    %v1731 = vld [vmem:[#allocation4 + $0xb0] sm:$0xf]
    %v1732 = vld [vmem:[#allocation4 + $0xb4] sm:$0xf]
    %v1733 = vld [vmem:[#allocation4 + $0xb8] sm:$0xf]
    %v1734 = vld [vmem:[#allocation4 + $0xbc] sm:$0xf]
    %v1735 = vld [vmem:[#allocation4 + $0xc0] sm:$0xf]
    %v1736 = vld [vmem:[#allocation4 + $0xc4] sm:$0xf]
    %v1737 = vld [vmem:[#allocation4 + $0xc8] sm:$0xf]
    %v1738 = vld [vmem:[#allocation4 + $0xcc] sm:$0xf]
    %v1739 = vld [vmem:[#allocation4 + $0xd0] sm:$0xf]
    %v1740 = vld [vmem:[#allocation4 + $0xd4] sm:$0xf]
    %v1741 = vld [vmem:[#allocation4 + $0xd8] sm:$0xf]
    %v1742 = vld [vmem:[#allocation4 + $0xdc] sm:$0xf]
    %v1743 = vld [vmem:[#allocation4 + $0xe0] sm:$0xf]
    %v1744 = vld [vmem:[#allocation4 + $0xe4] sm:$0xf]
    %v1745 = vld [vmem:[#allocation4 + $0xe8] sm:$0xf]
    %v1746 = vld [vmem:[#allocation4 + $0xec] sm:$0xf]
    %v1747 = vld [vmem:[#allocation4 + $0xf0] sm:$0xf]
    %v1748 = vld [vmem:[#allocation4 + $0xf4] sm:$0xf]
    %v1749 = vld [vmem:[#allocation4 + $0xf8] sm:$0xf]
    %v1750 = vld [vmem:[#allocation4 + $0xfc] sm:$0xf]
    %v1751 = vld [vmem:[#allocation4 + $0x100] sm:$0xf]
    %v1752 = vld [vmem:[#allocation4 + $0x104] sm:$0xf]
    %v1753 = vld [vmem:[#allocation4 + $0x108] sm:$0xf]
    %v1754 = vld [vmem:[#allocation4 + $0x10c] sm:$0xf]
    %v1755 = vld [vmem:[#allocation4 + $0x110] sm:$0xf]
    %v1756 = vld [vmem:[#allocation4 + $0x114] sm:$0xf]
    %v1757 = vld [vmem:[#allocation4 + $0x118] sm:$0xf]
    %v1758 = vld [vmem:[#allocation4 + $0x11c] sm:$0xf]
    %v1759 = vld [vmem:[#allocation4 + $0x120] sm:$0xf]
    %v1760 = vld [vmem:[#allocation4 + $0x124] sm:$0xf]
    %v1761 = vld [vmem:[#allocation4 + $0x128] sm:$0xf]
    %v1762 = vld [vmem:[#allocation4 + $0x12c] sm:$0xf]
    %v1763 = vld [vmem:[#allocation4 + $0x130] sm:$0xf]
    %v1764 = vld [vmem:[#allocation4 + $0x134] sm:$0xf]
    %v1765 = vld [vmem:[#allocation4 + $0x138] sm:$0xf]
    %v1766 = vld [vmem:[#allocation4 + $0x13c] sm:$0xf]
    %v1767 = vld [vmem:[#allocation4 + $0x140] sm:$0xf]
    %v1768 = vld [vmem:[#allocation4 + $0x144] sm:$0xf]
    %v1769 = vld [vmem:[#allocation4 + $0x148] sm:$0xf]
    %v1770 = vld [vmem:[#allocation4 + $0x14c] sm:$0xf]
    %v1771 = vld [vmem:[#allocation4 + $0x150] sm:$0xf]
    %v1772 = vld [vmem:[#allocation4 + $0x154] sm:$0xf]
    %v1773 = vld [vmem:[#allocation4 + $0x158] sm:$0xf]
    %v1774 = vld [vmem:[#allocation4 + $0x15c] sm:$0xf]
    %v1775 = vld [vmem:[#allocation4 + $0x160] sm:$0xf]
    %v1776 = vld [vmem:[#allocation4 + $0x164] sm:$0xf]
    %v1777 = vld [vmem:[#allocation4 + $0x168] sm:$0xf]
    %v1778 = vld [vmem:[#allocation4 + $0x16c] sm:$0xf]
    %v1779 = vld [vmem:[#allocation4 + $0x170] sm:$0xf]
    %v1780 = vld [vmem:[#allocation4 + $0x174] sm:$0xf]
    %v1781 = vld [vmem:[#allocation4 + $0x178] sm:$0xf]
    %v1782 = vld [vmem:[#allocation4 + $0x17c] sm:$0xf]
    %v1783 = vld [vmem:[#allocation4 + $0x180] sm:$0xf]
    %v1784 = vld [vmem:[#allocation4 + $0x184] sm:$0xf]
    %v1785 = vld [vmem:[#allocation4 + $0x188] sm:$0xf]
    %v1786 = vld [vmem:[#allocation4 + $0x18c] sm:$0xf]
    %v1787 = vld [vmem:[#allocation4 + $0x190] sm:$0xf]
    %v1788 = vld [vmem:[#allocation4 + $0x194] sm:$0xf]
    %v1789 = vld [vmem:[#allocation4 + $0x198] sm:$0xf]
    %v1790 = vld [vmem:[#allocation4 + $0x19c] sm:$0xf]
    %v1791 = vld [vmem:[#allocation4 + $0x1a0] sm:$0xf]
    %v1792 = vld [vmem:[#allocation4 + $0x1a4] sm:$0xf]
    %v1793 = vld [vmem:[#allocation4 + $0x1a8] sm:$0xf]
    %v1794 = vld [vmem:[#allocation4 + $0x1ac] sm:$0xf]
    %v1795 = vld [vmem:[#allocation4 + $0x1b0] sm:$0xf]
    %v1796 = vld [vmem:[#allocation4 + $0x1b4] sm:$0xf]
    %v1797 = vld [vmem:[#allocation4 + $0x1b8] sm:$0xf]
    %v1798 = vld [vmem:[#allocation4 + $0x1bc] sm:$0xf]
    %v1799 = vld [vmem:[#allocation4 + $0x1c0] sm:$0xf]
    %v1800 = vld [vmem:[#allocation4 + $0x1c4] sm:$0xf]
    %v1801 = vld [vmem:[#allocation4 + $0x1c8] sm:$0xf]
    %v1802 = vld [vmem:[#allocation4 + $0x1cc] sm:$0xf]
    %v1803 = vld [vmem:[#allocation4 + $0x1d0] sm:$0xf]
    %v1804 = vld [vmem:[#allocation4 + $0x1d4] sm:$0xf]
    %v1805 = vld [vmem:[#allocation4 + $0x1d8] sm:$0xf]
    %v1806 = vld [vmem:[#allocation4 + $0x1dc] sm:$0xf]
    %v1807 = vld [vmem:[#allocation4 + $0x1e0] sm:$0xf]
    %v1808 = vld [vmem:[#allocation4 + $0x1e4] sm:$0xf]
    %v1809 = vld [vmem:[#allocation4 + $0x1e8] sm:$0xf]
    %v1810 = vld [vmem:[#allocation4 + $0x1ec] sm:$0xf]
    %v1811 = vld [vmem:[#allocation4 + $0x1f0] sm:$0xf]
    %v1812 = vld [vmem:[#allocation4 + $0x1f4] sm:$0xf]
    %v1813 = vld [vmem:[#allocation4 + $0x1f8] sm:$0xf]
    %v1814 = vld [vmem:[#allocation4 + $0x1fc] sm:$0xf]
    %v1815 = vld [vmem:[#allocation4 + $0x200] sm:$0xf]
    %v1816 = vld [vmem:[#allocation4 + $0x204] sm:$0xf]
    %v1817 = vld [vmem:[#allocation4 + $0x208] sm:$0xf]
    %v1818 = vld [vmem:[#allocation4 + $0x20c] sm:$0xf]
    %v1819 = vld [vmem:[#allocation4 + $0x210] sm:$0xf]
    %v1820 = vld [vmem:[#allocation4 + $0x214] sm:$0xf]
    %v1821 = vld [vmem:[#allocation4 + $0x218] sm:$0xf]
    %v1822 = vld [vmem:[#allocation4 + $0x21c] sm:$0xf]
    %v1823 = vld [vmem:[#allocation4 + $0x220] sm:$0xf]
    %v1824 = vld [vmem:[#allocation4 + $0x224] sm:$0xf]
    %v1825 = vld [vmem:[#allocation4 + $0x228] sm:$0xf]
    %v1826 = vld [vmem:[#allocation4 + $0x22c] sm:$0xf]
    %v1827 = vld [vmem:[#allocation4 + $0x230] sm:$0xf]
    %v1828 = vld [vmem:[#allocation4 + $0x234] sm:$0xf]
    %v1829 = vld [vmem:[#allocation4 + $0x238] sm:$0xf]
    %v1830 = vld [vmem:[#allocation4 + $0x23c] sm:$0xf]
    %v1831 = vld [vmem:[%s5] sm:$0x1]
    %v1833 = vlaneseq
    %v1834 = vshrl.u32 %v1833, 7
    %v1835 = vsub.s32 0, %v1834
    %v1836 = vrot.slane %v1831, %v1835
    %v1982 = vunpack.c.l.b16 %v1687
    %v1983 = vunpack.c.l.b16 %v1688
    %v1984 = vunpack.c.l.b16 %v1689
    %v1985 = vunpack.c.l.b16 %v1690
    %v1986 = vunpack.c.l.b16 %v1691
    %v1987 = vunpack.c.l.b16 %v1692
    %v1988 = vunpack.c.l.b16 %v1693
    %v1989 = vunpack.c.l.b16 %v1694
    %v1990 = vunpack.c.l.b16 %v1695
    %v1991 = vunpack.c.l.b16 %v1696
    %v1992 = vunpack.c.l.b16 %v1697
    %v1993 = vunpack.c.l.b16 %v1698
    %v1994 = vunpack.c.l.b16 %v1699
    %v1995 = vunpack.c.l.b16 %v1700
    %v1996 = vunpack.c.l.b16 %v1701
    %v1997 = vunpack.c.l.b16 %v1702
    %v1998 = vunpack.c.l.b16 %v1703
    %v1999 = vunpack.c.l.b16 %v1704
    %v2000 = vunpack.c.l.b16 %v1705
    %v2001 = vunpack.c.l.b16 %v1706
    %v2002 = vunpack.c.l.b16 %v1707
    %v2003 = vunpack.c.l.b16 %v1708
    %v2004 = vunpack.c.l.b16 %v1709
    %v2005 = vunpack.c.l.b16 %v1710
    %v2006 = vunpack.c.l.b16 %v1711
    %v2007 = vunpack.c.l.b16 %v1712
    %v2008 = vunpack.c.l.b16 %v1713
    %v2009 = vunpack.c.l.b16 %v1714
    %v2010 = vunpack.c.l.b16 %v1715
    %v2011 = vunpack.c.l.b16 %v1716
    %v2012 = vunpack.c.l.b16 %v1717
    %v2013 = vunpack.c.l.b16 %v1718
    %v2014 = vunpack.c.l.b16 %v1719
    %v2015 = vunpack.c.l.b16 %v1720
    %v2016 = vunpack.c.l.b16 %v1721
    %v2017 = vunpack.c.l.b16 %v1722
    %v2018 = vunpack.c.l.b16 %v1723
    %v2019 = vunpack.c.l.b16 %v1724
    %v2020 = vunpack.c.l.b16 %v1725
    %v2021 = vunpack.c.l.b16 %v1726
    %v2022 = vunpack.c.l.b16 %v1727
    %v2023 = vunpack.c.l.b16 %v1728
    %v2024 = vunpack.c.l.b16 %v1729
    %v2025 = vunpack.c.l.b16 %v1730
    %v2026 = vunpack.c.l.b16 %v1731
    %v2027 = vunpack.c.l.b16 %v1732
    %v2028 = vunpack.c.l.b16 %v1733
    %v2029 = vunpack.c.l.b16 %v1734
    %v2030 = vunpack.c.l.b16 %v1735
    %v2031 = vunpack.c.l.b16 %v1736
    %v2032 = vunpack.c.l.b16 %v1737
    %v2033 = vunpack.c.l.b16 %v1738
    %v2034 = vunpack.c.l.b16 %v1739
    %v2035 = vunpack.c.l.b16 %v1740
    %v2036 = vunpack.c.l.b16 %v1741
    %v2037 = vunpack.c.l.b16 %v1742
    %v2038 = vunpack.c.l.b16 %v1743
    %v2039 = vunpack.c.l.b16 %v1744
    %v2040 = vunpack.c.l.b16 %v1745
    %v2041 = vunpack.c.l.b16 %v1746
    %v2042 = vunpack.c.l.b16 %v1747
    %v2043 = vunpack.c.l.b16 %v1748
    %v2044 = vunpack.c.l.b16 %v1749
    %v2045 = vunpack.c.l.b16 %v1750
    %v2046 = vunpack.c.l.b16 %v1751
    %v2047 = vunpack.c.l.b16 %v1752
    %v2048 = vunpack.c.l.b16 %v1753
    %v2049 = vunpack.c.l.b16 %v1754
    %v2050 = vunpack.c.l.b16 %v1755
    %v2051 = vunpack.c.l.b16 %v1756
    %v2052 = vunpack.c.l.b16 %v1757
    %v2053 = vunpack.c.l.b16 %v1758
    %v2054 = vunpack.c.l.b16 %v1759
    %v2055 = vunpack.c.l.b16 %v1760
    %v2056 = vunpack.c.l.b16 %v1761
    %v2057 = vunpack.c.l.b16 %v1762
    %v2058 = vunpack.c.l.b16 %v1763
    %v2059 = vunpack.c.l.b16 %v1764
    %v2060 = vunpack.c.l.b16 %v1765
    %v2061 = vunpack.c.l.b16 %v1766
    %v2062 = vunpack.c.l.b16 %v1767
    %v2063 = vunpack.c.l.b16 %v1768
    %v2064 = vunpack.c.l.b16 %v1769
    %v2065 = vunpack.c.l.b16 %v1770
    %v2066 = vunpack.c.l.b16 %v1771
    %v2067 = vunpack.c.l.b16 %v1772
    %v2068 = vunpack.c.l.b16 %v1773
    %v2069 = vunpack.c.l.b16 %v1774
    %v2070 = vunpack.c.l.b16 %v1775
    %v2071 = vunpack.c.l.b16 %v1776
    %v2072 = vunpack.c.l.b16 %v1777
    %v2073 = vunpack.c.l.b16 %v1778
    %v2074 = vunpack.c.l.b16 %v1779
    %v2075 = vunpack.c.l.b16 %v1780
    %v2076 = vunpack.c.l.b16 %v1781
    %v2077 = vunpack.c.l.b16 %v1782
    %v2078 = vunpack.c.l.b16 %v1783
    %v2079 = vunpack.c.l.b16 %v1784
    %v2080 = vunpack.c.l.b16 %v1785
    %v2081 = vunpack.c.l.b16 %v1786
    %v2082 = vunpack.c.l.b16 %v1787
    %v2083 = vunpack.c.l.b16 %v1788
    %v2084 = vunpack.c.l.b16 %v1789
    %v2085 = vunpack.c.l.b16 %v1790
    %v2086 = vunpack.c.l.b16 %v1791
    %v2087 = vunpack.c.l.b16 %v1792
    %v2088 = vunpack.c.l.b16 %v1793
    %v2089 = vunpack.c.l.b16 %v1794
    %v2090 = vunpack.c.l.b16 %v1795
    %v2091 = vunpack.c.l.b16 %v1796
    %v2092 = vunpack.c.l.b16 %v1797
    %v2093 = vunpack.c.l.b16 %v1798
    %v2094 = vunpack.c.l.b16 %v1799
    %v2095 = vunpack.c.l.b16 %v1800
    %v2096 = vunpack.c.l.b16 %v1801
    %v2097 = vunpack.c.l.b16 %v1802
    %v2098 = vunpack.c.l.b16 %v1803
    %v2099 = vunpack.c.l.b16 %v1804
    %v2100 = vunpack.c.l.b16 %v1805
    %v2101 = vunpack.c.l.b16 %v1806
    %v2102 = vunpack.c.l.b16 %v1807
    %v2103 = vunpack.c.l.b16 %v1808
    %v2104 = vunpack.c.l.b16 %v1809
    %v2105 = vunpack.c.l.b16 %v1810
    %v2106 = vunpack.c.l.b16 %v1811
    %v2107 = vunpack.c.l.b16 %v1812
    %v2108 = vunpack.c.l.b16 %v1813
    %v2109 = vunpack.c.l.b16 %v1814
    %v2110 = vunpack.c.l.b16 %v1815
    %v2111 = vunpack.c.l.b16 %v1816
    %v2112 = vunpack.c.l.b16 %v1817
    %v2113 = vunpack.c.l.b16 %v1818
    %v2114 = vunpack.c.l.b16 %v1819
    %v2115 = vunpack.c.l.b16 %v1820
    %v2116 = vunpack.c.l.b16 %v1821
    %v2117 = vunpack.c.l.b16 %v1822
    %v2118 = vunpack.c.l.b16 %v1823
    %v2119 = vunpack.c.l.b16 %v1824
    %v2120 = vunpack.c.l.b16 %v1825
    %v2121 = vunpack.c.l.b16 %v1826
    %v2122 = vunpack.c.l.b16 %v1827
    %v2123 = vunpack.c.l.b16 %v1828
    %v2124 = vunpack.c.l.b16 %v1829
    %v2125 = vunpack.c.l.b16 %v1830
    %v2126 = vpack.c.b16 %v1983, %v1982
    %v2127 = vpack.c.b16 %v1985, %v1984
    %v2128 = vpack.c.b16 %v1987, %v1986
    %v2129 = vpack.c.b16 %v1989, %v1988
    %v2130 = vpack.c.b16 %v1991, %v1990
    %v2131 = vpack.c.b16 %v1993, %v1992
    %v2132 = vpack.c.b16 %v1995, %v1994
    %v2133 = vpack.c.b16 %v1997, %v1996
    %v2134 = vpack.c.b16 %v1999, %v1998
    %v2135 = vpack.c.b16 %v2001, %v2000
    %v2136 = vpack.c.b16 %v2003, %v2002
    %v2137 = vpack.c.b16 %v2005, %v2004
    %v2138 = vpack.c.b16 %v2007, %v2006
    %v2139 = vpack.c.b16 %v2009, %v2008
    %v2140 = vpack.c.b16 %v2011, %v2010
    %v2141 = vpack.c.b16 %v2013, %v2012
    %v2142 = vpack.c.b16 %v2015, %v2014
    %v2143 = vpack.c.b16 %v2017, %v2016
    %v2144 = vpack.c.b16 %v2019, %v2018
    %v2145 = vpack.c.b16 %v2021, %v2020
    %v2146 = vpack.c.b16 %v2023, %v2022
    %v2147 = vpack.c.b16 %v2025, %v2024
    %v2148 = vpack.c.b16 %v2027, %v2026
    %v2149 = vpack.c.b16 %v2029, %v2028
    %v2150 = vpack.c.b16 %v2031, %v2030
    %v2151 = vpack.c.b16 %v2033, %v2032
    %v2152 = vpack.c.b16 %v2035, %v2034
    %v2153 = vpack.c.b16 %v2037, %v2036
    %v2154 = vpack.c.b16 %v2039, %v2038
    %v2155 = vpack.c.b16 %v2041, %v2040
    %v2156 = vpack.c.b16 %v2043, %v2042
    %v2157 = vpack.c.b16 %v2045, %v2044
    %v2158 = vpack.c.b16 %v2047, %v2046
    %v2159 = vpack.c.b16 %v2049, %v2048
    %v2160 = vpack.c.b16 %v2051, %v2050
    %v2161 = vpack.c.b16 %v2053, %v2052
    %v2162 = vpack.c.b16 %v2055, %v2054
    %v2163 = vpack.c.b16 %v2057, %v2056
    %v2164 = vpack.c.b16 %v2059, %v2058
    %v2165 = vpack.c.b16 %v2061, %v2060
    %v2166 = vpack.c.b16 %v2063, %v2062
    %v2167 = vpack.c.b16 %v2065, %v2064
    %v2168 = vpack.c.b16 %v2067, %v2066
    %v2169 = vpack.c.b16 %v2069, %v2068
    %v2170 = vpack.c.b16 %v2071, %v2070
    %v2171 = vpack.c.b16 %v2073, %v2072
    %v2172 = vpack.c.b16 %v2075, %v2074
    %v2173 = vpack.c.b16 %v2077, %v2076
    %v2174 = vpack.c.b16 %v2079, %v2078
    %v2175 = vpack.c.b16 %v2081, %v2080
    %v2176 = vpack.c.b16 %v2083, %v2082
    %v2177 = vpack.c.b16 %v2085, %v2084
    %v2178 = vpack.c.b16 %v2087, %v2086
    %v2179 = vpack.c.b16 %v2089, %v2088
    %v2180 = vpack.c.b16 %v2091, %v2090
    %v2181 = vpack.c.b16 %v2093, %v2092
    %v2182 = vpack.c.b16 %v2095, %v2094
    %v2183 = vpack.c.b16 %v2097, %v2096
    %v2184 = vpack.c.b16 %v2099, %v2098
    %v2185 = vpack.c.b16 %v2101, %v2100
    %v2186 = vpack.c.b16 %v2103, %v2102
    %v2187 = vpack.c.b16 %v2105, %v2104
    %v2188 = vpack.c.b16 %v2107, %v2106
    %v2189 = vpack.c.b16 %v2109, %v2108
    %v2190 = vpack.c.b16 %v2111, %v2110
    %v2191 = vpack.c.b16 %v2113, %v2112
    %v2192 = vpack.c.b16 %v2115, %v2114
    %v2193 = vpack.c.b16 %v2117, %v2116
    %v2194 = vpack.c.b16 %v2119, %v2118
    %v2195 = vpack.c.b16 %v2121, %v2120
    %v2196 = vpack.c.b16 %v2123, %v2122
    %v2197 = vpack.c.b16 %v2125, %v2124
    %2270 = vmatprep.subr.bf16.mxu0 0
    %2271 = vmatpush1.bf16.msra.mxu0 %v2126
    %2272 = vmatprep.subr.bf16.mxu0 0
    %2273 = vmatpush1.bf16.msra.mxu0 %v2127
    %2274 = vmatprep.subr.bf16.mxu0 0
    %2275 = vmatpush1.bf16.msra.mxu0 %v2128
    %2276 = vmatprep.subr.bf16.mxu0 0
    %2277 = vmatpush1.bf16.msra.mxu0 %v2129
    %2278 = vmatprep.subr.bf16.mxu0 0
    %2279 = vmatpush1.bf16.msra.mxu0 %v2130
    %2280 = vmatprep.subr.bf16.mxu0 0
    %2281 = vmatpush1.bf16.msra.mxu0 %v2131
    %2282 = vmatprep.subr.bf16.mxu0 0
    %2283 = vmatpush1.bf16.msra.mxu0 %v2132
    %2284 = vmatprep.subr.bf16.mxu0 0
    %2285 = vmatpush1.bf16.msra.mxu0 %v2133
    %2286 = vmatprep.subr.bf16.mxu0 0
    %2287 = vmatpush1.bf16.msra.mxu0 %v2134
    %2288 = vmatprep.subr.bf16.mxu0 0
    %2289 = vmatpush1.bf16.msra.mxu0 %v2135
    %2290 = vmatprep.subr.bf16.mxu0 0
    %2291 = vmatpush1.bf16.msra.mxu0 %v2136
    %2292 = vmatprep.subr.bf16.mxu0 0
    %2293 = vmatpush1.bf16.msra.mxu0 %v2137
    %2294 = vmatprep.subr.bf16.mxu0 0
    %2295 = vmatpush1.bf16.msra.mxu0 %v2138
    %2296 = vmatprep.subr.bf16.mxu0 0
    %2297 = vmatpush1.bf16.msra.mxu0 %v2139
    %2298 = vmatprep.subr.bf16.mxu0 0
    %2299 = vmatpush1.bf16.msra.mxu0 %v2140
    %2300 = vmatprep.subr.bf16.mxu0 0
    %2301 = vmatpush1.bf16.msra.mxu0 %v2141
    %2302 = vmatprep.mubr.bf16.mxu0 %v1533
    %2303 = vmatmul.mubr.bf16.gmra.mrb[0].mxu0 %v1510
    %v2304 = vpop.f32.mrb[0].mxu0
    %v2305 = vadd.f32 %v1836, %v2304
    %v2306 = vpop.f32.mrb[0].mxu0
    %v2307 = vpop.f32.mrb[0].mxu0
    %v2308 = vadd.f32 %v1836, %v2307
    %v2309 = vpop.f32.mrb[0].mxu0
    %2310 = vmatprep.mubr.bf16.mxu0 %v1534
    %2311 = vmatmul.mubr.bf16.gmra.mrb[0].mxu0 %v1511
    %v2312 = vpop.f32.mrb[0].mxu0
    %v2313 = vadd.f32 %v1836, %v2312
    %v2314 = vpop.f32.mrb[0].mxu0
    %v2315 = vpop.f32.mrb[0].mxu0
    %v2316 = vadd.f32 %v1836, %v2315
    %v2317 = vpop.f32.mrb[0].mxu0
    %2318 = vmatprep.mubr.bf16.mxu0 %v1535
    %2319 = vmatmul.mubr.bf16.gmra.mrb[0].mxu0 %v1512
    %v2320 = vpop.f32.mrb[0].mxu0
    %v2321 = vadd.f32 %v1836, %v2320
    %v2322 = vpop.f32.mrb[0].mxu0
    %v2323 = vpop.f32.mrb[0].mxu0
    %v2324 = vadd.f32 %v1836, %v2323
    %v2325 = vpop.f32.mrb[0].mxu0
    %2326 = vmatprep.mubr.bf16.mxu0 %v1536
    %2327 = vmatmul.mubr.bf16.gmra.mrb[0].mxu0 %v1513
    %v2328 = vpop.f32.mrb[0].mxu0
    %v2329 = vadd.f32 %v1836, %v2328
    %v2330 = vpop.f32.mrb[0].mxu0
    %v2331 = vpop.f32.mrb[0].mxu0
    %v2332 = vadd.f32 %v1836, %v2331
    %v2333 = vpop.f32.mrb[0].mxu0
    %2334 = vmatprep.mubr.bf16.mxu0 %v1537
    %2335 = vmatmul.mubr.bf16.gmra.mrb[0].mxu0 %v1514
    %v2336 = vpop.f32.mrb[0].mxu0
    %v2337 = vadd.f32 %v1836, %v2336
    %v2338 = vpop.f32.mrb[0].mxu0
    %v2339 = vpop.f32.mrb[0].mxu0
    %v2340 = vadd.f32 %v1836, %v2339
    %v2341 = vpop.f32.mrb[0].mxu0
    %2342 = vmatprep.mubr.bf16.mxu0 %v1538
    %2343 = vmatmul.mubr.bf16.gmra.mrb[0].mxu0 %v1515
    %v2344 = vpop.f32.mrb[0].mxu0
    %v2345 = vadd.f32 %v1836, %v2344
    %v2346 = vpop.f32.mrb[0].mxu0
    %v2347 = vpop.f32.mrb[0].mxu0
    %v2348 = vadd.f32 %v1836, %v2347
    %v2349 = vpop.f32.mrb[0].mxu0
    %2350 = vmatprep.mubr.bf16.mxu0 %v1539
    %2351 = vmatmul.mubr.bf16.gmra.mrb[0].mxu0 %v1516
    %v2352 = vpop.f32.mrb[0].mxu0
    %v2353 = vadd.f32 %v1836, %v2352
    %v2354 = vpop.f32.mrb[0].mxu0
    %v2355 = vpop.f32.mrb[0].mxu0
    %v2356 = vadd.f32 %v1836, %v2355
    %v2357 = vpop.f32.mrb[0].mxu0
    %2358 = vmatprep.mubr.bf16.mxu0 %v1540
    %2359 = vmatmul.mubr.bf16.gmra.mrb[0].mxu0 %v1517
    %v2360 = vpop.f32.mrb[0].mxu0
    %v2361 = vadd.f32 %v1836, %v2360
    %v2362 = vpop.f32.mrb[0].mxu0
    %v2363 = vpop.f32.mrb[0].mxu0
    %v2364 = vpop.f32.mrb[0].mxu0
    %2365 = vdwg.mxu0
    %2366 = vmatprep.subr.bf16.mxu0 0
    %2367 = vmatpush1.bf16.msra.mxu0 %v2142
    %2368 = vmatprep.subr.bf16.mxu0 0
    %2369 = vmatpush1.bf16.msra.mxu0 %v2143
    %2370 = vmatprep.subr.bf16.mxu0 0
    %2371 = vmatpush1.bf16.msra.mxu0 %v2144
    %2372 = vmatprep.subr.bf16.mxu0 0
    %2373 = vmatpush1.bf16.msra.mxu0 %v2145
    %2374 = vmatprep.subr.bf16.mxu0 0
    %2375 = vmatpush1.bf16.msra.mxu0 %v2146
    %2376 = vmatprep.subr.bf16.mxu0 0
    %2377 = vmatpush1.bf16.msra.mxu0 %v2147
    %2378 = vmatprep.subr.bf16.mxu0 0
    %2379 = vmatpush1.bf16.msra.mxu0 %v2148
    %2380 = vmatprep.subr.bf16.mxu0 0
    %2381 = vmatpush1.bf16.msra.mxu0 %v2149
    %2382 = vmatprep.subr.bf16.mxu0 0
    %2383 = vmatpush1.bf16.msra.mxu0 %v2150
    %2384 = vmatprep.subr.bf16.mxu0 0
    %2385 = vmatpush1.bf16.msra.mxu0 %v2151
    %2386 = vmatprep.subr.bf16.mxu0 0
    %2387 = vmatpush1.bf16.msra.mxu0 %v2152
    %2388 = vmatprep.subr.bf16.mxu0 0
    %2389 = vmatpush1.bf16.msra.mxu0 %v2153
    %2390 = vmatprep.subr.bf16.mxu0 0
    %2391 = vmatpush1.bf16.msra.mxu0 %v2154
    %2392 = vmatprep.subr.bf16.mxu0 0
    %2393 = vmatpush1.bf16.msra.mxu0 %v2155
    %2394 = vmatprep.subr.bf16.mxu0 0
    %2395 = vmatpush1.bf16.msra.mxu0 %v2156
    %2396 = vmatprep.subr.bf16.mxu0 0
    %2397 = vmatpush1.bf16.msra.mxu0 %v2157
    %2398 = vmatprep.mubr.bf16.mxu0 %v1579
    %2399 = vmatmul.mubr.bf16.gmra.mrb[0].mxu0 %v1556
    %v2400 = vpop.f32.mrb[0].mxu0
    %v2401 = vadd.f32 %v2305, %v2400
    %v2402 = vpop.f32.mrb[0].mxu0
    %v2403 = vpop.f32.mrb[0].mxu0
    %v2404 = vadd.f32 %v2308, %v2403
    %v2405 = vpop.f32.mrb[0].mxu0
    %2406 = vmatprep.mubr.bf16.mxu0 %v1580
    %2407 = vmatmul.mubr.bf16.gmra.mrb[0].mxu0 %v1557
    %v2408 = vpop.f32.mrb[0].mxu0
    %v2409 = vadd.f32 %v2313, %v2408
    %v2410 = vpop.f32.mrb[0].mxu0
    %v2411 = vpop.f32.mrb[0].mxu0
    %v2412 = vadd.f32 %v2316, %v2411
    %v2413 = vpop.f32.mrb[0].mxu0
    %2414 = vmatprep.mubr.bf16.mxu0 %v1581
    %2415 = vmatmul.mubr.bf16.gmra.mrb[0].mxu0 %v1558
    %v2416 = vpop.f32.mrb[0].mxu0
    %v2417 = vadd.f32 %v2321, %v2416
    %v2418 = vpop.f32.mrb[0].mxu0
    %v2419 = vpop.f32.mrb[0].mxu0
    %v2420 = vadd.f32 %v2324, %v2419
    %v2421 = vpop.f32.mrb[0].mxu0
    %2422 = vmatprep.mubr.bf16.mxu0 %v1582
    %2423 = vmatmul.mubr.bf16.gmra.mrb[0].mxu0 %v1559
    %v2424 = vpop.f32.mrb[0].mxu0
    %v2425 = vadd.f32 %v2329, %v2424
    %v2426 = vpop.f32.mrb[0].mxu0
    %v2427 = vpop.f32.mrb[0].mxu0
    %v2428 = vadd.f32 %v2332, %v2427
    %v2429 = vpop.f32.mrb[0].mxu0
    %2430 = vmatprep.mubr.bf16.mxu0 %v1583
    %2431 = vmatmul.mubr.bf16.gmra.mrb[0].mxu0 %v1560
    %v2432 = vpop.f32.mrb[0].mxu0
    %v2433 = vadd.f32 %v2337, %v2432
    %v2434 = vpop.f32.mrb[0].mxu0
    %v2435 = vpop.f32.mrb[0].mxu0
    %v2436 = vadd.f32 %v2340, %v2435
    %v2437 = vpop.f32.mrb[0].mxu0
    %2438 = vmatprep.mubr.bf16.mxu0 %v1584
    %2439 = vmatmul.mubr.bf16.gmra.mrb[0].mxu0 %v1561
    %v2440 = vpop.f32.mrb[0].mxu0
    %v2441 = vadd.f32 %v2345, %v2440
    %v2442 = vpop.f32.mrb[0].mxu0
    %v2443 = vpop.f32.mrb[0].mxu0
    %v2444 = vadd.f32 %v2348, %v2443
    %v2445 = vpop.f32.mrb[0].mxu0
    %2446 = vmatprep.mubr.bf16.mxu0 %v1585
    %2447 = vmatmul.mubr.bf16.gmra.mrb[0].mxu0 %v1562
    %v2448 = vpop.f32.mrb[0].mxu0
    %v2449 = vadd.f32 %v2353, %v2448
    %v2450 = vpop.f32.mrb[0].mxu0
    %v2451 = vpop.f32.mrb[0].mxu0
    %v2452 = vadd.f32 %v2356, %v2451
    %v2453 = vpop.f32.mrb[0].mxu0
    %2454 = vmatprep.mubr.bf16.mxu0 %v1586
    %2455 = vmatmul.mubr.bf16.gmra.mrb[0].mxu0 %v1563
    %v2456 = vpop.f32.mrb[0].mxu0
    %v2457 = vadd.f32 %v2361, %v2456
    %v2458 = vpop.f32.mrb[0].mxu0
    %v2459 = vpop.f32.mrb[0].mxu0
    %v2460 = vpop.f32.mrb[0].mxu0
    %2461 = vdwg.mxu0
    %2462 = vmatprep.subr.bf16.mxu0 0
    %2463 = vmatpush1.bf16.msra.mxu0 %v2158
    %2464 = vmatprep.subr.bf16.mxu0 0
    %2465 = vmatpush1.bf16.msra.mxu0 %v2159
    %2466 = vmatprep.subr.bf16.mxu0 0
    %2467 = vmatpush1.bf16.msra.mxu0 %v2160
    %2468 = vmatprep.subr.bf16.mxu0 0
    %2469 = vmatpush1.bf16.msra.mxu0 %v2161
    %2470 = vmatprep.subr.bf16.mxu0 0
    %2471 = vmatpush1.bf16.msra.mxu0 %v2162
    %2472 = vmatprep.subr.bf16.mxu0 0
    %2473 = vmatpush1.bf16.msra.mxu0 %v2163
    %2474 = vmatprep.subr.bf16.mxu0 0
    %2475 = vmatpush1.bf16.msra.mxu0 %v2164
    %2476 = vmatprep.subr.bf16.mxu0 0
    %2477 = vmatpush1.bf16.msra.mxu0 %v2165
    %2478 = vmatprep.subr.bf16.mxu0 0
    %2479 = vmatpush1.bf16.msra.mxu0 %v2166
    %2480 = vmatprep.subr.bf16.mxu0 0
    %2481 = vmatpush1.bf16.msra.mxu0 %v2167
    %2482 = vmatprep.subr.bf16.mxu0 0
    %2483 = vmatpush1.bf16.msra.mxu0 %v2168
    %2484 = vmatprep.subr.bf16.mxu0 0
    %2485 = vmatpush1.bf16.msra.mxu0 %v2169
    %2486 = vmatprep.subr.bf16.mxu0 0
    %2487 = vmatpush1.bf16.msra.mxu0 %v2170
    %2488 = vmatprep.subr.bf16.mxu0 0
    %2489 = vmatpush1.bf16.msra.mxu0 %v2171
    %2490 = vmatprep.subr.bf16.mxu0 0
    %2491 = vmatpush1.bf16.msra.mxu0 %v2172
    %2492 = vmatprep.subr.bf16.mxu0 0
    %2493 = vmatpush1.bf16.msra.mxu0 %v2173
    %2494 = vmatprep.mubr.bf16.mxu0 %v1610
    %2495 = vmatmul.mubr.bf16.gmra.mrb[0].mxu0 %v1587
    %v2496 = vpop.f32.mrb[0].mxu0
    %v2497 = vadd.f32 %v2401, %v2496
    %v2498 = vpop.f32.mrb[0].mxu0
    %v2499 = vpop.f32.mrb[0].mxu0
    %v2500 = vadd.f32 %v2404, %v2499
    %v2501 = vpop.f32.mrb[0].mxu0
    %2502 = vmatprep.mubr.bf16.mxu0 %v1611
    %2503 = vmatmul.mubr.bf16.gmra.mrb[0].mxu0 %v1588
    %v2504 = vpop.f32.mrb[0].mxu0
    %v2505 = vadd.f32 %v2409, %v2504
    %v2506 = vpop.f32.mrb[0].mxu0
    %v2507 = vpop.f32.mrb[0].mxu0
    %v2508 = vadd.f32 %v2412, %v2507
    %v2509 = vpop.f32.mrb[0].mxu0
    %2510 = vmatprep.mubr.bf16.mxu0 %v1612
    %2511 = vmatmul.mubr.bf16.gmra.mrb[0].mxu0 %v1589
    %v2512 = vpop.f32.mrb[0].mxu0
    %v2513 = vadd.f32 %v2417, %v2512
    %v2514 = vpop.f32.mrb[0].mxu0
    %v2515 = vpop.f32.mrb[0].mxu0
    %v2516 = vadd.f32 %v2420, %v2515
    %v2517 = vpop.f32.mrb[0].mxu0
    %2518 = vmatprep.mubr.bf16.mxu0 %v1613
    %2519 = vmatmul.mubr.bf16.gmra.mrb[0].mxu0 %v1590
    %v2520 = vpop.f32.mrb[0].mxu0
    %v2521 = vadd.f32 %v2425, %v2520
    %v2522 = vpop.f32.mrb[0].mxu0
    %v2523 = vpop.f32.mrb[0].mxu0
    %v2524 = vadd.f32 %v2428, %v2523
    %v2525 = vpop.f32.mrb[0].mxu0
    %2526 = vmatprep.mubr.bf16.mxu0 %v1614
    %2527 = vmatmul.mubr.bf16.gmra.mrb[0].mxu0 %v1591
    %v2528 = vpop.f32.mrb[0].mxu0
    %v2529 = vadd.f32 %v2433, %v2528
    %v2530 = vpop.f32.mrb[0].mxu0
    %v2531 = vpop.f32.mrb[0].mxu0
    %v2532 = vadd.f32 %v2436, %v2531
    %v2533 = vpop.f32.mrb[0].mxu0
    %2534 = vmatprep.mubr.bf16.mxu0 %v1615
    %2535 = vmatmul.mubr.bf16.gmra.mrb[0].mxu0 %v1592
    %v2536 = vpop.f32.mrb[0].mxu0
    %v2537 = vadd.f32 %v2441, %v2536
    %v2538 = vpop.f32.mrb[0].mxu0
    %v2539 = vpop.f32.mrb[0].mxu0
    %v2540 = vadd.f32 %v2444, %v2539
    %v2541 = vpop.f32.mrb[0].mxu0
    %2542 = vmatprep.mubr.bf16.mxu0 %v1616
    %2543 = vmatmul.mubr.bf16.gmra.mrb[0].mxu0 %v1593
    %v2544 = vpop.f32.mrb[0].mxu0
    %v2545 = vadd.f32 %v2449, %v2544
    %v2546 = vpop.f32.mrb[0].mxu0
    %v2547 = vpop.f32.mrb[0].mxu0
    %v2548 = vadd.f32 %v2452, %v2547
    %v2549 = vpop.f32.mrb[0].mxu0
    %2550 = vmatprep.mubr.bf16.mxu0 %v1617
    %2551 = vmatmul.mubr.bf16.gmra.mrb[0].mxu0 %v1594
    %v2552 = vpop.f32.mrb[0].mxu0
    %v2553 = vadd.f32 %v2457, %v2552
    %v2554 = vpop.f32.mrb[0].mxu0
    %v2555 = vpop.f32.mrb[0].mxu0
    %v2556 = vpop.f32.mrb[0].mxu0
    %2557 = vdwg.mxu0
    %2558 = vmatprep.subr.bf16.mxu0 0
    %2559 = vmatpush1.bf16.msra.mxu0 %v2174
    %2560 = vmatprep.subr.bf16.mxu0 0
    %2561 = vmatpush1.bf16.msra.mxu0 %v2175
    %2562 = vmatprep.subr.bf16.mxu0 0
    %2563 = vmatpush1.bf16.msra.mxu0 %v2176
    %2564 = vmatprep.subr.bf16.mxu0 0
    %2565 = vmatpush1.bf16.msra.mxu0 %v2177
    %2566 = vmatprep.subr.bf16.mxu0 0
    %2567 = vmatpush1.bf16.msra.mxu0 %v2178
    %2568 = vmatprep.subr.bf16.mxu0 0
    %2569 = vmatpush1.bf16.msra.mxu0 %v2179
    %2570 = vmatprep.subr.bf16.mxu0 0
    %2571 = vmatpush1.bf16.msra.mxu0 %v2180
    %2572 = vmatprep.subr.bf16.mxu0 0
    %2573 = vmatpush1.bf16.msra.mxu0 %v2181
    %2574 = vmatprep.subr.bf16.mxu0 0
    %2575 = vmatpush1.bf16.msra.mxu0 %v2182
    %2576 = vmatprep.subr.bf16.mxu0 0
    %2577 = vmatpush1.bf16.msra.mxu0 %v2183
    %2578 = vmatprep.subr.bf16.mxu0 0
    %2579 = vmatpush1.bf16.msra.mxu0 %v2184
    %2580 = vmatprep.subr.bf16.mxu0 0
    %2581 = vmatpush1.bf16.msra.mxu0 %v2185
    %2582 = vmatprep.subr.bf16.mxu0 0
    %2583 = vmatpush1.bf16.msra.mxu0 %v2186
    %2584 = vmatprep.subr.bf16.mxu0 0
    %2585 = vmatpush1.bf16.msra.mxu0 %v2187
    %2586 = vmatprep.subr.bf16.mxu0 0
    %2587 = vmatpush1.bf16.msra.mxu0 %v2188
    %2588 = vmatprep.subr.bf16.mxu0 0
    %2589 = vmatpush1.bf16.msra.mxu0 %v2189
    %2590 = vmatprep.mubr.bf16.mxu0 %v1656
    %2591 = vmatmul.mubr.bf16.gmra.mrb[0].mxu0 %v1633
    %v2592 = vpop.f32.mrb[0].mxu0
    %v2593 = vadd.f32 %v2497, %v2592
    %v2594 = vpop.f32.mrb[0].mxu0
    %v2595 = vpop.f32.mrb[0].mxu0
    %v2596 = vadd.f32 %v2500, %v2595
    %v2597 = vpop.f32.mrb[0].mxu0
    %2598 = vmatprep.mubr.bf16.mxu0 %v1657
    %2599 = vmatmul.mubr.bf16.gmra.mrb[0].mxu0 %v1634
    %v2600 = vpop.f32.mrb[0].mxu0
    %v2601 = vadd.f32 %v2505, %v2600
    %v2602 = vpop.f32.mrb[0].mxu0
    %v2603 = vpop.f32.mrb[0].mxu0
    %v2604 = vadd.f32 %v2508, %v2603
    %v2605 = vpop.f32.mrb[0].mxu0
    %2606 = vmatprep.mubr.bf16.mxu0 %v1658
    %2607 = vmatmul.mubr.bf16.gmra.mrb[0].mxu0 %v1635
    %v2608 = vpop.f32.mrb[0].mxu0
    %v2609 = vadd.f32 %v2513, %v2608
    %v2610 = vpop.f32.mrb[0].mxu0
    %v2611 = vpop.f32.mrb[0].mxu0
    %v2612 = vadd.f32 %v2516, %v2611
    %v2613 = vpop.f32.mrb[0].mxu0
    %2614 = vmatprep.mubr.bf16.mxu0 %v1659
    %2615 = vmatmul.mubr.bf16.gmra.mrb[0].mxu0 %v1636
    %v2616 = vpop.f32.mrb[0].mxu0
    %v2617 = vadd.f32 %v2521, %v2616
    %v2618 = vpop.f32.mrb[0].mxu0
    %v2619 = vpop.f32.mrb[0].mxu0
    %v2620 = vadd.f32 %v2524, %v2619
    %v2621 = vpop.f32.mrb[0].mxu0
    %2622 = vmatprep.mubr.bf16.mxu0 %v1660
    %2623 = vmatmul.mubr.bf16.gmra.mrb[0].mxu0 %v1637
    %v2624 = vpop.f32.mrb[0].mxu0
    %v2625 = vadd.f32 %v2529, %v2624
    %v2626 = vpop.f32.mrb[0].mxu0
    %v2627 = vpop.f32.mrb[0].mxu0
    %v2628 = vadd.f32 %v2532, %v2627
    %v2629 = vpop.f32.mrb[0].mxu0
    %2630 = vmatprep.mubr.bf16.mxu0 %v1661
    %2631 = vmatmul.mubr.bf16.gmra.mrb[0].mxu0 %v1638
    %v2632 = vpop.f32.mrb[0].mxu0
    %v2633 = vadd.f32 %v2537, %v2632
    %v2634 = vpop.f32.mrb[0].mxu0
    %v2635 = vpop.f32.mrb[0].mxu0
    %v2636 = vadd.f32 %v2540, %v2635
    %v2637 = vpop.f32.mrb[0].mxu0
    %2638 = vmatprep.mubr.bf16.mxu0 %v1662
    %2639 = vmatmul.mubr.bf16.gmra.mrb[0].mxu0 %v1639
    %v2640 = vpop.f32.mrb[0].mxu0
    %v2641 = vadd.f32 %v2545, %v2640
    %v2642 = vpop.f32.mrb[0].mxu0
    %v2643 = vpop.f32.mrb[0].mxu0
    %v2644 = vadd.f32 %v2548, %v2643
    %v2645 = vpop.f32.mrb[0].mxu0
    %2646 = vmatprep.mubr.bf16.mxu0 %v1663
    %2647 = vmatmul.mubr.bf16.gmra.mrb[0].mxu0 %v1640
    %v2648 = vpop.f32.mrb[0].mxu0
    %v2649 = vadd.f32 %v2553, %v2648
    %v2650 = vpop.f32.mrb[0].mxu0
    %v2651 = vpop.f32.mrb[0].mxu0
    %v2652 = vpop.f32.mrb[0].mxu0
    %2653 = vdwg.mxu0
    %2654 = vmatprep.subr.bf16.mxu0 0
    %2655 = vmatpush1.bf16.msra.mxu0 %v2190
    %2656 = vmatprep.subr.bf16.mxu0 0
    %2657 = vmatpush1.bf16.msra.mxu0 %v2191
    %2658 = vmatprep.subr.bf16.mxu0 0
    %2659 = vmatpush1.bf16.msra.mxu0 %v2192
    %2660 = vmatprep.subr.bf16.mxu0 0
    %2661 = vmatpush1.bf16.msra.mxu0 %v2193
    %2662 = vmatprep.subr.bf16.mxu0 0
    %2663 = vmatpush1.bf16.msra.mxu0 %v2194
    %2664 = vmatprep.subr.bf16.mxu0 0
    %2665 = vmatpush1.bf16.msra.mxu0 %v2195
    %2666 = vmatprep.subr.bf16.mxu0 0
    %2667 = vmatpush1.bf16.msra.mxu0 %v2196
    %2668 = vmatprep.subr.bf16.mxu0 0
    %2669 = vmatpush1.bf16.msra.mxu0 %v2197
    %2670 = vmatprep.subr.bf16.mxu0 0
    %2671 = vmatpush1.bf16.msra.mxu0 0
    %2672 = vmatprep.subr.bf16.mxu0 0
    %2673 = vmatpush1.bf16.msra.mxu0 0
    %2674 = vmatprep.subr.bf16.mxu0 0
    %2675 = vmatpush1.bf16.msra.mxu0 0
    %2676 = vmatprep.subr.bf16.mxu0 0
    %2677 = vmatpush1.bf16.msra.mxu0 0
    %2678 = vmatprep.subr.bf16.mxu0 0
    %2679 = vmatpush1.bf16.msra.mxu0 0
    %2680 = vmatprep.subr.bf16.mxu0 0
    %2681 = vmatpush1.bf16.msra.mxu0 0
    %2682 = vmatprep.subr.bf16.mxu0 0
    %2683 = vmatpush1.bf16.msra.mxu0 0
    %2684 = vmatprep.subr.bf16.mxu0 0
    %2685 = vmatpush1.bf16.msra.mxu0 0
    %2686 = vmatprep.mubr.bf16.mxu0 0
    %2687 = vmatmul.mubr.bf16.gmra.mrb[0].mxu0 %v1679
    %v2688 = vpop.f32.mrb[0].mxu0
    %v2689 = vadd.f32 %v2593, %v2688
    %v2690 = vpop.f32.mrb[0].mxu0
    %v2691 = vpop.f32.mrb[0].mxu0
    %v2692 = vadd.f32 %v2596, %v2691
    %v2693 = vpop.f32.mrb[0].mxu0
    %2694 = vmatprep.mubr.bf16.mxu0 0
    %2695 = vmatmul.mubr.bf16.gmra.mrb[0].mxu0 %v1680
    %v2696 = vpop.f32.mrb[0].mxu0
    %v2697 = vadd.f32 %v2601, %v2696
    %v2698 = vpop.f32.mrb[0].mxu0
    %v2699 = vpop.f32.mrb[0].mxu0
    %v2700 = vadd.f32 %v2604, %v2699
    %v2701 = vpop.f32.mrb[0].mxu0
    %2702 = vmatprep.mubr.bf16.mxu0 0
    %2703 = vmatmul.mubr.bf16.gmra.mrb[0].mxu0 %v1681
    %v2704 = vpop.f32.mrb[0].mxu0
    %v2705 = vadd.f32 %v2609, %v2704
    %v2706 = vpop.f32.mrb[0].mxu0
    %v2707 = vpop.f32.mrb[0].mxu0
    %v2708 = vadd.f32 %v2612, %v2707
    %v2709 = vpop.f32.mrb[0].mxu0
    %2710 = vmatprep.mubr.bf16.mxu0 0
    %2711 = vmatmul.mubr.bf16.gmra.mrb[0].mxu0 %v1682
    %v2712 = vpop.f32.mrb[0].mxu0
    %v2713 = vadd.f32 %v2617, %v2712
    %v2714 = vpop.f32.mrb[0].mxu0
    %v2715 = vpop.f32.mrb[0].mxu0
    %v2716 = vadd.f32 %v2620, %v2715
    %v2717 = vpop.f32.mrb[0].mxu0
    %2718 = vmatprep.mubr.bf16.mxu0 0
    %2719 = vmatmul.mubr.bf16.gmra.mrb[0].mxu0 %v1683
    %v2720 = vpop.f32.mrb[0].mxu0
    %v2721 = vadd.f32 %v2625, %v2720
    %v2722 = vpop.f32.mrb[0].mxu0
    %v2723 = vpop.f32.mrb[0].mxu0
    %v2724 = vadd.f32 %v2628, %v2723
    %v2725 = vpop.f32.mrb[0].mxu0
    %2726 = vmatprep.mubr.bf16.mxu0 0
    %2727 = vmatmul.mubr.bf16.gmra.mrb[0].mxu0 %v1684
    %v2728 = vpop.f32.mrb[0].mxu0
    %v2729 = vadd.f32 %v2633, %v2728
    %v2730 = vpop.f32.mrb[0].mxu0
    %v2731 = vpop.f32.mrb[0].mxu0
    %v2732 = vadd.f32 %v2636, %v2731
    %v2733 = vpop.f32.mrb[0].mxu0
    %2734 = vmatprep.mubr.bf16.mxu0 0
    %2735 = vmatmul.mubr.bf16.gmra.mrb[0].mxu0 %v1685
    %v2736 = vpop.f32.mrb[0].mxu0
    %v2737 = vadd.f32 %v2641, %v2736
    %v2738 = vpop.f32.mrb[0].mxu0
    %v2739 = vpop.f32.mrb[0].mxu0
    %v2740 = vadd.f32 %v2644, %v2739
    %v2741 = vpop.f32.mrb[0].mxu0
    %2742 = vmatprep.mubr.bf16.mxu0 0
    %2743 = vmatmul.mubr.bf16.gmra.mrb[0].mxu0 %v1686
    %v2744 = vpop.f32.mrb[0].mxu0
    %v2745 = vadd.f32 %v2649, %v2744
    %v2746 = vpop.f32.mrb[0].mxu0
    %v2747 = vpop.f32.mrb[0].mxu0
    %v2748 = vpop.f32.mrb[0].mxu0
    %2749 = vdwg.mxu0
    %v2750 = vmax.f32 %v2689, 0.0
    %v2751 = vmax.f32 %v2692, 0.0
    %v2752 = vmax.f32 %v2697, 0.0
    %v2753 = vmax.f32 %v2700, 0.0
    %v2754 = vmax.f32 %v2705, 0.0
    %v2755 = vmax.f32 %v2708, 0.0
    %v2756 = vmax.f32 %v2713, 0.0
    %v2757 = vmax.f32 %v2716, 0.0
    %v2758 = vmax.f32 %v2721, 0.0
    %v2759 = vmax.f32 %v2724, 0.0
    %v2760 = vmax.f32 %v2729, 0.0
    %v2761 = vmax.f32 %v2732, 0.0
    %v2762 = vmax.f32 %v2737, 0.0
    %v2763 = vmax.f32 %v2740, 0.0
    %v2764 = vmax.f32 %v2745, 0.0
    %v2765 = vmul.f32 %v2761, %v98
    %v2766 = vmul.f32 %v2762, %v99
    %v2767 = vmul.f32 %v2763, %v100
    %v2768 = vmul.f32 %v2764, %v101
    %v2769 = vmul.f32 %v2750, %v102
    %v2770 = vmul.f32 %v2751, %v103
    %v2771 = vmul.f32 %v2752, %v104
    %v2772 = vmul.f32 %v2753, %v105
    %v2773 = vmul.f32 %v2754, %v106
    %v2774 = vmul.f32 %v2755, %v107
    %v2775 = vmul.f32 %v2756, %v108
    %v2776 = vmul.f32 %v2757, %v109
    %v2777 = vmul.f32 %v2758, %v110
    %v2778 = vmul.f32 %v2759, %v111
    %v2779 = vmul.f32 %v2760, %v112
    %v2780 = vpack.c.bf16 %v2766, %v2765
    %v2781 = vpack.c.bf16 %v2768, %v2767
    %v2782 = vpack.c.bf16 %v2770, %v2769
    %v2783 = vpack.c.bf16 %v2772, %v2771
    %v2784 = vpack.c.bf16 %v2774, %v2773
    %v2785 = vpack.c.bf16 %v2776, %v2775
    %v2786 = vpack.c.bf16 %v2778, %v2777
    %v2787 = vpack.c.bf16 %v2779, %v2779
    %v2788 = vmul.f32 %v2762, %v137
    %v2789 = vmul.f32 %v2763, %v138
    %v2790 = vmul.f32 %v2764, %v139
    %v2791 = vmul.f32 %v2750, %v140
    %v2792 = vmul.f32 %v2751, %v141
    %v2793 = vmul.f32 %v2752, %v142
    %v2794 = vmul.f32 %v2753, %v143
    %v2795 = vmul.f32 %v2754, %v144
    %v2796 = vmul.f32 %v2755, %v145
    %v2797 = vmul.f32 %v2756, %v146
    %v2798 = vmul.f32 %v2757, %v147
    %v2799 = vmul.f32 %v2758, %v148
    %v2800 = vmul.f32 %v2759, %v149
    %v2801 = vmul.f32 %v2760, %v150
    %v2802 = vmul.f32 %v2761, %v151
    %v2803 = vpack.c.bf16 %v2789, %v2788
    %v2804 = vpack.c.bf16 %v2791, %v2790
    %v2805 = vpack.c.bf16 %v2793, %v2792
    %v2806 = vpack.c.bf16 %v2795, %v2794
    %v2807 = vpack.c.bf16 %v2797, %v2796
    %v2808 = vpack.c.bf16 %v2799, %v2798
    %v2809 = vpack.c.bf16 %v2801, %v2800
    %v2810 = vpack.c.bf16 %v2802, %v2802
    %v2811 = vmul.f32 %v2763, %v176
    %v2812 = vmul.f32 %v2764, %v177
    %v2813 = vmul.f32 %v2750, %v178
    %v2814 = vmul.f32 %v2751, %v179
    %v2815 = vmul.f32 %v2752, %v180
    %v2816 = vmul.f32 %v2753, %v181
    %v2817 = vmul.f32 %v2754, %v182
    %v2818 = vmul.f32 %v2755, %v183
    %v2819 = vmul.f32 %v2756, %v184
    %v2820 = vmul.f32 %v2757, %v185
    %v2821 = vmul.f32 %v2758, %v186
    %v2822 = vmul.f32 %v2759, %v187
    %v2823 = vmul.f32 %v2760, %v188
    %v2824 = vmul.f32 %v2761, %v189
    %v2825 = vmul.f32 %v2762, %v190
    %v2826 = vpack.c.bf16 %v2812, %v2811
    %v2827 = vpack.c.bf16 %v2814, %v2813
    %v2828 = vpack.c.bf16 %v2816, %v2815
    %v2829 = vpack.c.bf16 %v2818, %v2817
    %v2830 = vpack.c.bf16 %v2820, %v2819
    %v2831 = vpack.c.bf16 %v2822, %v2821
    %v2832 = vpack.c.bf16 %v2824, %v2823
    %v2833 = vpack.c.bf16 %v2825, %v2825
    %v2834 = vmul.f32 %v2764, %v215
    %v2835 = vmul.f32 %v2750, %v216
    %v2836 = vmul.f32 %v2751, %v217
    %v2837 = vmul.f32 %v2752, %v218
    %v2838 = vmul.f32 %v2753, %v219
    %v2839 = vmul.f32 %v2754, %v220
    %v2840 = vmul.f32 %v2755, %v221
    %v2841 = vmul.f32 %v2756, %v222
    %v2842 = vmul.f32 %v2757, %v223
    %v2843 = vmul.f32 %v2758, %v224
    %v2844 = vmul.f32 %v2759, %v225
    %v2845 = vmul.f32 %v2760, %v226
    %v2846 = vmul.f32 %v2761, %v227
    %v2847 = vmul.f32 %v2762, %v228
    %v2848 = vmul.f32 %v2763, %v229
    %v2849 = vpack.c.bf16 %v2835, %v2834
    %v2850 = vpack.c.bf16 %v2837, %v2836
    %v2851 = vpack.c.bf16 %v2839, %v2838
    %v2852 = vpack.c.bf16 %v2841, %v2840
    %v2853 = vpack.c.bf16 %v2843, %v2842
    %v2854 = vpack.c.bf16 %v2845, %v2844
    %v2855 = vpack.c.bf16 %v2847, %v2846
    %v2856 = vpack.c.bf16 %v2848, %v2848
    %v2857 = vpack.c.bf16 %v2751, %v2750
    %v2858 = vpack.c.bf16 %v2753, %v2752
    %v2859 = vpack.c.bf16 %v2755, %v2754
    %v2860 = vpack.c.bf16 %v2757, %v2756
    %v2861 = vpack.c.bf16 %v2759, %v2758
    %v2862 = vpack.c.bf16 %v2761, %v2760
    %v2863 = vpack.c.bf16 %v2763, %v2762
    %v2864 = vpack.c.bf16 %v2764, %v2764
    %v2865 = vmul.f32 %v2751, %v262
    %v2866 = vmul.f32 %v2752, %v263
    %v2867 = vmul.f32 %v2753, %v264
    %v2868 = vmul.f32 %v2754, %v265
    %v2869 = vmul.f32 %v2755, %v266
    %v2870 = vmul.f32 %v2756, %v267
    %v2871 = vmul.f32 %v2757, %v268
    %v2872 = vmul.f32 %v2758, %v269
    %v2873 = vmul.f32 %v2759, %v270
    %v2874 = vmul.f32 %v2760, %v271
    %v2875 = vmul.f32 %v2761, %v272
    %v2876 = vmul.f32 %v2762, %v273
    %v2877 = vmul.f32 %v2763, %v274
    %v2878 = vmul.f32 %v2764, %v275
    %v2879 = vmul.f32 %v2750, %v276
    %v2880 = vpack.c.bf16 %v2866, %v2865
    %v2881 = vpack.c.bf16 %v2868, %v2867
    %v2882 = vpack.c.bf16 %v2870, %v2869
    %v2883 = vpack.c.bf16 %v2872, %v2871
    %v2884 = vpack.c.bf16 %v2874, %v2873
    %v2885 = vpack.c.bf16 %v2876, %v2875
    %v2886 = vpack.c.bf16 %v2878, %v2877
    %v2887 = vpack.c.bf16 %v2879, %v2879
    %v2888 = vmul.f32 %v2752, %v301
    %v2889 = vmul.f32 %v2753, %v302
    %v2890 = vmul.f32 %v2754, %v303
    %v2891 = vmul.f32 %v2755, %v304
    %v2892 = vmul.f32 %v2756, %v305
    %v2893 = vmul.f32 %v2757, %v306
    %v2894 = vmul.f32 %v2758, %v307
    %v2895 = vmul.f32 %v2759, %v308
    %v2896 = vmul.f32 %v2760, %v309
    %v2897 = vmul.f32 %v2761, %v310
    %v2898 = vmul.f32 %v2762, %v311
    %v2899 = vmul.f32 %v2763, %v312
    %v2900 = vmul.f32 %v2764, %v313
    %v2901 = vmul.f32 %v2750, %v314
    %v2902 = vmul.f32 %v2751, %v315
    %v2903 = vpack.c.bf16 %v2889, %v2888
    %v2904 = vpack.c.bf16 %v2891, %v2890
    %v2905 = vpack.c.bf16 %v2893, %v2892
    %v2906 = vpack.c.bf16 %v2895, %v2894
    %v2907 = vpack.c.bf16 %v2897, %v2896
    %v2908 = vpack.c.bf16 %v2899, %v2898
    %v2909 = vpack.c.bf16 %v2901, %v2900
    %v2910 = vpack.c.bf16 %v2902, %v2902
    %v2911 = vmul.f32 %v2753, %v340
    %v2912 = vmul.f32 %v2754, %v341
    %v2913 = vmul.f32 %v2755, %v342
    %v2914 = vmul.f32 %v2756, %v343
    %v2915 = vmul.f32 %v2757, %v344
    %v2916 = vmul.f32 %v2758, %v345
    %v2917 = vmul.f32 %v2759, %v346
    %v2918 = vmul.f32 %v2760, %v347
    %v2919 = vmul.f32 %v2761, %v348
    %v2920 = vmul.f32 %v2762, %v349
    %v2921 = vmul.f32 %v2763, %v350
    %v2922 = vmul.f32 %v2764, %v351
    %v2923 = vmul.f32 %v2750, %v352
    %v2924 = vmul.f32 %v2751, %v353
    %v2925 = vmul.f32 %v2752, %v354
    %v2926 = vpack.c.bf16 %v2912, %v2911
    %v2927 = vpack.c.bf16 %v2914, %v2913
    %v2928 = vpack.c.bf16 %v2916, %v2915
    %v2929 = vpack.c.bf16 %v2918, %v2917
    %v2930 = vpack.c.bf16 %v2920, %v2919
    %v2931 = vpack.c.bf16 %v2922, %v2921
    %v2932 = vpack.c.bf16 %v2924, %v2923
    %v2933 = vpack.c.bf16 %v2925, %v2925
    %v2934 = vmul.f32 %v2754, %v379
    %v2935 = vmul.f32 %v2755, %v380
    %v2936 = vmul.f32 %v2756, %v381
    %v2937 = vmul.f32 %v2757, %v382
    %v2938 = vmul.f32 %v2758, %v383
    %v2939 = vmul.f32 %v2759, %v384
    %v2940 = vmul.f32 %v2760, %v385
    %v2941 = vmul.f32 %v2761, %v386
    %v2942 = vmul.f32 %v2762, %v387
    %v2943 = vmul.f32 %v2763, %v388
    %v2944 = vmul.f32 %v2764, %v389
    %v2945 = vmul.f32 %v2750, %v390
    %v2946 = vmul.f32 %v2751, %v391
    %v2947 = vmul.f32 %v2752, %v392
    %v2948 = vmul.f32 %v2753, %v393
    %v2949 = vpack.c.bf16 %v2935, %v2934
    %v2950 = vpack.c.bf16 %v2937, %v2936
    %v2951 = vpack.c.bf16 %v2939, %v2938
    %v2952 = vpack.c.bf16 %v2941, %v2940
    %v2953 = vpack.c.bf16 %v2943, %v2942
    %v2954 = vpack.c.bf16 %v2945, %v2944
    %v2955 = vpack.c.bf16 %v2947, %v2946
    %v2956 = vpack.c.bf16 %v2948, %v2948
    %v2957 = vld [vmem:[#allocation6] sm:$0xf]
    %v2958 = vld [vmem:[#allocation6 + $0x4] sm:$0xf]
    %v2959 = vld [vmem:[#allocation6 + $0x8] sm:$0xf]
    %v2960 = vld [vmem:[#allocation6 + $0xc] sm:$0xf]
    %v2961 = vld [vmem:[#allocation6 + $0x10] sm:$0xf]
    %v2962 = vld [vmem:[#allocation6 + $0x14] sm:$0xf]
    %v2963 = vld [vmem:[#allocation6 + $0x18] sm:$0xf]
    %v2964 = vld [vmem:[#allocation6 + $0x1c] sm:$0xf]
    %v2965 = vld [vmem:[#allocation6 + $0x20] sm:$0xf]
    %v2966 = vld [vmem:[#allocation6 + $0x24] sm:$0xf]
    %v2967 = vld [vmem:[#allocation6 + $0x28] sm:$0xf]
    %v2968 = vld [vmem:[#allocation6 + $0x2c] sm:$0xf]
    %v2969 = vld [vmem:[#allocation6 + $0x30] sm:$0xf]
    %v2970 = vld [vmem:[#allocation6 + $0x34] sm:$0xf]
    %v2971 = vld [vmem:[#allocation6 + $0x38] sm:$0xf]
    %v2972 = vld [vmem:[#allocation6 + $0x3c] sm:$0xf]
    %v2973 = vld [vmem:[#allocation6 + $0x40] sm:$0xf]
    %v2974 = vld [vmem:[#allocation6 + $0x44] sm:$0xf]
    %v2975 = vld [vmem:[#allocation6 + $0x48] sm:$0xf]
    %v2976 = vld [vmem:[#allocation6 + $0x4c] sm:$0xf]
    %v2977 = vld [vmem:[#allocation6 + $0x50] sm:$0xf]
    %v2978 = vld [vmem:[#allocation6 + $0x54] sm:$0xf]
    %v2979 = vld [vmem:[#allocation6 + $0x58] sm:$0xf]
    %v2980 = vld [vmem:[#allocation6 + $0x5c] sm:$0xf]
    %v2981 = vld [vmem:[#allocation6 + $0x60] sm:$0xf]
    %v2982 = vld [vmem:[#allocation6 + $0x64] sm:$0xf]
    %v2983 = vld [vmem:[#allocation6 + $0x68] sm:$0xf]
    %v2984 = vld [vmem:[#allocation6 + $0x6c] sm:$0xf]
    %v2985 = vld [vmem:[#allocation6 + $0x70] sm:$0xf]
    %v2986 = vld [vmem:[#allocation6 + $0x74] sm:$0xf]
    %v2987 = vld [vmem:[#allocation6 + $0x78] sm:$0xf]
    %v2988 = vld [vmem:[#allocation6 + $0x7c] sm:$0xf]
    %v2989 = vld [vmem:[#allocation6 + $0x80] sm:$0xf]
    %v2990 = vld [vmem:[#allocation6 + $0x84] sm:$0xf]
    %v2991 = vld [vmem:[#allocation6 + $0x88] sm:$0xf]
    %v2992 = vld [vmem:[#allocation6 + $0x8c] sm:$0xf]
    %v2993 = vld [vmem:[#allocation6 + $0x90] sm:$0xf]
    %v2994 = vld [vmem:[#allocation6 + $0x94] sm:$0xf]
    %v2995 = vld [vmem:[#allocation6 + $0x98] sm:$0xf]
    %v2996 = vld [vmem:[#allocation6 + $0x9c] sm:$0xf]
    %v2997 = vld [vmem:[#allocation6 + $0xa0] sm:$0xf]
    %v2998 = vld [vmem:[#allocation6 + $0xa4] sm:$0xf]
    %v2999 = vld [vmem:[#allocation6 + $0xa8] sm:$0xf]
    %v3000 = vld [vmem:[#allocation6 + $0xac] sm:$0xf]
    %v3001 = vld [vmem:[#allocation6 + $0xb0] sm:$0xf]
    %v3002 = vld [vmem:[#allocation6 + $0xb4] sm:$0xf]
    %v3003 = vld [vmem:[#allocation6 + $0xb8] sm:$0xf]
    %v3004 = vld [vmem:[#allocation6 + $0xbc] sm:$0xf]
    %v3005 = vld [vmem:[#allocation6 + $0xc0] sm:$0xf]
    %v3006 = vld [vmem:[#allocation6 + $0xc4] sm:$0xf]
    %v3007 = vld [vmem:[#allocation6 + $0xc8] sm:$0xf]
    %v3008 = vld [vmem:[#allocation6 + $0xcc] sm:$0xf]
    %v3009 = vld [vmem:[#allocation6 + $0xd0] sm:$0xf]
    %v3010 = vld [vmem:[#allocation6 + $0xd4] sm:$0xf]
    %v3011 = vld [vmem:[#allocation6 + $0xd8] sm:$0xf]
    %v3012 = vld [vmem:[#allocation6 + $0xdc] sm:$0xf]
    %v3013 = vld [vmem:[#allocation6 + $0xe0] sm:$0xf]
    %v3014 = vld [vmem:[#allocation6 + $0xe4] sm:$0xf]
    %v3015 = vld [vmem:[#allocation6 + $0xe8] sm:$0xf]
    %v3016 = vld [vmem:[#allocation6 + $0xec] sm:$0xf]
    %v3017 = vld [vmem:[#allocation6 + $0xf0] sm:$0xf]
    %v3018 = vld [vmem:[#allocation6 + $0xf4] sm:$0xf]
    %v3019 = vld [vmem:[#allocation6 + $0xf8] sm:$0xf]
    %v3020 = vld [vmem:[#allocation6 + $0xfc] sm:$0xf]
    %v3021 = vld [vmem:[#allocation6 + $0x100] sm:$0xf]
    %v3022 = vld [vmem:[#allocation6 + $0x104] sm:$0xf]
    %v3023 = vld [vmem:[#allocation6 + $0x108] sm:$0xf]
    %v3024 = vld [vmem:[#allocation6 + $0x10c] sm:$0xf]
    %v3025 = vld [vmem:[#allocation6 + $0x110] sm:$0xf]
    %v3026 = vld [vmem:[#allocation6 + $0x114] sm:$0xf]
    %v3027 = vld [vmem:[#allocation6 + $0x118] sm:$0xf]
    %v3028 = vld [vmem:[#allocation6 + $0x11c] sm:$0xf]
    %v3029 = vld [vmem:[#allocation6 + $0x120] sm:$0xf]
    %v3030 = vld [vmem:[#allocation6 + $0x124] sm:$0xf]
    %v3031 = vld [vmem:[#allocation6 + $0x128] sm:$0xf]
    %v3032 = vld [vmem:[#allocation6 + $0x12c] sm:$0xf]
    %v3033 = vld [vmem:[#allocation6 + $0x130] sm:$0xf]
    %v3034 = vld [vmem:[#allocation6 + $0x134] sm:$0xf]
    %v3035 = vld [vmem:[#allocation6 + $0x138] sm:$0xf]
    %v3036 = vld [vmem:[#allocation6 + $0x13c] sm:$0xf]
    %v3037 = vld [vmem:[#allocation6 + $0x140] sm:$0xf]
    %v3038 = vld [vmem:[#allocation6 + $0x144] sm:$0xf]
    %v3039 = vld [vmem:[#allocation6 + $0x148] sm:$0xf]
    %v3040 = vld [vmem:[#allocation6 + $0x14c] sm:$0xf]
    %v3041 = vld [vmem:[#allocation6 + $0x150] sm:$0xf]
    %v3042 = vld [vmem:[#allocation6 + $0x154] sm:$0xf]
    %v3043 = vld [vmem:[#allocation6 + $0x158] sm:$0xf]
    %v3044 = vld [vmem:[#allocation6 + $0x15c] sm:$0xf]
    %v3045 = vld [vmem:[#allocation6 + $0x160] sm:$0xf]
    %v3046 = vld [vmem:[#allocation6 + $0x164] sm:$0xf]
    %v3047 = vld [vmem:[#allocation6 + $0x168] sm:$0xf]
    %v3048 = vld [vmem:[#allocation6 + $0x16c] sm:$0xf]
    %v3049 = vld [vmem:[#allocation6 + $0x170] sm:$0xf]
    %v3050 = vld [vmem:[#allocation6 + $0x174] sm:$0xf]
    %v3051 = vld [vmem:[#allocation6 + $0x178] sm:$0xf]
    %v3052 = vld [vmem:[#allocation6 + $0x17c] sm:$0xf]
    %v3053 = vld [vmem:[#allocation6 + $0x180] sm:$0xf]
    %v3054 = vld [vmem:[#allocation6 + $0x184] sm:$0xf]
    %v3055 = vld [vmem:[#allocation6 + $0x188] sm:$0xf]
    %v3056 = vld [vmem:[#allocation6 + $0x18c] sm:$0xf]
    %v3057 = vld [vmem:[#allocation6 + $0x190] sm:$0xf]
    %v3058 = vld [vmem:[#allocation6 + $0x194] sm:$0xf]
    %v3059 = vld [vmem:[#allocation6 + $0x198] sm:$0xf]
    %v3060 = vld [vmem:[#allocation6 + $0x19c] sm:$0xf]
    %v3061 = vld [vmem:[#allocation6 + $0x1a0] sm:$0xf]
    %v3062 = vld [vmem:[#allocation6 + $0x1a4] sm:$0xf]
    %v3063 = vld [vmem:[#allocation6 + $0x1a8] sm:$0xf]
    %v3064 = vld [vmem:[#allocation6 + $0x1ac] sm:$0xf]
    %v3065 = vld [vmem:[#allocation6 + $0x1b0] sm:$0xf]
    %v3066 = vld [vmem:[#allocation6 + $0x1b4] sm:$0xf]
    %v3067 = vld [vmem:[#allocation6 + $0x1b8] sm:$0xf]
    %v3068 = vld [vmem:[#allocation6 + $0x1bc] sm:$0xf]
    %v3069 = vld [vmem:[#allocation6 + $0x1c0] sm:$0xf]
    %v3070 = vld [vmem:[#allocation6 + $0x1c4] sm:$0xf]
    %v3071 = vld [vmem:[#allocation6 + $0x1c8] sm:$0xf]
    %v3072 = vld [vmem:[#allocation6 + $0x1cc] sm:$0xf]
    %v3073 = vld [vmem:[#allocation6 + $0x1d0] sm:$0xf]
    %v3074 = vld [vmem:[#allocation6 + $0x1d4] sm:$0xf]
    %v3075 = vld [vmem:[#allocation6 + $0x1d8] sm:$0xf]
    %v3076 = vld [vmem:[#allocation6 + $0x1dc] sm:$0xf]
    %v3077 = vld [vmem:[#allocation6 + $0x1e0] sm:$0xf]
    %v3078 = vld [vmem:[#allocation6 + $0x1e4] sm:$0xf]
    %v3079 = vld [vmem:[#allocation6 + $0x1e8] sm:$0xf]
    %v3080 = vld [vmem:[#allocation6 + $0x1ec] sm:$0xf]
    %v3081 = vld [vmem:[#allocation6 + $0x1f0] sm:$0xf]
    %v3082 = vld [vmem:[#allocation6 + $0x1f4] sm:$0xf]
    %v3083 = vld [vmem:[#allocation6 + $0x1f8] sm:$0xf]
    %v3084 = vld [vmem:[#allocation6 + $0x1fc] sm:$0xf]
    %v3085 = vld [vmem:[#allocation6 + $0x200] sm:$0xf]
    %v3086 = vld [vmem:[#allocation6 + $0x204] sm:$0xf]
    %v3087 = vld [vmem:[#allocation6 + $0x208] sm:$0xf]
    %v3088 = vld [vmem:[#allocation6 + $0x20c] sm:$0xf]
    %v3089 = vld [vmem:[#allocation6 + $0x210] sm:$0xf]
    %v3090 = vld [vmem:[#allocation6 + $0x214] sm:$0xf]
    %v3091 = vld [vmem:[#allocation6 + $0x218] sm:$0xf]
    %v3092 = vld [vmem:[#allocation6 + $0x21c] sm:$0xf]
    %v3093 = vld [vmem:[#allocation6 + $0x220] sm:$0xf]
    %v3094 = vld [vmem:[#allocation6 + $0x224] sm:$0xf]
    %v3095 = vld [vmem:[#allocation6 + $0x228] sm:$0xf]
    %v3096 = vld [vmem:[#allocation6 + $0x22c] sm:$0xf]
    %v3097 = vld [vmem:[#allocation6 + $0x230] sm:$0xf]
    %v3098 = vld [vmem:[#allocation6 + $0x234] sm:$0xf]
    %v3099 = vld [vmem:[#allocation6 + $0x238] sm:$0xf]
    %v3100 = vld [vmem:[#allocation6 + $0x23c] sm:$0xf]
    %v3101 = vld [vmem:[%s7] sm:$0x1]
    %v3103 = vlaneseq
    %v3104 = vshrl.u32 %v3103, 7
    %v3105 = vsub.s32 0, %v3104
    %v3106 = vrot.slane %v3101, %v3105
    %v3252 = vunpack.c.l.b16 %v2957
    %v3253 = vunpack.c.l.b16 %v2958
    %v3254 = vunpack.c.l.b16 %v2959
    %v3255 = vunpack.c.l.b16 %v2960
    %v3256 = vunpack.c.l.b16 %v2961
    %v3257 = vunpack.c.l.b16 %v2962
    %v3258 = vunpack.c.l.b16 %v2963
    %v3259 = vunpack.c.l.b16 %v2964
    %v3260 = vunpack.c.l.b16 %v2965
    %v3261 = vunpack.c.l.b16 %v2966
    %v3262 = vunpack.c.l.b16 %v2967
    %v3263 = vunpack.c.l.b16 %v2968
    %v3264 = vunpack.c.l.b16 %v2969
    %v3265 = vunpack.c.l.b16 %v2970
    %v3266 = vunpack.c.l.b16 %v2971
    %v3267 = vunpack.c.l.b16 %v2972
    %v3268 = vunpack.c.l.b16 %v2973
    %v3269 = vunpack.c.l.b16 %v2974
    %v3270 = vunpack.c.l.b16 %v2975
    %v3271 = vunpack.c.l.b16 %v2976
    %v3272 = vunpack.c.l.b16 %v2977
    %v3273 = vunpack.c.l.b16 %v2978
    %v3274 = vunpack.c.l.b16 %v2979
    %v3275 = vunpack.c.l.b16 %v2980
    %v3276 = vunpack.c.l.b16 %v2981
    %v3277 = vunpack.c.l.b16 %v2982
    %v3278 = vunpack.c.l.b16 %v2983
    %v3279 = vunpack.c.l.b16 %v2984
    %v3280 = vunpack.c.l.b16 %v2985
    %v3281 = vunpack.c.l.b16 %v2986
    %v3282 = vunpack.c.l.b16 %v2987
    %v3283 = vunpack.c.l.b16 %v2988
    %v3284 = vunpack.c.l.b16 %v2989
    %v3285 = vunpack.c.l.b16 %v2990
    %v3286 = vunpack.c.l.b16 %v2991
    %v3287 = vunpack.c.l.b16 %v2992
    %v3288 = vunpack.c.l.b16 %v2993
    %v3289 = vunpack.c.l.b16 %v2994
    %v3290 = vunpack.c.l.b16 %v2995
    %v3291 = vunpack.c.l.b16 %v2996
    %v3292 = vunpack.c.l.b16 %v2997
    %v3293 = vunpack.c.l.b16 %v2998
    %v3294 = vunpack.c.l.b16 %v2999
    %v3295 = vunpack.c.l.b16 %v3000
    %v3296 = vunpack.c.l.b16 %v3001
    %v3297 = vunpack.c.l.b16 %v3002
    %v3298 = vunpack.c.l.b16 %v3003
    %v3299 = vunpack.c.l.b16 %v3004
    %v3300 = vunpack.c.l.b16 %v3005
    %v3301 = vunpack.c.l.b16 %v3006
    %v3302 = vunpack.c.l.b16 %v3007
    %v3303 = vunpack.c.l.b16 %v3008
    %v3304 = vunpack.c.l.b16 %v3009
    %v3305 = vunpack.c.l.b16 %v3010
    %v3306 = vunpack.c.l.b16 %v3011
    %v3307 = vunpack.c.l.b16 %v3012
    %v3308 = vunpack.c.l.b16 %v3013
    %v3309 = vunpack.c.l.b16 %v3014
    %v3310 = vunpack.c.l.b16 %v3015
    %v3311 = vunpack.c.l.b16 %v3016
    %v3312 = vunpack.c.l.b16 %v3017
    %v3313 = vunpack.c.l.b16 %v3018
    %v3314 = vunpack.c.l.b16 %v3019
    %v3315 = vunpack.c.l.b16 %v3020
    %v3316 = vunpack.c.l.b16 %v3021
    %v3317 = vunpack.c.l.b16 %v3022
    %v3318 = vunpack.c.l.b16 %v3023
    %v3319 = vunpack.c.l.b16 %v3024
    %v3320 = vunpack.c.l.b16 %v3025
    %v3321 = vunpack.c.l.b16 %v3026
    %v3322 = vunpack.c.l.b16 %v3027
    %v3323 = vunpack.c.l.b16 %v3028
    %v3324 = vunpack.c.l.b16 %v3029
    %v3325 = vunpack.c.l.b16 %v3030
    %v3326 = vunpack.c.l.b16 %v3031
    %v3327 = vunpack.c.l.b16 %v3032
    %v3328 = vunpack.c.l.b16 %v3033
    %v3329 = vunpack.c.l.b16 %v3034
    %v3330 = vunpack.c.l.b16 %v3035
    %v3331 = vunpack.c.l.b16 %v3036
    %v3332 = vunpack.c.l.b16 %v3037
    %v3333 = vunpack.c.l.b16 %v3038
    %v3334 = vunpack.c.l.b16 %v3039
    %v3335 = vunpack.c.l.b16 %v3040
    %v3336 = vunpack.c.l.b16 %v3041
    %v3337 = vunpack.c.l.b16 %v3042
    %v3338 = vunpack.c.l.b16 %v3043
    %v3339 = vunpack.c.l.b16 %v3044
    %v3340 = vunpack.c.l.b16 %v3045
    %v3341 = vunpack.c.l.b16 %v3046
    %v3342 = vunpack.c.l.b16 %v3047
    %v3343 = vunpack.c.l.b16 %v3048
    %v3344 = vunpack.c.l.b16 %v3049
    %v3345 = vunpack.c.l.b16 %v3050
    %v3346 = vunpack.c.l.b16 %v3051
    %v3347 = vunpack.c.l.b16 %v3052
    %v3348 = vunpack.c.l.b16 %v3053
    %v3349 = vunpack.c.l.b16 %v3054
    %v3350 = vunpack.c.l.b16 %v3055
    %v3351 = vunpack.c.l.b16 %v3056
    %v3352 = vunpack.c.l.b16 %v3057
    %v3353 = vunpack.c.l.b16 %v3058
    %v3354 = vunpack.c.l.b16 %v3059
    %v3355 = vunpack.c.l.b16 %v3060
    %v3356 = vunpack.c.l.b16 %v3061
    %v3357 = vunpack.c.l.b16 %v3062
    %v3358 = vunpack.c.l.b16 %v3063
    %v3359 = vunpack.c.l.b16 %v3064
    %v3360 = vunpack.c.l.b16 %v3065
    %v3361 = vunpack.c.l.b16 %v3066
    %v3362 = vunpack.c.l.b16 %v3067
    %v3363 = vunpack.c.l.b16 %v3068
    %v3364 = vunpack.c.l.b16 %v3069
    %v3365 = vunpack.c.l.b16 %v3070
    %v3366 = vunpack.c.l.b16 %v3071
    %v3367 = vunpack.c.l.b16 %v3072
    %v3368 = vunpack.c.l.b16 %v3073
    %v3369 = vunpack.c.l.b16 %v3074
    %v3370 = vunpack.c.l.b16 %v3075
    %v3371 = vunpack.c.l.b16 %v3076
    %v3372 = vunpack.c.l.b16 %v3077
    %v3373 = vunpack.c.l.b16 %v3078
    %v3374 = vunpack.c.l.b16 %v3079
    %v3375 = vunpack.c.l.b16 %v3080
    %v3376 = vunpack.c.l.b16 %v3081
    %v3377 = vunpack.c.l.b16 %v3082
    %v3378 = vunpack.c.l.b16 %v3083
    %v3379 = vunpack.c.l.b16 %v3084
    %v3380 = vunpack.c.l.b16 %v3085
    %v3381 = vunpack.c.l.b16 %v3086
    %v3382 = vunpack.c.l.b16 %v3087
    %v3383 = vunpack.c.l.b16 %v3088
    %v3384 = vunpack.c.l.b16 %v3089
    %v3385 = vunpack.c.l.b16 %v3090
    %v3386 = vunpack.c.l.b16 %v3091
    %v3387 = vunpack.c.l.b16 %v3092
    %v3388 = vunpack.c.l.b16 %v3093
    %v3389 = vunpack.c.l.b16 %v3094
    %v3390 = vunpack.c.l.b16 %v3095
    %v3391 = vunpack.c.l.b16 %v3096
    %v3392 = vunpack.c.l.b16 %v3097
    %v3393 = vunpack.c.l.b16 %v3098
    %v3394 = vunpack.c.l.b16 %v3099
    %v3395 = vunpack.c.l.b16 %v3100
    %v3396 = vpack.c.b16 %v3253, %v3252
    %v3397 = vpack.c.b16 %v3255, %v3254
    %v3398 = vpack.c.b16 %v3257, %v3256
    %v3399 = vpack.c.b16 %v3259, %v3258
    %v3400 = vpack.c.b16 %v3261, %v3260
    %v3401 = vpack.c.b16 %v3263, %v3262
    %v3402 = vpack.c.b16 %v3265, %v3264
    %v3403 = vpack.c.b16 %v3267, %v3266
    %v3404 = vpack.c.b16 %v3269, %v3268
    %v3405 = vpack.c.b16 %v3271, %v3270
    %v3406 = vpack.c.b16 %v3273, %v3272
    %v3407 = vpack.c.b16 %v3275, %v3274
    %v3408 = vpack.c.b16 %v3277, %v3276
    %v3409 = vpack.c.b16 %v3279, %v3278
    %v3410 = vpack.c.b16 %v3281, %v3280
    %v3411 = vpack.c.b16 %v3283, %v3282
    %v3412 = vpack.c.b16 %v3285, %v3284
    %v3413 = vpack.c.b16 %v3287, %v3286
    %v3414 = vpack.c.b16 %v3289, %v3288
    %v3415 = vpack.c.b16 %v3291, %v3290
    %v3416 = vpack.c.b16 %v3293, %v3292
    %v3417 = vpack.c.b16 %v3295, %v3294
    %v3418 = vpack.c.b16 %v3297, %v3296
    %v3419 = vpack.c.b16 %v3299, %v3298
    %v3420 = vpack.c.b16 %v3301, %v3300
    %v3421 = vpack.c.b16 %v3303, %v3302
    %v3422 = vpack.c.b16 %v3305, %v3304
    %v3423 = vpack.c.b16 %v3307, %v3306
    %v3424 = vpack.c.b16 %v3309, %v3308
    %v3425 = vpack.c.b16 %v3311, %v3310
    %v3426 = vpack.c.b16 %v3313, %v3312
    %v3427 = vpack.c.b16 %v3315, %v3314
    %v3428 = vpack.c.b16 %v3317, %v3316
    %v3429 = vpack.c.b16 %v3319, %v3318
    %v3430 = vpack.c.b16 %v3321, %v3320
    %v3431 = vpack.c.b16 %v3323, %v3322
    %v3432 = vpack.c.b16 %v3325, %v3324
    %v3433 = vpack.c.b16 %v3327, %v3326
    %v3434 = vpack.c.b16 %v3329, %v3328
    %v3435 = vpack.c.b16 %v3331, %v3330
    %v3436 = vpack.c.b16 %v3333, %v3332
    %v3437 = vpack.c.b16 %v3335, %v3334
    %v3438 = vpack.c.b16 %v3337, %v3336
    %v3439 = vpack.c.b16 %v3339, %v3338
    %v3440 = vpack.c.b16 %v3341, %v3340
    %v3441 = vpack.c.b16 %v3343, %v3342
    %v3442 = vpack.c.b16 %v3345, %v3344
    %v3443 = vpack.c.b16 %v3347, %v3346
    %v3444 = vpack.c.b16 %v3349, %v3348
    %v3445 = vpack.c.b16 %v3351, %v3350
    %v3446 = vpack.c.b16 %v3353, %v3352
    %v3447 = vpack.c.b16 %v3355, %v3354
    %v3448 = vpack.c.b16 %v3357, %v3356
    %v3449 = vpack.c.b16 %v3359, %v3358
    %v3450 = vpack.c.b16 %v3361, %v3360
    %v3451 = vpack.c.b16 %v3363, %v3362
    %v3452 = vpack.c.b16 %v3365, %v3364
    %v3453 = vpack.c.b16 %v3367, %v3366
    %v3454 = vpack.c.b16 %v3369, %v3368
    %v3455 = vpack.c.b16 %v3371, %v3370
    %v3456 = vpack.c.b16 %v3373, %v3372
    %v3457 = vpack.c.b16 %v3375, %v3374
    %v3458 = vpack.c.b16 %v3377, %v3376
    %v3459 = vpack.c.b16 %v3379, %v3378
    %v3460 = vpack.c.b16 %v3381, %v3380
    %v3461 = vpack.c.b16 %v3383, %v3382
    %v3462 = vpack.c.b16 %v3385, %v3384
    %v3463 = vpack.c.b16 %v3387, %v3386
    %v3464 = vpack.c.b16 %v3389, %v3388
    %v3465 = vpack.c.b16 %v3391, %v3390
    %v3466 = vpack.c.b16 %v3393, %v3392
    %v3467 = vpack.c.b16 %v3395, %v3394
    %3540 = vmatprep.subr.bf16.mxu0 0
    %3541 = vmatpush1.bf16.msra.mxu0 %v3396
    %3542 = vmatprep.subr.bf16.mxu0 0
    %3543 = vmatpush1.bf16.msra.mxu0 %v3397
    %3544 = vmatprep.subr.bf16.mxu0 0
    %3545 = vmatpush1.bf16.msra.mxu0 %v3398
    %3546 = vmatprep.subr.bf16.mxu0 0
    %3547 = vmatpush1.bf16.msra.mxu0 %v3399
    %3548 = vmatprep.subr.bf16.mxu0 0
    %3549 = vmatpush1.bf16.msra.mxu0 %v3400
    %3550 = vmatprep.subr.bf16.mxu0 0
    %3551 = vmatpush1.bf16.msra.mxu0 %v3401
    %3552 = vmatprep.subr.bf16.mxu0 0
    %3553 = vmatpush1.bf16.msra.mxu0 %v3402
    %3554 = vmatprep.subr.bf16.mxu0 0
    %3555 = vmatpush1.bf16.msra.mxu0 %v3403
    %3556 = vmatprep.subr.bf16.mxu0 0
    %3557 = vmatpush1.bf16.msra.mxu0 %v3404
    %3558 = vmatprep.subr.bf16.mxu0 0
    %3559 = vmatpush1.bf16.msra.mxu0 %v3405
    %3560 = vmatprep.subr.bf16.mxu0 0
    %3561 = vmatpush1.bf16.msra.mxu0 %v3406
    %3562 = vmatprep.subr.bf16.mxu0 0
    %3563 = vmatpush1.bf16.msra.mxu0 %v3407
    %3564 = vmatprep.subr.bf16.mxu0 0
    %3565 = vmatpush1.bf16.msra.mxu0 %v3408
    %3566 = vmatprep.subr.bf16.mxu0 0
    %3567 = vmatpush1.bf16.msra.mxu0 %v3409
    %3568 = vmatprep.subr.bf16.mxu0 0
    %3569 = vmatpush1.bf16.msra.mxu0 %v3410
    %3570 = vmatprep.subr.bf16.mxu0 0
    %3571 = vmatpush1.bf16.msra.mxu0 %v3411
    %3572 = vmatprep.mubr.bf16.mxu0 %v2803
    %3573 = vmatmul.mubr.bf16.gmra.mrb[0].mxu0 %v2780
    %v3574 = vpop.f32.mrb[0].mxu0
    %v3575 = vadd.f32 %v3106, %v3574
    %v3576 = vpop.f32.mrb[0].mxu0
    %v3577 = vpop.f32.mrb[0].mxu0
    %v3578 = vadd.f32 %v3106, %v3577
    %v3579 = vpop.f32.mrb[0].mxu0
    %3580 = vmatprep.mubr.bf16.mxu0 %v2804
    %3581 = vmatmul.mubr.bf16.gmra.mrb[0].mxu0 %v2781
    %v3582 = vpop.f32.mrb[0].mxu0
    %v3583 = vadd.f32 %v3106, %v3582
    %v3584 = vpop.f32.mrb[0].mxu0
    %v3585 = vpop.f32.mrb[0].mxu0
    %v3586 = vadd.f32 %v3106, %v3585
    %v3587 = vpop.f32.mrb[0].mxu0
    %3588 = vmatprep.mubr.bf16.mxu0 %v2805
    %3589 = vmatmul.mubr.bf16.gmra.mrb[0].mxu0 %v2782
    %v3590 = vpop.f32.mrb[0].mxu0
    %v3591 = vadd.f32 %v3106, %v3590
    %v3592 = vpop.f32.mrb[0].mxu0
    %v3593 = vpop.f32.mrb[0].mxu0
    %v3594 = vadd.f32 %v3106, %v3593
    %v3595 = vpop.f32.mrb[0].mxu0
    %3596 = vmatprep.mubr.bf16.mxu0 %v2806
    %3597 = vmatmul.mubr.bf16.gmra.mrb[0].mxu0 %v2783
    %v3598 = vpop.f32.mrb[0].mxu0
    %v3599 = vadd.f32 %v3106, %v3598
    %v3600 = vpop.f32.mrb[0].mxu0
    %v3601 = vpop.f32.mrb[0].mxu0
    %v3602 = vadd.f32 %v3106, %v3601
    %v3603 = vpop.f32.mrb[0].mxu0
    %3604 = vmatprep.mubr.bf16.mxu0 %v2807
    %3605 = vmatmul.mubr.bf16.gmra.mrb[0].mxu0 %v2784
    %v3606 = vpop.f32.mrb[0].mxu0
    %v3607 = vadd.f32 %v3106, %v3606
    %v3608 = vpop.f32.mrb[0].mxu0
    %v3609 = vpop.f32.mrb[0].mxu0
    %v3610 = vadd.f32 %v3106, %v3609
    %v3611 = vpop.f32.mrb[0].mxu0
    %3612 = vmatprep.mubr.bf16.mxu0 %v2808
    %3613 = vmatmul.mubr.bf16.gmra.mrb[0].mxu0 %v2785
    %v3614 = vpop.f32.mrb[0].mxu0
    %v3615 = vadd.f32 %v3106, %v3614
    %v3616 = vpop.f32.mrb[0].mxu0
    %v3617 = vpop.f32.mrb[0].mxu0
    %v3618 = vadd.f32 %v3106, %v3617
    %v3619 = vpop.f32.mrb[0].mxu0
    %3620 = vmatprep.mubr.bf16.mxu0 %v2809
    %3621 = vmatmul.mubr.bf16.gmra.mrb[0].mxu0 %v2786
    %v3622 = vpop.f32.mrb[0].mxu0
    %v3623 = vadd.f32 %v3106, %v3622
    %v3624 = vpop.f32.mrb[0].mxu0
    %v3625 = vpop.f32.mrb[0].mxu0
    %v3626 = vadd.f32 %v3106, %v3625
    %v3627 = vpop.f32.mrb[0].mxu0
    %3628 = vmatprep.mubr.bf16.mxu0 %v2810
    %3629 = vmatmul.mubr.bf16.gmra.mrb[0].mxu0 %v2787
    %v3630 = vpop.f32.mrb[0].mxu0
    %v3631 = vadd.f32 %v3106, %v3630
    %v3632 = vpop.f32.mrb[0].mxu0
    %v3633 = vpop.f32.mrb[0].mxu0
    %v3634 = vpop.f32.mrb[0].mxu0
    %3635 = vdwg.mxu0
    %3636 = vmatprep.subr.bf16.mxu0 0
    %3637 = vmatpush1.bf16.msra.mxu0 %v3412
    %3638 = vmatprep.subr.bf16.mxu0 0
    %3639 = vmatpush1.bf16.msra.mxu0 %v3413
    %3640 = vmatprep.subr.bf16.mxu0 0
    %3641 = vmatpush1.bf16.msra.mxu0 %v3414
    %3642 = vmatprep.subr.bf16.mxu0 0
    %3643 = vmatpush1.bf16.msra.mxu0 %v3415
    %3644 = vmatprep.subr.bf16.mxu0 0
    %3645 = vmatpush1.bf16.msra.mxu0 %v3416
    %3646 = vmatprep.subr.bf16.mxu0 0
    %3647 = vmatpush1.bf16.msra.mxu0 %v3417
    %3648 = vmatprep.subr.bf16.mxu0 0
    %3649 = vmatpush1.bf16.msra.mxu0 %v3418
    %3650 = vmatprep.subr.bf16.mxu0 0
    %3651 = vmatpush1.bf16.msra.mxu0 %v3419
    %3652 = vmatprep.subr.bf16.mxu0 0
    %3653 = vmatpush1.bf16.msra.mxu0 %v3420
    %3654 = vmatprep.subr.bf16.mxu0 0
    %3655 = vmatpush1.bf16.msra.mxu0 %v3421
    %3656 = vmatprep.subr.bf16.mxu0 0
    %3657 = vmatpush1.bf16.msra.mxu0 %v3422
    %3658 = vmatprep.subr.bf16.mxu0 0
    %3659 = vmatpush1.bf16.msra.mxu0 %v3423
    %3660 = vmatprep.subr.bf16.mxu0 0
    %3661 = vmatpush1.bf16.msra.mxu0 %v3424
    %3662 = vmatprep.subr.bf16.mxu0 0
    %3663 = vmatpush1.bf16.msra.mxu0 %v3425
    %3664 = vmatprep.subr.bf16.mxu0 0
    %3665 = vmatpush1.bf16.msra.mxu0 %v3426
    %3666 = vmatprep.subr.bf16.mxu0 0
    %3667 = vmatpush1.bf16.msra.mxu0 %v3427
    %3668 = vmatprep.mubr.bf16.mxu0 %v2849
    %3669 = vmatmul.mubr.bf16.gmra.mrb[0].mxu0 %v2826
    %v3670 = vpop.f32.mrb[0].mxu0
    %v3671 = vadd.f32 %v3575, %v3670
    %v3672 = vpop.f32.mrb[0].mxu0
    %v3673 = vpop.f32.mrb[0].mxu0
    %v3674 = vadd.f32 %v3578, %v3673
    %v3675 = vpop.f32.mrb[0].mxu0
    %3676 = vmatprep.mubr.bf16.mxu0 %v2850
    %3677 = vmatmul.mubr.bf16.gmra.mrb[0].mxu0 %v2827
    %v3678 = vpop.f32.mrb[0].mxu0
    %v3679 = vadd.f32 %v3583, %v3678
    %v3680 = vpop.f32.mrb[0].mxu0
    %v3681 = vpop.f32.mrb[0].mxu0
    %v3682 = vadd.f32 %v3586, %v3681
    %v3683 = vpop.f32.mrb[0].mxu0
    %3684 = vmatprep.mubr.bf16.mxu0 %v2851
    %3685 = vmatmul.mubr.bf16.gmra.mrb[0].mxu0 %v2828
    %v3686 = vpop.f32.mrb[0].mxu0
    %v3687 = vadd.f32 %v3591, %v3686
    %v3688 = vpop.f32.mrb[0].mxu0
    %v3689 = vpop.f32.mrb[0].mxu0
    %v3690 = vadd.f32 %v3594, %v3689
    %v3691 = vpop.f32.mrb[0].mxu0
    %3692 = vmatprep.mubr.bf16.mxu0 %v2852
    %3693 = vmatmul.mubr.bf16.gmra.mrb[0].mxu0 %v2829
    %v3694 = vpop.f32.mrb[0].mxu0
    %v3695 = vadd.f32 %v3599, %v3694
    %v3696 = vpop.f32.mrb[0].mxu0
    %v3697 = vpop.f32.mrb[0].mxu0
    %v3698 = vadd.f32 %v3602, %v3697
    %v3699 = vpop.f32.mrb[0].mxu0
    %3700 = vmatprep.mubr.bf16.mxu0 %v2853
    %3701 = vmatmul.mubr.bf16.gmra.mrb[0].mxu0 %v2830
    %v3702 = vpop.f32.mrb[0].mxu0
    %v3703 = vadd.f32 %v3607, %v3702
    %v3704 = vpop.f32.mrb[0].mxu0
    %v3705 = vpop.f32.mrb[0].mxu0
    %v3706 = vadd.f32 %v3610, %v3705
    %v3707 = vpop.f32.mrb[0].mxu0
    %3708 = vmatprep.mubr.bf16.mxu0 %v2854
    %3709 = vmatmul.mubr.bf16.gmra.mrb[0].mxu0 %v2831
    %v3710 = vpop.f32.mrb[0].mxu0
    %v3711 = vadd.f32 %v3615, %v3710
    %v3712 = vpop.f32.mrb[0].mxu0
    %v3713 = vpop.f32.mrb[0].mxu0
    %v3714 = vadd.f32 %v3618, %v3713
    %v3715 = vpop.f32.mrb[0].mxu0
    %3716 = vmatprep.mubr.bf16.mxu0 %v2855
    %3717 = vmatmul.mubr.bf16.gmra.mrb[0].mxu0 %v2832
    %v3718 = vpop.f32.mrb[0].mxu0
    %v3719 = vadd.f32 %v3623, %v3718
    %v3720 = vpop.f32.mrb[0].mxu0
    %v3721 = vpop.f32.mrb[0].mxu0
    %v3722 = vadd.f32 %v3626, %v3721
    %v3723 = vpop.f32.mrb[0].mxu0
    %3724 = vmatprep.mubr.bf16.mxu0 %v2856
    %3725 = vmatmul.mubr.bf16.gmra.mrb[0].mxu0 %v2833
    %v3726 = vpop.f32.mrb[0].mxu0
    %v3727 = vadd.f32 %v3631, %v3726
    %v3728 = vpop.f32.mrb[0].mxu0
    %v3729 = vpop.f32.mrb[0].mxu0
    %v3730 = vpop.f32.mrb[0].mxu0
    %3731 = vdwg.mxu0
    %3732 = vmatprep.subr.bf16.mxu0 0
    %3733 = vmatpush1.bf16.msra.mxu0 %v3428
    %3734 = vmatprep.subr.bf16.mxu0 0
    %3735 = vmatpush1.bf16.msra.mxu0 %v3429
    %3736 = vmatprep.subr.bf16.mxu0 0
    %3737 = vmatpush1.bf16.msra.mxu0 %v3430
    %3738 = vmatprep.subr.bf16.mxu0 0
    %3739 = vmatpush1.bf16.msra.mxu0 %v3431
    %3740 = vmatprep.subr.bf16.mxu0 0
    %3741 = vmatpush1.bf16.msra.mxu0 %v3432
    %3742 = vmatprep.subr.bf16.mxu0 0
    %3743 = vmatpush1.bf16.msra.mxu0 %v3433
    %3744 = vmatprep.subr.bf16.mxu0 0
    %3745 = vmatpush1.bf16.msra.mxu0 %v3434
    %3746 = vmatprep.subr.bf16.mxu0 0
    %3747 = vmatpush1.bf16.msra.mxu0 %v3435
    %3748 = vmatprep.subr.bf16.mxu0 0
    %3749 = vmatpush1.bf16.msra.mxu0 %v3436
    %3750 = vmatprep.subr.bf16.mxu0 0
    %3751 = vmatpush1.bf16.msra.mxu0 %v3437
    %3752 = vmatprep.subr.bf16.mxu0 0
    %3753 = vmatpush1.bf16.msra.mxu0 %v3438
    %3754 = vmatprep.subr.bf16.mxu0 0
    %3755 = vmatpush1.bf16.msra.mxu0 %v3439
    %3756 = vmatprep.subr.bf16.mxu0 0
    %3757 = vmatpush1.bf16.msra.mxu0 %v3440
    %3758 = vmatprep.subr.bf16.mxu0 0
    %3759 = vmatpush1.bf16.msra.mxu0 %v3441
    %3760 = vmatprep.subr.bf16.mxu0 0
    %3761 = vmatpush1.bf16.msra.mxu0 %v3442
    %3762 = vmatprep.subr.bf16.mxu0 0
    %3763 = vmatpush1.bf16.msra.mxu0 %v3443
    %3764 = vmatprep.mubr.bf16.mxu0 %v2880
    %3765 = vmatmul.mubr.bf16.gmra.mrb[0].mxu0 %v2857
    %v3766 = vpop.f32.mrb[0].mxu0
    %v3767 = vadd.f32 %v3671, %v3766
    %v3768 = vpop.f32.mrb[0].mxu0
    %v3769 = vpop.f32.mrb[0].mxu0
    %v3770 = vadd.f32 %v3674, %v3769
    %v3771 = vpop.f32.mrb[0].mxu0
    %3772 = vmatprep.mubr.bf16.mxu0 %v2881
    %3773 = vmatmul.mubr.bf16.gmra.mrb[0].mxu0 %v2858
    %v3774 = vpop.f32.mrb[0].mxu0
    %v3775 = vadd.f32 %v3679, %v3774
    %v3776 = vpop.f32.mrb[0].mxu0
    %v3777 = vpop.f32.mrb[0].mxu0
    %v3778 = vadd.f32 %v3682, %v3777
    %v3779 = vpop.f32.mrb[0].mxu0
    %3780 = vmatprep.mubr.bf16.mxu0 %v2882
    %3781 = vmatmul.mubr.bf16.gmra.mrb[0].mxu0 %v2859
    %v3782 = vpop.f32.mrb[0].mxu0
    %v3783 = vadd.f32 %v3687, %v3782
    %v3784 = vpop.f32.mrb[0].mxu0
    %v3785 = vpop.f32.mrb[0].mxu0
    %v3786 = vadd.f32 %v3690, %v3785
    %v3787 = vpop.f32.mrb[0].mxu0
    %3788 = vmatprep.mubr.bf16.mxu0 %v2883
    %3789 = vmatmul.mubr.bf16.gmra.mrb[0].mxu0 %v2860
    %v3790 = vpop.f32.mrb[0].mxu0
    %v3791 = vadd.f32 %v3695, %v3790
    %v3792 = vpop.f32.mrb[0].mxu0
    %v3793 = vpop.f32.mrb[0].mxu0
    %v3794 = vadd.f32 %v3698, %v3793
    %v3795 = vpop.f32.mrb[0].mxu0
    %3796 = vmatprep.mubr.bf16.mxu0 %v2884
    %3797 = vmatmul.mubr.bf16.gmra.mrb[0].mxu0 %v2861
    %v3798 = vpop.f32.mrb[0].mxu0
    %v3799 = vadd.f32 %v3703, %v3798
    %v3800 = vpop.f32.mrb[0].mxu0
    %v3801 = vpop.f32.mrb[0].mxu0
    %v3802 = vadd.f32 %v3706, %v3801
    %v3803 = vpop.f32.mrb[0].mxu0
    %3804 = vmatprep.mubr.bf16.mxu0 %v2885
    %3805 = vmatmul.mubr.bf16.gmra.mrb[0].mxu0 %v2862
    %v3806 = vpop.f32.mrb[0].mxu0
    %v3807 = vadd.f32 %v3711, %v3806
    %v3808 = vpop.f32.mrb[0].mxu0
    %v3809 = vpop.f32.mrb[0].mxu0
    %v3810 = vadd.f32 %v3714, %v3809
    %v3811 = vpop.f32.mrb[0].mxu0
    %3812 = vmatprep.mubr.bf16.mxu0 %v2886
    %3813 = vmatmul.mubr.bf16.gmra.mrb[0].mxu0 %v2863
    %v3814 = vpop.f32.mrb[0].mxu0
    %v3815 = vadd.f32 %v3719, %v3814
    %v3816 = vpop.f32.mrb[0].mxu0
    %v3817 = vpop.f32.mrb[0].mxu0
    %v3818 = vadd.f32 %v3722, %v3817
    %v3819 = vpop.f32.mrb[0].mxu0
    %3820 = vmatprep.mubr.bf16.mxu0 %v2887
    %3821 = vmatmul.mubr.bf16.gmra.mrb[0].mxu0 %v2864
    %v3822 = vpop.f32.mrb[0].mxu0
    %v3823 = vadd.f32 %v3727, %v3822
    %v3824 = vpop.f32.mrb[0].mxu0
    %v3825 = vpop.f32.mrb[0].mxu0
    %v3826 = vpop.f32.mrb[0].mxu0
    %3827 = vdwg.mxu0
    %3828 = vmatprep.subr.bf16.mxu0 0
    %3829 = vmatpush1.bf16.msra.mxu0 %v3444
    %3830 = vmatprep.subr.bf16.mxu0 0
    %3831 = vmatpush1.bf16.msra.mxu0 %v3445
    %3832 = vmatprep.subr.bf16.mxu0 0
    %3833 = vmatpush1.bf16.msra.mxu0 %v3446
    %3834 = vmatprep.subr.bf16.mxu0 0
    %3835 = vmatpush1.bf16.msra.mxu0 %v3447
    %3836 = vmatprep.subr.bf16.mxu0 0
    %3837 = vmatpush1.bf16.msra.mxu0 %v3448
    %3838 = vmatprep.subr.bf16.mxu0 0
    %3839 = vmatpush1.bf16.msra.mxu0 %v3449
    %3840 = vmatprep.subr.bf16.mxu0 0
    %3841 = vmatpush1.bf16.msra.mxu0 %v3450
    %3842 = vmatprep.subr.bf16.mxu0 0
    %3843 = vmatpush1.bf16.msra.mxu0 %v3451
    %3844 = vmatprep.subr.bf16.mxu0 0
    %3845 = vmatpush1.bf16.msra.mxu0 %v3452
    %3846 = vmatprep.subr.bf16.mxu0 0
    %3847 = vmatpush1.bf16.msra.mxu0 %v3453
    %3848 = vmatprep.subr.bf16.mxu0 0
    %3849 = vmatpush1.bf16.msra.mxu0 %v3454
    %3850 = vmatprep.subr.bf16.mxu0 0
    %3851 = vmatpush1.bf16.msra.mxu0 %v3455
    %3852 = vmatprep.subr.bf16.mxu0 0
    %3853 = vmatpush1.bf16.msra.mxu0 %v3456
    %3854 = vmatprep.subr.bf16.mxu0 0
    %3855 = vmatpush1.bf16.msra.mxu0 %v3457
    %3856 = vmatprep.subr.bf16.mxu0 0
    %3857 = vmatpush1.bf16.msra.mxu0 %v3458
    %3858 = vmatprep.subr.bf16.mxu0 0
    %3859 = vmatpush1.bf16.msra.mxu0 %v3459
    %3860 = vmatprep.mubr.bf16.mxu0 %v2926
    %3861 = vmatmul.mubr.bf16.gmra.mrb[0].mxu0 %v2903
    %v3862 = vpop.f32.mrb[0].mxu0
    %v3863 = vadd.f32 %v3767, %v3862
    %v3864 = vpop.f32.mrb[0].mxu0
    %v3865 = vpop.f32.mrb[0].mxu0
    %v3866 = vadd.f32 %v3770, %v3865
    %v3867 = vpop.f32.mrb[0].mxu0
    %3868 = vmatprep.mubr.bf16.mxu0 %v2927
    %3869 = vmatmul.mubr.bf16.gmra.mrb[0].mxu0 %v2904
    %v3870 = vpop.f32.mrb[0].mxu0
    %v3871 = vadd.f32 %v3775, %v3870
    %v3872 = vpop.f32.mrb[0].mxu0
    %v3873 = vpop.f32.mrb[0].mxu0
    %v3874 = vadd.f32 %v3778, %v3873
    %v3875 = vpop.f32.mrb[0].mxu0
    %3876 = vmatprep.mubr.bf16.mxu0 %v2928
    %3877 = vmatmul.mubr.bf16.gmra.mrb[0].mxu0 %v2905
    %v3878 = vpop.f32.mrb[0].mxu0
    %v3879 = vadd.f32 %v3783, %v3878
    %v3880 = vpop.f32.mrb[0].mxu0
    %v3881 = vpop.f32.mrb[0].mxu0
    %v3882 = vadd.f32 %v3786, %v3881
    %v3883 = vpop.f32.mrb[0].mxu0
    %3884 = vmatprep.mubr.bf16.mxu0 %v2929
    %3885 = vmatmul.mubr.bf16.gmra.mrb[0].mxu0 %v2906
    %v3886 = vpop.f32.mrb[0].mxu0
    %v3887 = vadd.f32 %v3791, %v3886
    %v3888 = vpop.f32.mrb[0].mxu0
    %v3889 = vpop.f32.mrb[0].mxu0
    %v3890 = vadd.f32 %v3794, %v3889
    %v3891 = vpop.f32.mrb[0].mxu0
    %3892 = vmatprep.mubr.bf16.mxu0 %v2930
    %3893 = vmatmul.mubr.bf16.gmra.mrb[0].mxu0 %v2907
    %v3894 = vpop.f32.mrb[0].mxu0
    %v3895 = vadd.f32 %v3799, %v3894
    %v3896 = vpop.f32.mrb[0].mxu0
    %v3897 = vpop.f32.mrb[0].mxu0
    %v3898 = vadd.f32 %v3802, %v3897
    %v3899 = vpop.f32.mrb[0].mxu0
    %3900 = vmatprep.mubr.bf16.mxu0 %v2931
    %3901 = vmatmul.mubr.bf16.gmra.mrb[0].mxu0 %v2908
    %v3902 = vpop.f32.mrb[0].mxu0
    %v3903 = vadd.f32 %v3807, %v3902
    %v3904 = vpop.f32.mrb[0].mxu0
    %v3905 = vpop.f32.mrb[0].mxu0
    %v3906 = vadd.f32 %v3810, %v3905
    %v3907 = vpop.f32.mrb[0].mxu0
    %3908 = vmatprep.mubr.bf16.mxu0 %v2932
    %3909 = vmatmul.mubr.bf16.gmra.mrb[0].mxu0 %v2909
    %v3910 = vpop.f32.mrb[0].mxu0
    %v3911 = vadd.f32 %v3815, %v3910
    %v3912 = vpop.f32.mrb[0].mxu0
    %v3913 = vpop.f32.mrb[0].mxu0
    %v3914 = vadd.f32 %v3818, %v3913
    %v3915 = vpop.f32.mrb[0].mxu0
    %3916 = vmatprep.mubr.bf16.mxu0 %v2933
    %3917 = vmatmul.mubr.bf16.gmra.mrb[0].mxu0 %v2910
    %v3918 = vpop.f32.mrb[0].mxu0
    %v3919 = vadd.f32 %v3823, %v3918
    %v3920 = vpop.f32.mrb[0].mxu0
    %v3921 = vpop.f32.mrb[0].mxu0
    %v3922 = vpop.f32.mrb[0].mxu0
    %3923 = vdwg.mxu0
    %3924 = vmatprep.subr.bf16.mxu0 0
    %3925 = vmatpush1.bf16.msra.mxu0 %v3460
    %3926 = vmatprep.subr.bf16.mxu0 0
    %3927 = vmatpush1.bf16.msra.mxu0 %v3461
    %3928 = vmatprep.subr.bf16.mxu0 0
    %3929 = vmatpush1.bf16.msra.mxu0 %v3462
    %3930 = vmatprep.subr.bf16.mxu0 0
    %3931 = vmatpush1.bf16.msra.mxu0 %v3463
    %3932 = vmatprep.subr.bf16.mxu0 0
    %3933 = vmatpush1.bf16.msra.mxu0 %v3464
    %3934 = vmatprep.subr.bf16.mxu0 0
    %3935 = vmatpush1.bf16.msra.mxu0 %v3465
    %3936 = vmatprep.subr.bf16.mxu0 0
    %3937 = vmatpush1.bf16.msra.mxu0 %v3466
    %3938 = vmatprep.subr.bf16.mxu0 0
    %3939 = vmatpush1.bf16.msra.mxu0 %v3467
    %3940 = vmatprep.subr.bf16.mxu0 0
    %3941 = vmatpush1.bf16.msra.mxu0 0
    %3942 = vmatprep.subr.bf16.mxu0 0
    %3943 = vmatpush1.bf16.msra.mxu0 0
    %3944 = vmatprep.subr.bf16.mxu0 0
    %3945 = vmatpush1.bf16.msra.mxu0 0
    %3946 = vmatprep.subr.bf16.mxu0 0
    %3947 = vmatpush1.bf16.msra.mxu0 0
    %3948 = vmatprep.subr.bf16.mxu0 0
    %3949 = vmatpush1.bf16.msra.mxu0 0
    %3950 = vmatprep.subr.bf16.mxu0 0
    %3951 = vmatpush1.bf16.msra.mxu0 0
    %3952 = vmatprep.subr.bf16.mxu0 0
    %3953 = vmatpush1.bf16.msra.mxu0 0
    %3954 = vmatprep.subr.bf16.mxu0 0
    %3955 = vmatpush1.bf16.msra.mxu0 0
    %3956 = vmatprep.mubr.bf16.mxu0 0
    %3957 = vmatmul.mubr.bf16.gmra.mrb[0].mxu0 %v2949
    %v3958 = vpop.f32.mrb[0].mxu0
    %v3959 = vadd.f32 %v3863, %v3958
    %v3960 = vpop.f32.mrb[0].mxu0
    %v3961 = vpop.f32.mrb[0].mxu0
    %v3962 = vadd.f32 %v3866, %v3961
    %v3963 = vpop.f32.mrb[0].mxu0
    %3964 = vmatprep.mubr.bf16.mxu0 0
    %3965 = vmatmul.mubr.bf16.gmra.mrb[0].mxu0 %v2950
    %v3966 = vpop.f32.mrb[0].mxu0
    %v3967 = vadd.f32 %v3871, %v3966
    %v3968 = vpop.f32.mrb[0].mxu0
    %v3969 = vpop.f32.mrb[0].mxu0
    %v3970 = vadd.f32 %v3874, %v3969
    %v3971 = vpop.f32.mrb[0].mxu0
    %3972 = vmatprep.mubr.bf16.mxu0 0
    %3973 = vmatmul.mubr.bf16.gmra.mrb[0].mxu0 %v2951
    %v3974 = vpop.f32.mrb[0].mxu0
    %v3975 = vadd.f32 %v3879, %v3974
    %v3976 = vpop.f32.mrb[0].mxu0
    %v3977 = vpop.f32.mrb[0].mxu0
    %v3978 = vadd.f32 %v3882, %v3977
    %v3979 = vpop.f32.mrb[0].mxu0
    %3980 = vmatprep.mubr.bf16.mxu0 0
    %3981 = vmatmul.mubr.bf16.gmra.mrb[0].mxu0 %v2952
    %v3982 = vpop.f32.mrb[0].mxu0
    %v3983 = vadd.f32 %v3887, %v3982
    %v3984 = vpop.f32.mrb[0].mxu0
    %v3985 = vpop.f32.mrb[0].mxu0
    %v3986 = vadd.f32 %v3890, %v3985
    %v3987 = vpop.f32.mrb[0].mxu0
    %3988 = vmatprep.mubr.bf16.mxu0 0
    %3989 = vmatmul.mubr.bf16.gmra.mrb[0].mxu0 %v2953
    %v3990 = vpop.f32.mrb[0].mxu0
    %v3991 = vadd.f32 %v3895, %v3990
    %v3992 = vpop.f32.mrb[0].mxu0
    %v3993 = vpop.f32.mrb[0].mxu0
    %v3994 = vadd.f32 %v3898, %v3993
    %v3995 = vpop.f32.mrb[0].mxu0
    %3996 = vmatprep.mubr.bf16.mxu0 0
    %3997 = vmatmul.mubr.bf16.gmra.mrb[0].mxu0 %v2954
    %v3998 = vpop.f32.mrb[0].mxu0
    %v3999 = vadd.f32 %v3903, %v3998
    %v4000 = vpop.f32.mrb[0].mxu0
    %v4001 = vpop.f32.mrb[0].mxu0
    %v4002 = vadd.f32 %v3906, %v4001
    %v4003 = vpop.f32.mrb[0].mxu0
    %4004 = vmatprep.mubr.bf16.mxu0 0
    %4005 = vmatmul.mubr.bf16.gmra.mrb[0].mxu0 %v2955
    %v4006 = vpop.f32.mrb[0].mxu0
    %v4007 = vadd.f32 %v3911, %v4006
    %v4008 = vpop.f32.mrb[0].mxu0
    %v4009 = vpop.f32.mrb[0].mxu0
    %v4010 = vadd.f32 %v3914, %v4009
    %v4011 = vpop.f32.mrb[0].mxu0
    %4012 = vmatprep.mubr.bf16.mxu0 0
    %4013 = vmatmul.mubr.bf16.gmra.mrb[0].mxu0 %v2956
    %v4014 = vpop.f32.mrb[0].mxu0
    %v4015 = vadd.f32 %v3919, %v4014
    %v4016 = vpop.f32.mrb[0].mxu0
    %v4017 = vpop.f32.mrb[0].mxu0
    %v4018 = vpop.f32.mrb[0].mxu0
    %4019 = vdwg.mxu0
    %v4020 = vmax.f32 %v3959, 0.0
    %v4021 = vmax.f32 %v3962, 0.0
    %v4022 = vmax.f32 %v3967, 0.0
    %v4023 = vmax.f32 %v3970, 0.0
    %v4024 = vmax.f32 %v3975, 0.0
    %v4025 = vmax.f32 %v3978, 0.0
    %v4026 = vmax.f32 %v3983, 0.0
    %v4027 = vmax.f32 %v3986, 0.0
    %v4028 = vmax.f32 %v3991, 0.0
    %v4029 = vmax.f32 %v3994, 0.0
    %v4030 = vmax.f32 %v3999, 0.0
    %v4031 = vmax.f32 %v4002, 0.0
    %v4032 = vmax.f32 %v4007, 0.0
    %v4033 = vmax.f32 %v4010, 0.0
    %v4034 = vmax.f32 %v4015, 0.0
    %v4035 = vpack.c.bf16 %v4020, %v4020
    %v4036 = vpack.c.bf16 %v4021, %v4021
    %v4037 = vpack.c.bf16 %v4022, %v4022
    %v4038 = vpack.c.bf16 %v4023, %v4023
    %v4039 = vpack.c.bf16 %v4024, %v4024
    %v4040 = vpack.c.bf16 %v4025, %v4025
    %v4041 = vpack.c.bf16 %v4026, %v4026
    %v4042 = vpack.c.bf16 %v4027, %v4027
    %v4043 = vpack.c.bf16 %v4028, %v4028
    %v4044 = vpack.c.bf16 %v4029, %v4029
    %v4045 = vpack.c.bf16 %v4030, %v4030
    %v4046 = vpack.c.bf16 %v4031, %v4031
    %v4047 = vpack.c.bf16 %v4032, %v4032
    %v4048 = vpack.c.bf16 %v4033, %v4033
    %v4049 = vpack.c.bf16 %v4034, %v4034
    %v4050 = vld [vmem:[%s8] sm:$0xf]
    %v4051 = vld [vmem:[%s8 + $0x4] sm:$0xf]
    %v4052 = vld [vmem:[%s8 + $0x8] sm:$0xf]
    %v4053 = vld [vmem:[%s8 + $0xc] sm:$0xf]
    %v4054 = vld [vmem:[%s8 + $0x10] sm:$0xf]
    %v4055 = vld [vmem:[%s8 + $0x14] sm:$0xf]
    %v4056 = vld [vmem:[%s8 + $0x18] sm:$0xf]
    %v4057 = vld [vmem:[%s8 + $0x1c] sm:$0xf]
    %v4058 = vld [vmem:[%s8 + $0x20] sm:$0xf]
    %v4059 = vld [vmem:[%s8 + $0x24] sm:$0xf]
    %v4060 = vld [vmem:[%s8 + $0x28] sm:$0xf]
    %v4061 = vld [vmem:[%s8 + $0x2c] sm:$0xf]
    %v4062 = vld [vmem:[%s8 + $0x30] sm:$0xf]
    %v4063 = vld [vmem:[%s8 + $0x34] sm:$0xf]
    %v4064 = vld [vmem:[%s8 + $0x38] sm:$0xf]
    %v4065 = vld [vmem:[%s8 + $0x3c] sm:$0xf]
    %v4066 = vld [vmem:[%s8 + $0x40] sm:$0xf]
    %v4067 = vld [vmem:[%s8 + $0x44] sm:$0xf]
    %v4068 = vld [vmem:[%s8 + $0x48] sm:$0xf]
    %v4069 = vld [vmem:[%s8 + $0x4c] sm:$0xf]
    %v4070 = vld [vmem:[%s8 + $0x50] sm:$0xf]
    %v4071 = vld [vmem:[%s8 + $0x54] sm:$0xf]
    %v4072 = vld [vmem:[%s8 + $0x58] sm:$0xf]
    %v4073 = vld [vmem:[%s8 + $0x5c] sm:$0xf]
    %v4074 = vld [vmem:[%s8 + $0x60] sm:$0xf]
    %v4075 = vld [vmem:[%s8 + $0x64] sm:$0xf]
    %v4076 = vld [vmem:[%s8 + $0x68] sm:$0xf]
    %v4077 = vld [vmem:[%s8 + $0x6c] sm:$0xf]
    %v4078 = vld [vmem:[%s8 + $0x70] sm:$0xf]
    %v4079 = vld [vmem:[%s8 + $0x74] sm:$0xf]
    %v4080 = vld [vmem:[%s8 + $0x78] sm:$0xf]
    %v4081 = vld [vmem:[%s8 + $0x7c] sm:$0xf]
    %v4082 = vld [vmem:[%s8 + $0x80] sm:$0xf]
    %v4083 = vld [vmem:[%s8 + $0x84] sm:$0xf]
    %v4084 = vld [vmem:[%s8 + $0x88] sm:$0xf]
    %v4085 = vld [vmem:[%s8 + $0x8c] sm:$0xf]
    %v4086 = vld [vmem:[%s8 + $0x90] sm:$0xf]
    %v4087 = vld [vmem:[%s8 + $0x94] sm:$0xf]
    %v4088 = vld [vmem:[%s8 + $0x98] sm:$0xf]
    %v4089 = vld [vmem:[%s8 + $0x9c] sm:$0xf]
    %v4090 = vld [vmem:[%s8 + $0xa0] sm:$0xf]
    %v4091 = vld [vmem:[%s8 + $0xa4] sm:$0xf]
    %v4092 = vld [vmem:[%s8 + $0xa8] sm:$0xf]
    %v4093 = vld [vmem:[%s8 + $0xac] sm:$0xf]
    %v4094 = vld [vmem:[%s8 + $0xb0] sm:$0xf]
    %v4095 = vld [vmem:[%s8 + $0xb4] sm:$0xf]
    %v4096 = vld [vmem:[%s8 + $0xb8] sm:$0xf]
    %v4097 = vld [vmem:[%s8 + $0xbc] sm:$0xf]
    %v4098 = vld [vmem:[%s8 + $0xc0] sm:$0xf]
    %v4099 = vld [vmem:[%s8 + $0xc4] sm:$0xf]
    %v4100 = vld [vmem:[%s8 + $0xc8] sm:$0xf]
    %v4101 = vld [vmem:[%s8 + $0xcc] sm:$0xf]
    %v4102 = vld [vmem:[%s8 + $0xd0] sm:$0xf]
    %v4103 = vld [vmem:[%s8 + $0xd4] sm:$0xf]
    %v4104 = vld [vmem:[%s8 + $0xd8] sm:$0xf]
    %v4105 = vld [vmem:[%s8 + $0xdc] sm:$0xf]
    %v4106 = vld [vmem:[%s8 + $0xe0] sm:$0xf]
    %v4107 = vld [vmem:[%s8 + $0xe4] sm:$0xf]
    %v4108 = vld [vmem:[%s8 + $0xe8] sm:$0xf]
    %v4109 = vld [vmem:[%s8 + $0xec] sm:$0xf]
    %v4110 = vld [vmem:[%s8 + $0xf0] sm:$0xf]
    %v4111 = vld [vmem:[%s8 + $0xf4] sm:$0xf]
    %v4112 = vld [vmem:[%s8 + $0xf8] sm:$0xf]
    %v4113 = vld [vmem:[%s8 + $0xfc] sm:$0xf]
    %v4114 = vld [vmem:[%s8 + $0x100] sm:$0xf]
    %v4115 = vld [vmem:[%s8 + $0x104] sm:$0xf]
    %v4116 = vld [vmem:[%s8 + $0x108] sm:$0xf]
    %v4117 = vld [vmem:[%s8 + $0x10c] sm:$0xf]
    %v4118 = vld [vmem:[%s8 + $0x110] sm:$0xf]
    %v4119 = vld [vmem:[%s8 + $0x114] sm:$0xf]
    %v4120 = vld [vmem:[%s8 + $0x118] sm:$0xf]
    %v4121 = vld [vmem:[%s8 + $0x11c] sm:$0xf]
    %v4122 = vld [vmem:[%s8 + $0x120] sm:$0xf]
    %v4123 = vld [vmem:[%s8 + $0x124] sm:$0xf]
    %v4124 = vld [vmem:[%s8 + $0x128] sm:$0xf]
    %v4125 = vld [vmem:[%s8 + $0x12c] sm:$0xf]
    %v4126 = vld [vmem:[%s8 + $0x130] sm:$0xf]
    %v4127 = vld [vmem:[%s8 + $0x134] sm:$0xf]
    %v4128 = vld [vmem:[%s8 + $0x138] sm:$0xf]
    %v4129 = vld [vmem:[%s8 + $0x13c] sm:$0xf]
    %v4130 = vld [vmem:[%s8 + $0x140] sm:$0xf]
    %v4131 = vld [vmem:[%s8 + $0x144] sm:$0xf]
    %v4132 = vld [vmem:[%s8 + $0x148] sm:$0xf]
    %v4133 = vld [vmem:[%s8 + $0x14c] sm:$0xf]
    %v4134 = vld [vmem:[%s8 + $0x150] sm:$0xf]
    %v4135 = vld [vmem:[%s8 + $0x154] sm:$0xf]
    %v4136 = vld [vmem:[%s8 + $0x158] sm:$0xf]
    %v4137 = vld [vmem:[%s8 + $0x15c] sm:$0xf]
    %v4138 = vld [vmem:[%s8 + $0x160] sm:$0xf]
    %v4139 = vld [vmem:[%s8 + $0x164] sm:$0xf]
    %v4140 = vld [vmem:[%s8 + $0x168] sm:$0xf]
    %v4141 = vld [vmem:[%s8 + $0x16c] sm:$0xf]
    %v4142 = vld [vmem:[%s8 + $0x170] sm:$0xf]
    %v4143 = vld [vmem:[%s8 + $0x174] sm:$0xf]
    %v4144 = vld [vmem:[%s8 + $0x178] sm:$0xf]
    %v4145 = vld [vmem:[%s8 + $0x17c] sm:$0xf]
    %v4146 = vld [vmem:[%s8 + $0x180] sm:$0xf]
    %v4147 = vld [vmem:[%s8 + $0x184] sm:$0xf]
    %v4148 = vld [vmem:[%s8 + $0x188] sm:$0xf]
    %v4149 = vld [vmem:[%s8 + $0x18c] sm:$0xf]
    %v4150 = vld [vmem:[%s8 + $0x190] sm:$0xf]
    %v4151 = vld [vmem:[%s8 + $0x194] sm:$0xf]
    %v4152 = vld [vmem:[%s8 + $0x198] sm:$0xf]
    %v4153 = vld [vmem:[%s8 + $0x19c] sm:$0xf]
    %v4154 = vld [vmem:[%s8 + $0x1a0] sm:$0xf]
    %v4155 = vld [vmem:[%s8 + $0x1a4] sm:$0xf]
    %v4156 = vld [vmem:[%s8 + $0x1a8] sm:$0xf]
    %v4157 = vld [vmem:[%s8 + $0x1ac] sm:$0xf]
    %v4158 = vld [vmem:[%s8 + $0x1b0] sm:$0xf]
    %v4159 = vld [vmem:[%s8 + $0x1b4] sm:$0xf]
    %v4160 = vld [vmem:[%s8 + $0x1b8] sm:$0xf]
    %v4161 = vld [vmem:[%s8 + $0x1bc] sm:$0xf]
    %v4162 = vld [vmem:[%s8 + $0x1c0] sm:$0xf]
    %v4163 = vld [vmem:[%s8 + $0x1c4] sm:$0xf]
    %v4164 = vld [vmem:[%s8 + $0x1c8] sm:$0xf]
    %v4165 = vld [vmem:[%s8 + $0x1cc] sm:$0xf]
    %v4166 = vld [vmem:[%s8 + $0x1d0] sm:$0xf]
    %v4167 = vld [vmem:[%s8 + $0x1d4] sm:$0xf]
    %v4168 = vld [vmem:[%s8 + $0x1d8] sm:$0xf]
    %v4169 = vld [vmem:[%s8 + $0x1dc] sm:$0xf]
    %v4170 = vld [vmem:[%s8 + $0x1e0] sm:$0xf]
    %v4171 = vld [vmem:[%s8 + $0x1e4] sm:$0xf]
    %v4172 = vld [vmem:[%s8 + $0x1e8] sm:$0xf]
    %v4173 = vld [vmem:[%s8 + $0x1ec] sm:$0xf]
    %v4174 = vld [vmem:[%s8 + $0x1f0] sm:$0xf]
    %v4175 = vld [vmem:[%s8 + $0x1f4] sm:$0xf]
    %v4176 = vld [vmem:[%s8 + $0x1f8] sm:$0xf]
    %v4177 = vld [vmem:[%s8 + $0x1fc] sm:$0xf]
    %v4178 = vld [vmem:[%s8 + $0x200] sm:$0xf]
    %v4179 = vld [vmem:[%s8 + $0x204] sm:$0xf]
    %v4180 = vld [vmem:[%s8 + $0x208] sm:$0xf]
    %v4181 = vld [vmem:[%s8 + $0x20c] sm:$0xf]
    %v4182 = vld [vmem:[%s8 + $0x210] sm:$0xf]
    %v4183 = vld [vmem:[%s8 + $0x214] sm:$0xf]
    %v4184 = vld [vmem:[%s8 + $0x218] sm:$0xf]
    %v4185 = vld [vmem:[%s8 + $0x21c] sm:$0xf]
    %v4186 = vld [vmem:[%s8 + $0x220] sm:$0xf]
    %v4187 = vld [vmem:[%s8 + $0x224] sm:$0xf]
    %v4188 = vld [vmem:[%s8 + $0x228] sm:$0xf]
    %v4189 = vld [vmem:[%s8 + $0x22c] sm:$0xf]
    %v4190 = vld [vmem:[%s8 + $0x230] sm:$0xf]
    %v4191 = vld [vmem:[%s8 + $0x234] sm:$0xf]
    %v4192 = vld [vmem:[%s8 + $0x238] sm:$0xf]
    %v4193 = vld [vmem:[%s8 + $0x23c] sm:$0xf]
    %v4194 = vld [vmem:[%s8 + $0x240] sm:$0xf]
    %v4195 = vld [vmem:[%s8 + $0x244] sm:$0xf]
    %v4196 = vld [vmem:[%s8 + $0x248] sm:$0xf]
    %v4197 = vld [vmem:[%s8 + $0x24c] sm:$0xf]
    %v4198 = vld [vmem:[%s8 + $0x250] sm:$0xf]
    %v4199 = vld [vmem:[%s8 + $0x254] sm:$0xf]
    %v4200 = vld [vmem:[%s8 + $0x258] sm:$0xf]
    %v4201 = vld [vmem:[%s8 + $0x25c] sm:$0xf]
    %v4202 = vld [vmem:[%s8 + $0x260] sm:$0xf]
    %v4203 = vld [vmem:[%s8 + $0x264] sm:$0xf]
    %v4204 = vld [vmem:[%s8 + $0x268] sm:$0xf]
    %v4205 = vld [vmem:[%s8 + $0x26c] sm:$0xf]
    %v4206 = vld [vmem:[%s8 + $0x270] sm:$0xf]
    %v4207 = vld [vmem:[%s8 + $0x274] sm:$0xf]
    %v4208 = vld [vmem:[%s8 + $0x278] sm:$0xf]
    %v4209 = vld [vmem:[%s8 + $0x27c] sm:$0xf]
    %v4210 = vld [vmem:[%s8 + $0x280] sm:$0xf]
    %v4211 = vld [vmem:[%s8 + $0x284] sm:$0xf]
    %v4212 = vld [vmem:[%s8 + $0x288] sm:$0xf]
    %v4213 = vld [vmem:[%s8 + $0x28c] sm:$0xf]
    %v4214 = vld [vmem:[%s8 + $0x290] sm:$0xf]
    %v4215 = vld [vmem:[%s8 + $0x294] sm:$0xf]
    %v4216 = vld [vmem:[%s8 + $0x298] sm:$0xf]
    %v4217 = vld [vmem:[%s8 + $0x29c] sm:$0xf]
    %v4218 = vld [vmem:[%s8 + $0x2a0] sm:$0xf]
    %v4219 = vld [vmem:[%s8 + $0x2a4] sm:$0xf]
    %v4220 = vld [vmem:[%s8 + $0x2a8] sm:$0xf]
    %v4221 = vld [vmem:[%s8 + $0x2ac] sm:$0xf]
    %v4222 = vld [vmem:[%s8 + $0x2b0] sm:$0xf]
    %v4223 = vld [vmem:[%s8 + $0x2b4] sm:$0xf]
    %v4224 = vld [vmem:[%s8 + $0x2b8] sm:$0xf]
    %v4225 = vld [vmem:[%s8 + $0x2bc] sm:$0xf]
    %v4226 = vld [vmem:[%s8 + $0x2c0] sm:$0xf]
    %v4227 = vld [vmem:[%s8 + $0x2c4] sm:$0xf]
    %v4228 = vld [vmem:[%s8 + $0x2c8] sm:$0xf]
    %v4229 = vld [vmem:[%s8 + $0x2cc] sm:$0xf]
    %v4230 = vld [vmem:[%s8 + $0x2d0] sm:$0xf]
    %v4231 = vld [vmem:[%s8 + $0x2d4] sm:$0xf]
    %v4232 = vld [vmem:[%s8 + $0x2d8] sm:$0xf]
    %v4233 = vld [vmem:[%s8 + $0x2dc] sm:$0xf]
    %v4234 = vld [vmem:[%s8 + $0x2e0] sm:$0xf]
    %v4235 = vld [vmem:[%s8 + $0x2e4] sm:$0xf]
    %v4236 = vld [vmem:[%s8 + $0x2e8] sm:$0xf]
    %v4237 = vld [vmem:[%s8 + $0x2ec] sm:$0xf]
    %v4238 = vld [vmem:[%s8 + $0x2f0] sm:$0xf]
    %v4239 = vld [vmem:[%s8 + $0x2f4] sm:$0xf]
    %v4240 = vld [vmem:[%s8 + $0x2f8] sm:$0xf]
    %v4241 = vld [vmem:[%s8 + $0x2fc] sm:$0xf]
    %v4242 = vld [vmem:[%s8 + $0x300] sm:$0xf]
    %v4243 = vld [vmem:[%s8 + $0x304] sm:$0xf]
    %v4244 = vld [vmem:[%s8 + $0x308] sm:$0xf]
    %v4245 = vld [vmem:[%s8 + $0x30c] sm:$0xf]
    %v4246 = vld [vmem:[%s8 + $0x310] sm:$0xf]
    %v4247 = vld [vmem:[%s8 + $0x314] sm:$0xf]
    %v4248 = vld [vmem:[%s8 + $0x318] sm:$0xf]
    %v4249 = vld [vmem:[%s8 + $0x31c] sm:$0xf]
    %v4250 = vld [vmem:[%s8 + $0x320] sm:$0xf]
    %v4251 = vld [vmem:[%s8 + $0x324] sm:$0xf]
    %v4252 = vld [vmem:[%s8 + $0x328] sm:$0xf]
    %v4253 = vld [vmem:[%s8 + $0x32c] sm:$0xf]
    %v4254 = vld [vmem:[%s8 + $0x330] sm:$0xf]
    %v4255 = vld [vmem:[%s8 + $0x334] sm:$0xf]
    %v4256 = vld [vmem:[%s8 + $0x338] sm:$0xf]
    %v4257 = vld [vmem:[%s8 + $0x33c] sm:$0xf]
    %v4258 = vld [vmem:[%s8 + $0x340] sm:$0xf]
    %v4259 = vld [vmem:[%s8 + $0x344] sm:$0xf]
    %v4260 = vld [vmem:[%s8 + $0x348] sm:$0xf]
    %v4261 = vld [vmem:[%s8 + $0x34c] sm:$0xf]
    %v4262 = vld [vmem:[%s8 + $0x350] sm:$0xf]
    %v4263 = vld [vmem:[%s8 + $0x354] sm:$0xf]
    %v4264 = vld [vmem:[%s8 + $0x358] sm:$0xf]
    %v4265 = vld [vmem:[%s8 + $0x35c] sm:$0xf]
    %v4266 = vld [vmem:[%s8 + $0x360] sm:$0xf]
    %v4267 = vld [vmem:[%s8 + $0x364] sm:$0xf]
    %v4268 = vld [vmem:[%s8 + $0x368] sm:$0xf]
    %v4269 = vld [vmem:[%s8 + $0x36c] sm:$0xf]
    %v4270 = vld [vmem:[%s8 + $0x370] sm:$0xf]
    %v4271 = vld [vmem:[%s8 + $0x374] sm:$0xf]
    %v4272 = vld [vmem:[%s8 + $0x378] sm:$0xf]
    %v4273 = vld [vmem:[%s8 + $0x37c] sm:$0xf]
    %v4274 = vld [vmem:[%s8 + $0x380] sm:$0xf]
    %v4275 = vld [vmem:[%s8 + $0x384] sm:$0xf]
    %v4276 = vld [vmem:[%s8 + $0x388] sm:$0xf]
    %v4277 = vld [vmem:[%s8 + $0x38c] sm:$0xf]
    %v4278 = vld [vmem:[%s8 + $0x390] sm:$0xf]
    %v4279 = vld [vmem:[%s8 + $0x394] sm:$0xf]
    %v4280 = vld [vmem:[%s8 + $0x398] sm:$0xf]
    %v4281 = vld [vmem:[%s8 + $0x39c] sm:$0xf]
    %v4282 = vld [vmem:[%s8 + $0x3a0] sm:$0xf]
    %v4283 = vld [vmem:[%s8 + $0x3a4] sm:$0xf]
    %v4284 = vld [vmem:[%s8 + $0x3a8] sm:$0xf]
    %v4285 = vld [vmem:[%s8 + $0x3ac] sm:$0xf]
    %v4286 = vld [vmem:[%s8 + $0x3b0] sm:$0xf]
    %v4287 = vld [vmem:[%s8 + $0x3b4] sm:$0xf]
    %v4288 = vld [vmem:[%s8 + $0x3b8] sm:$0xf]
    %v4289 = vld [vmem:[%s8 + $0x3bc] sm:$0xf]
    %v4290 = vld [vmem:[%s9] sm:$0x1]
    %v4292 = vlaneseq
    %v4293 = vshrl.u32 %v4292, 7
    %v4294 = vsub.s32 0, %v4293
    %v4295 = vrot.slane %v4290, %v4294
    %v4537 = vunpack.c.l.b16 %v4050
    %v4538 = vunpack.c.l.b16 %v4051
    %v4539 = vunpack.c.l.b16 %v4052
    %v4540 = vunpack.c.l.b16 %v4053
    %v4541 = vunpack.c.l.b16 %v4054
    %v4542 = vunpack.c.l.b16 %v4055
    %v4543 = vunpack.c.l.b16 %v4056
    %v4544 = vunpack.c.l.b16 %v4057
    %v4545 = vunpack.c.l.b16 %v4058
    %v4546 = vunpack.c.l.b16 %v4059
    %v4547 = vunpack.c.l.b16 %v4060
    %v4548 = vunpack.c.l.b16 %v4061
    %v4549 = vunpack.c.l.b16 %v4062
    %v4550 = vunpack.c.l.b16 %v4063
    %v4551 = vunpack.c.l.b16 %v4064
    %v4552 = vunpack.c.l.b16 %v4065
    %v4553 = vunpack.c.l.b16 %v4066
    %v4554 = vunpack.c.l.b16 %v4067
    %v4555 = vunpack.c.l.b16 %v4068
    %v4556 = vunpack.c.l.b16 %v4069
    %v4557 = vunpack.c.l.b16 %v4070
    %v4558 = vunpack.c.l.b16 %v4071
    %v4559 = vunpack.c.l.b16 %v4072
    %v4560 = vunpack.c.l.b16 %v4073
    %v4561 = vunpack.c.l.b16 %v4074
    %v4562 = vunpack.c.l.b16 %v4075
    %v4563 = vunpack.c.l.b16 %v4076
    %v4564 = vunpack.c.l.b16 %v4077
    %v4565 = vunpack.c.l.b16 %v4078
    %v4566 = vunpack.c.l.b16 %v4079
    %v4567 = vunpack.c.l.b16 %v4080
    %v4568 = vunpack.c.l.b16 %v4081
    %v4569 = vunpack.c.l.b16 %v4082
    %v4570 = vunpack.c.l.b16 %v4083
    %v4571 = vunpack.c.l.b16 %v4084
    %v4572 = vunpack.c.l.b16 %v4085
    %v4573 = vunpack.c.l.b16 %v4086
    %v4574 = vunpack.c.l.b16 %v4087
    %v4575 = vunpack.c.l.b16 %v4088
    %v4576 = vunpack.c.l.b16 %v4089
    %v4577 = vunpack.c.l.b16 %v4090
    %v4578 = vunpack.c.l.b16 %v4091
    %v4579 = vunpack.c.l.b16 %v4092
    %v4580 = vunpack.c.l.b16 %v4093
    %v4581 = vunpack.c.l.b16 %v4094
    %v4582 = vunpack.c.l.b16 %v4095
    %v4583 = vunpack.c.l.b16 %v4096
    %v4584 = vunpack.c.l.b16 %v4097
    %v4585 = vunpack.c.l.b16 %v4098
    %v4586 = vunpack.c.l.b16 %v4099
    %v4587 = vunpack.c.l.b16 %v4100
    %v4588 = vunpack.c.l.b16 %v4101
    %v4589 = vunpack.c.l.b16 %v4102
    %v4590 = vunpack.c.l.b16 %v4103
    %v4591 = vunpack.c.l.b16 %v4104
    %v4592 = vunpack.c.l.b16 %v4105
    %v4593 = vunpack.c.l.b16 %v4106
    %v4594 = vunpack.c.l.b16 %v4107
    %v4595 = vunpack.c.l.b16 %v4108
    %v4596 = vunpack.c.l.b16 %v4109
    %v4597 = vunpack.c.l.b16 %v4110
    %v4598 = vunpack.c.l.b16 %v4111
    %v4599 = vunpack.c.l.b16 %v4112
    %v4600 = vunpack.c.l.b16 %v4113
    %v4601 = vunpack.c.l.b16 %v4114
    %v4602 = vunpack.c.l.b16 %v4115
    %v4603 = vunpack.c.l.b16 %v4116
    %v4604 = vunpack.c.l.b16 %v4117
    %v4605 = vunpack.c.l.b16 %v4118
    %v4606 = vunpack.c.l.b16 %v4119
    %v4607 = vunpack.c.l.b16 %v4120
    %v4608 = vunpack.c.l.b16 %v4121
    %v4609 = vunpack.c.l.b16 %v4122
    %v4610 = vunpack.c.l.b16 %v4123
    %v4611 = vunpack.c.l.b16 %v4124
    %v4612 = vunpack.c.l.b16 %v4125
    %v4613 = vunpack.c.l.b16 %v4126
    %v4614 = vunpack.c.l.b16 %v4127
    %v4615 = vunpack.c.l.b16 %v4128
    %v4616 = vunpack.c.l.b16 %v4129
    %v4617 = vunpack.c.l.b16 %v4130
    %v4618 = vunpack.c.l.b16 %v4131
    %v4619 = vunpack.c.l.b16 %v4132
    %v4620 = vunpack.c.l.b16 %v4133
    %v4621 = vunpack.c.l.b16 %v4134
    %v4622 = vunpack.c.l.b16 %v4135
    %v4623 = vunpack.c.l.b16 %v4136
    %v4624 = vunpack.c.l.b16 %v4137
    %v4625 = vunpack.c.l.b16 %v4138
    %v4626 = vunpack.c.l.b16 %v4139
    %v4627 = vunpack.c.l.b16 %v4140
    %v4628 = vunpack.c.l.b16 %v4141
    %v4629 = vunpack.c.l.b16 %v4142
    %v4630 = vunpack.c.l.b16 %v4143
    %v4631 = vunpack.c.l.b16 %v4144
    %v4632 = vunpack.c.l.b16 %v4145
    %v4633 = vunpack.c.l.b16 %v4146
    %v4634 = vunpack.c.l.b16 %v4147
    %v4635 = vunpack.c.l.b16 %v4148
    %v4636 = vunpack.c.l.b16 %v4149
    %v4637 = vunpack.c.l.b16 %v4150
    %v4638 = vunpack.c.l.b16 %v4151
    %v4639 = vunpack.c.l.b16 %v4152
    %v4640 = vunpack.c.l.b16 %v4153
    %v4641 = vunpack.c.l.b16 %v4154
    %v4642 = vunpack.c.l.b16 %v4155
    %v4643 = vunpack.c.l.b16 %v4156
    %v4644 = vunpack.c.l.b16 %v4157
    %v4645 = vunpack.c.l.b16 %v4158
    %v4646 = vunpack.c.l.b16 %v4159
    %v4647 = vunpack.c.l.b16 %v4160
    %v4648 = vunpack.c.l.b16 %v4161
    %v4649 = vunpack.c.l.b16 %v4162
    %v4650 = vunpack.c.l.b16 %v4163
    %v4651 = vunpack.c.l.b16 %v4164
    %v4652 = vunpack.c.l.b16 %v4165
    %v4653 = vunpack.c.l.b16 %v4166
    %v4654 = vunpack.c.l.b16 %v4167
    %v4655 = vunpack.c.l.b16 %v4168
    %v4656 = vunpack.c.l.b16 %v4169
    %v4657 = vunpack.c.l.b16 %v4170
    %v4658 = vunpack.c.l.b16 %v4171
    %v4659 = vunpack.c.l.b16 %v4172
    %v4660 = vunpack.c.l.b16 %v4173
    %v4661 = vunpack.c.l.b16 %v4174
    %v4662 = vunpack.c.l.b16 %v4175
    %v4663 = vunpack.c.l.b16 %v4176
    %v4664 = vunpack.c.l.b16 %v4177
    %v4665 = vunpack.c.l.b16 %v4178
    %v4666 = vunpack.c.l.b16 %v4179
    %v4667 = vunpack.c.l.b16 %v4180
    %v4668 = vunpack.c.l.b16 %v4181
    %v4669 = vunpack.c.l.b16 %v4182
    %v4670 = vunpack.c.l.b16 %v4183
    %v4671 = vunpack.c.l.b16 %v4184
    %v4672 = vunpack.c.l.b16 %v4185
    %v4673 = vunpack.c.l.b16 %v4186
    %v4674 = vunpack.c.l.b16 %v4187
    %v4675 = vunpack.c.l.b16 %v4188
    %v4676 = vunpack.c.l.b16 %v4189
    %v4677 = vunpack.c.l.b16 %v4190
    %v4678 = vunpack.c.l.b16 %v4191
    %v4679 = vunpack.c.l.b16 %v4192
    %v4680 = vunpack.c.l.b16 %v4193
    %v4681 = vunpack.c.l.b16 %v4194
    %v4682 = vunpack.c.l.b16 %v4195
    %v4683 = vunpack.c.l.b16 %v4196
    %v4684 = vunpack.c.l.b16 %v4197
    %v4685 = vunpack.c.l.b16 %v4198
    %v4686 = vunpack.c.l.b16 %v4199
    %v4687 = vunpack.c.l.b16 %v4200
    %v4688 = vunpack.c.l.b16 %v4201
    %v4689 = vunpack.c.l.b16 %v4202
    %v4690 = vunpack.c.l.b16 %v4203
    %v4691 = vunpack.c.l.b16 %v4204
    %v4692 = vunpack.c.l.b16 %v4205
    %v4693 = vunpack.c.l.b16 %v4206
    %v4694 = vunpack.c.l.b16 %v4207
    %v4695 = vunpack.c.l.b16 %v4208
    %v4696 = vunpack.c.l.b16 %v4209
    %v4697 = vunpack.c.l.b16 %v4210
    %v4698 = vunpack.c.l.b16 %v4211
    %v4699 = vunpack.c.l.b16 %v4212
    %v4700 = vunpack.c.l.b16 %v4213
    %v4701 = vunpack.c.l.b16 %v4214
    %v4702 = vunpack.c.l.b16 %v4215
    %v4703 = vunpack.c.l.b16 %v4216
    %v4704 = vunpack.c.l.b16 %v4217
    %v4705 = vunpack.c.l.b16 %v4218
    %v4706 = vunpack.c.l.b16 %v4219
    %v4707 = vunpack.c.l.b16 %v4220
    %v4708 = vunpack.c.l.b16 %v4221
    %v4709 = vunpack.c.l.b16 %v4222
    %v4710 = vunpack.c.l.b16 %v4223
    %v4711 = vunpack.c.l.b16 %v4224
    %v4712 = vunpack.c.l.b16 %v4225
    %v4713 = vunpack.c.l.b16 %v4226
    %v4714 = vunpack.c.l.b16 %v4227
    %v4715 = vunpack.c.l.b16 %v4228
    %v4716 = vunpack.c.l.b16 %v4229
    %v4717 = vunpack.c.l.b16 %v4230
    %v4718 = vunpack.c.l.b16 %v4231
    %v4719 = vunpack.c.l.b16 %v4232
    %v4720 = vunpack.c.l.b16 %v4233
    %v4721 = vunpack.c.l.b16 %v4234
    %v4722 = vunpack.c.l.b16 %v4235
    %v4723 = vunpack.c.l.b16 %v4236
    %v4724 = vunpack.c.l.b16 %v4237
    %v4725 = vunpack.c.l.b16 %v4238
    %v4726 = vunpack.c.l.b16 %v4239
    %v4727 = vunpack.c.l.b16 %v4240
    %v4728 = vunpack.c.l.b16 %v4241
    %v4729 = vunpack.c.l.b16 %v4242
    %v4730 = vunpack.c.l.b16 %v4243
    %v4731 = vunpack.c.l.b16 %v4244
    %v4732 = vunpack.c.l.b16 %v4245
    %v4733 = vunpack.c.l.b16 %v4246
    %v4734 = vunpack.c.l.b16 %v4247
    %v4735 = vunpack.c.l.b16 %v4248
    %v4736 = vunpack.c.l.b16 %v4249
    %v4737 = vunpack.c.l.b16 %v4250
    %v4738 = vunpack.c.l.b16 %v4251
    %v4739 = vunpack.c.l.b16 %v4252
    %v4740 = vunpack.c.l.b16 %v4253
    %v4741 = vunpack.c.l.b16 %v4254
    %v4742 = vunpack.c.l.b16 %v4255
    %v4743 = vunpack.c.l.b16 %v4256
    %v4744 = vunpack.c.l.b16 %v4257
    %v4745 = vunpack.c.l.b16 %v4258
    %v4746 = vunpack.c.l.b16 %v4259
    %v4747 = vunpack.c.l.b16 %v4260
    %v4748 = vunpack.c.l.b16 %v4261
    %v4749 = vunpack.c.l.b16 %v4262
    %v4750 = vunpack.c.l.b16 %v4263
    %v4751 = vunpack.c.l.b16 %v4264
    %v4752 = vunpack.c.l.b16 %v4265
    %v4753 = vunpack.c.l.b16 %v4266
    %v4754 = vunpack.c.l.b16 %v4267
    %v4755 = vunpack.c.l.b16 %v4268
    %v4756 = vunpack.c.l.b16 %v4269
    %v4757 = vunpack.c.l.b16 %v4270
    %v4758 = vunpack.c.l.b16 %v4271
    %v4759 = vunpack.c.l.b16 %v4272
    %v4760 = vunpack.c.l.b16 %v4273
    %v4761 = vunpack.c.l.b16 %v4274
    %v4762 = vunpack.c.l.b16 %v4275
    %v4763 = vunpack.c.l.b16 %v4276
    %v4764 = vunpack.c.l.b16 %v4277
    %v4765 = vunpack.c.l.b16 %v4278
    %v4766 = vunpack.c.l.b16 %v4279
    %v4767 = vunpack.c.l.b16 %v4280
    %v4768 = vunpack.c.l.b16 %v4281
    %v4769 = vunpack.c.l.b16 %v4282
    %v4770 = vunpack.c.l.b16 %v4283
    %v4771 = vunpack.c.l.b16 %v4284
    %v4772 = vunpack.c.l.b16 %v4285
    %v4773 = vunpack.c.l.b16 %v4286
    %v4774 = vunpack.c.l.b16 %v4287
    %v4775 = vunpack.c.l.b16 %v4288
    %v4776 = vunpack.c.l.b16 %v4289
    %v4777 = vpack.c.b16 %v4538, %v4537
    %v4778 = vpack.c.b16 %v4540, %v4539
    %v4779 = vpack.c.b16 %v4542, %v4541
    %v4780 = vpack.c.b16 %v4544, %v4543
    %v4781 = vpack.c.b16 %v4546, %v4545
    %v4782 = vpack.c.b16 %v4548, %v4547
    %v4783 = vpack.c.b16 %v4550, %v4549
    %v4784 = vpack.c.b16 %v4552, %v4551
    %v4785 = vpack.c.b16 %v4554, %v4553
    %v4786 = vpack.c.b16 %v4556, %v4555
    %v4787 = vpack.c.b16 %v4558, %v4557
    %v4788 = vpack.c.b16 %v4560, %v4559
    %v4789 = vpack.c.b16 %v4562, %v4561
    %v4790 = vpack.c.b16 %v4564, %v4563
    %v4791 = vpack.c.b16 %v4566, %v4565
    %v4792 = vpack.c.b16 %v4568, %v4567
    %v4793 = vpack.c.b16 %v4570, %v4569
    %v4794 = vpack.c.b16 %v4572, %v4571
    %v4795 = vpack.c.b16 %v4574, %v4573
    %v4796 = vpack.c.b16 %v4576, %v4575
    %v4797 = vpack.c.b16 %v4578, %v4577
    %v4798 = vpack.c.b16 %v4580, %v4579
    %v4799 = vpack.c.b16 %v4582, %v4581
    %v4800 = vpack.c.b16 %v4584, %v4583
    %v4801 = vpack.c.b16 %v4586, %v4585
    %v4802 = vpack.c.b16 %v4588, %v4587
    %v4803 = vpack.c.b16 %v4590, %v4589
    %v4804 = vpack.c.b16 %v4592, %v4591
    %v4805 = vpack.c.b16 %v4594, %v4593
    %v4806 = vpack.c.b16 %v4596, %v4595
    %v4807 = vpack.c.b16 %v4598, %v4597
    %v4808 = vpack.c.b16 %v4600, %v4599
    %v4809 = vpack.c.b16 %v4602, %v4601
    %v4810 = vpack.c.b16 %v4604, %v4603
    %v4811 = vpack.c.b16 %v4606, %v4605
    %v4812 = vpack.c.b16 %v4608, %v4607
    %v4813 = vpack.c.b16 %v4610, %v4609
    %v4814 = vpack.c.b16 %v4612, %v4611
    %v4815 = vpack.c.b16 %v4614, %v4613
    %v4816 = vpack.c.b16 %v4616, %v4615
    %v4817 = vpack.c.b16 %v4618, %v4617
    %v4818 = vpack.c.b16 %v4620, %v4619
    %v4819 = vpack.c.b16 %v4622, %v4621
    %v4820 = vpack.c.b16 %v4624, %v4623
    %v4821 = vpack.c.b16 %v4626, %v4625
    %v4822 = vpack.c.b16 %v4628, %v4627
    %v4823 = vpack.c.b16 %v4630, %v4629
    %v4824 = vpack.c.b16 %v4632, %v4631
    %v4825 = vpack.c.b16 %v4634, %v4633
    %v4826 = vpack.c.b16 %v4636, %v4635
    %v4827 = vpack.c.b16 %v4638, %v4637
    %v4828 = vpack.c.b16 %v4640, %v4639
    %v4829 = vpack.c.b16 %v4642, %v4641
    %v4830 = vpack.c.b16 %v4644, %v4643
    %v4831 = vpack.c.b16 %v4646, %v4645
    %v4832 = vpack.c.b16 %v4648, %v4647
    %v4833 = vpack.c.b16 %v4650, %v4649
    %v4834 = vpack.c.b16 %v4652, %v4651
    %v4835 = vpack.c.b16 %v4654, %v4653
    %v4836 = vpack.c.b16 %v4656, %v4655
    %v4837 = vpack.c.b16 %v4658, %v4657
    %v4838 = vpack.c.b16 %v4660, %v4659
    %v4839 = vpack.c.b16 %v4662, %v4661
    %v4840 = vpack.c.b16 %v4664, %v4663
    %v4841 = vpack.c.b16 %v4666, %v4665
    %v4842 = vpack.c.b16 %v4668, %v4667
    %v4843 = vpack.c.b16 %v4670, %v4669
    %v4844 = vpack.c.b16 %v4672, %v4671
    %v4845 = vpack.c.b16 %v4674, %v4673
    %v4846 = vpack.c.b16 %v4676, %v4675
    %v4847 = vpack.c.b16 %v4678, %v4677
    %v4848 = vpack.c.b16 %v4680, %v4679
    %v4849 = vpack.c.b16 %v4682, %v4681
    %v4850 = vpack.c.b16 %v4684, %v4683
    %v4851 = vpack.c.b16 %v4686, %v4685
    %v4852 = vpack.c.b16 %v4688, %v4687
    %v4853 = vpack.c.b16 %v4690, %v4689
    %v4854 = vpack.c.b16 %v4692, %v4691
    %v4855 = vpack.c.b16 %v4694, %v4693
    %v4856 = vpack.c.b16 %v4696, %v4695
    %v4857 = vpack.c.b16 %v4698, %v4697
    %v4858 = vpack.c.b16 %v4700, %v4699
    %v4859 = vpack.c.b16 %v4702, %v4701
    %v4860 = vpack.c.b16 %v4704, %v4703
    %v4861 = vpack.c.b16 %v4706, %v4705
    %v4862 = vpack.c.b16 %v4708, %v4707
    %v4863 = vpack.c.b16 %v4710, %v4709
    %v4864 = vpack.c.b16 %v4712, %v4711
    %v4865 = vpack.c.b16 %v4714, %v4713
    %v4866 = vpack.c.b16 %v4716, %v4715
    %v4867 = vpack.c.b16 %v4718, %v4717
    %v4868 = vpack.c.b16 %v4720, %v4719
    %v4869 = vpack.c.b16 %v4722, %v4721
    %v4870 = vpack.c.b16 %v4724, %v4723
    %v4871 = vpack.c.b16 %v4726, %v4725
    %v4872 = vpack.c.b16 %v4728, %v4727
    %v4873 = vpack.c.b16 %v4730, %v4729
    %v4874 = vpack.c.b16 %v4732, %v4731
    %v4875 = vpack.c.b16 %v4734, %v4733
    %v4876 = vpack.c.b16 %v4736, %v4735
    %v4877 = vpack.c.b16 %v4738, %v4737
    %v4878 = vpack.c.b16 %v4740, %v4739
    %v4879 = vpack.c.b16 %v4742, %v4741
    %v4880 = vpack.c.b16 %v4744, %v4743
    %v4881 = vpack.c.b16 %v4746, %v4745
    %v4882 = vpack.c.b16 %v4748, %v4747
    %v4883 = vpack.c.b16 %v4750, %v4749
    %v4884 = vpack.c.b16 %v4752, %v4751
    %v4885 = vpack.c.b16 %v4754, %v4753
    %v4886 = vpack.c.b16 %v4756, %v4755
    %v4887 = vpack.c.b16 %v4758, %v4757
    %v4888 = vpack.c.b16 %v4760, %v4759
    %v4889 = vpack.c.b16 %v4762, %v4761
    %v4890 = vpack.c.b16 %v4764, %v4763
    %v4891 = vpack.c.b16 %v4766, %v4765
    %v4892 = vpack.c.b16 %v4768, %v4767
    %v4893 = vpack.c.b16 %v4770, %v4769
    %v4894 = vpack.c.b16 %v4772, %v4771
    %v4895 = vpack.c.b16 %v4774, %v4773
    %v4896 = vpack.c.b16 %v4776, %v4775
    %5017 = vmatprep.subr.bf16.mxu0 0
    %5018 = vmatpush1.bf16.msra.mxu0 %v4777
    %5019 = vmatprep.subr.bf16.mxu0 0
    %5020 = vmatpush1.bf16.msra.mxu0 %v4778
    %5021 = vmatprep.subr.bf16.mxu0 0
    %5022 = vmatpush1.bf16.msra.mxu0 %v4779
    %5023 = vmatprep.subr.bf16.mxu0 0
    %5024 = vmatpush1.bf16.msra.mxu0 %v4780
    %5025 = vmatprep.subr.bf16.mxu0 0
    %5026 = vmatpush1.bf16.msra.mxu0 %v4781
    %5027 = vmatprep.subr.bf16.mxu0 0
    %5028 = vmatpush1.bf16.msra.mxu0 %v4782
    %5029 = vmatprep.subr.bf16.mxu0 0
    %5030 = vmatpush1.bf16.msra.mxu0 %v4783
    %5031 = vmatprep.subr.bf16.mxu0 0
    %5032 = vmatpush1.bf16.msra.mxu0 %v4784
    %5033 = vmatprep.subr.bf16.mxu0 0
    %5034 = vmatpush1.bf16.msra.mxu0 %v4785
    %5035 = vmatprep.subr.bf16.mxu0 0
    %5036 = vmatpush1.bf16.msra.mxu0 %v4786
    %5037 = vmatprep.subr.bf16.mxu0 0
    %5038 = vmatpush1.bf16.msra.mxu0 %v4787
    %5039 = vmatprep.subr.bf16.mxu0 0
    %5040 = vmatpush1.bf16.msra.mxu0 %v4788
    %5041 = vmatprep.subr.bf16.mxu0 0
    %5042 = vmatpush1.bf16.msra.mxu0 %v4789
    %5043 = vmatprep.subr.bf16.mxu0 0
    %5044 = vmatpush1.bf16.msra.mxu0 %v4790
    %5045 = vmatprep.subr.bf16.mxu0 0
    %5046 = vmatpush1.bf16.msra.mxu0 %v4791
    %5047 = vmatprep.subr.bf16.mxu0 0
    %5048 = vmatpush1.bf16.msra.mxu0 %v4792
    %5049 = vmatprep.mubr.bf16.mxu0 %v4036
    %5050 = vmatmul.mubr.bf16.gmra.mrb[0].mxu0 %v4035
    %v5051 = vpop.f32.mrb[0].mxu0
    %v5052 = vadd.f32 %v4295, %v5051
    %v5053 = vpop.f32.mrb[0].mxu0
    %v5054 = vpop.f32.mrb[0].mxu0
    %v5055 = vpop.f32.mrb[0].mxu0
    %5056 = vdwg.mxu0
    %5057 = vmatprep.subr.bf16.mxu0 0
    %5058 = vmatpush1.bf16.msra.mxu0 %v4793
    %5059 = vmatprep.subr.bf16.mxu0 0
    %5060 = vmatpush1.bf16.msra.mxu0 %v4794
    %5061 = vmatprep.subr.bf16.mxu0 0
    %5062 = vmatpush1.bf16.msra.mxu0 %v4795
    %5063 = vmatprep.subr.bf16.mxu0 0
    %5064 = vmatpush1.bf16.msra.mxu0 %v4796
    %5065 = vmatprep.subr.bf16.mxu0 0
    %5066 = vmatpush1.bf16.msra.mxu0 %v4797
    %5067 = vmatprep.subr.bf16.mxu0 0
    %5068 = vmatpush1.bf16.msra.mxu0 %v4798
    %5069 = vmatprep.subr.bf16.mxu0 0
    %5070 = vmatpush1.bf16.msra.mxu0 %v4799
    %5071 = vmatprep.subr.bf16.mxu0 0
    %5072 = vmatpush1.bf16.msra.mxu0 %v4800
    %5073 = vmatprep.subr.bf16.mxu0 0
    %5074 = vmatpush1.bf16.msra.mxu0 %v4801
    %5075 = vmatprep.subr.bf16.mxu0 0
    %5076 = vmatpush1.bf16.msra.mxu0 %v4802
    %5077 = vmatprep.subr.bf16.mxu0 0
    %5078 = vmatpush1.bf16.msra.mxu0 %v4803
    %5079 = vmatprep.subr.bf16.mxu0 0
    %5080 = vmatpush1.bf16.msra.mxu0 %v4804
    %5081 = vmatprep.subr.bf16.mxu0 0
    %5082 = vmatpush1.bf16.msra.mxu0 %v4805
    %5083 = vmatprep.subr.bf16.mxu0 0
    %5084 = vmatpush1.bf16.msra.mxu0 %v4806
    %5085 = vmatprep.subr.bf16.mxu0 0
    %5086 = vmatpush1.bf16.msra.mxu0 %v4807
    %5087 = vmatprep.subr.bf16.mxu0 0
    %5088 = vmatpush1.bf16.msra.mxu0 %v4808
    %5089 = vmatprep.mubr.bf16.mxu0 %v4038
    %5090 = vmatmul.mubr.bf16.gmra.mrb[0].mxu0 %v4037
    %v5091 = vpop.f32.mrb[0].mxu0
    %v5092 = vadd.f32 %v5052, %v5091
    %v5093 = vpop.f32.mrb[0].mxu0
    %v5094 = vpop.f32.mrb[0].mxu0
    %v5095 = vpop.f32.mrb[0].mxu0
    %5096 = vdwg.mxu0
    %5097 = vmatprep.subr.bf16.mxu0 0
    %5098 = vmatpush1.bf16.msra.mxu0 %v4809
    %5099 = vmatprep.subr.bf16.mxu0 0
    %5100 = vmatpush1.bf16.msra.mxu0 %v4810
    %5101 = vmatprep.subr.bf16.mxu0 0
    %5102 = vmatpush1.bf16.msra.mxu0 %v4811
    %5103 = vmatprep.subr.bf16.mxu0 0
    %5104 = vmatpush1.bf16.msra.mxu0 %v4812
    %5105 = vmatprep.subr.bf16.mxu0 0
    %5106 = vmatpush1.bf16.msra.mxu0 %v4813
    %5107 = vmatprep.subr.bf16.mxu0 0
    %5108 = vmatpush1.bf16.msra.mxu0 %v4814
    %5109 = vmatprep.subr.bf16.mxu0 0
    %5110 = vmatpush1.bf16.msra.mxu0 %v4815
    %5111 = vmatprep.subr.bf16.mxu0 0
    %5112 = vmatpush1.bf16.msra.mxu0 %v4816
    %5113 = vmatprep.subr.bf16.mxu0 0
    %5114 = vmatpush1.bf16.msra.mxu0 %v4817
    %5115 = vmatprep.subr.bf16.mxu0 0
    %5116 = vmatpush1.bf16.msra.mxu0 %v4818
    %5117 = vmatprep.subr.bf16.mxu0 0
    %5118 = vmatpush1.bf16.msra.mxu0 %v4819
    %5119 = vmatprep.subr.bf16.mxu0 0
    %5120 = vmatpush1.bf16.msra.mxu0 %v4820
    %5121 = vmatprep.subr.bf16.mxu0 0
    %5122 = vmatpush1.bf16.msra.mxu0 %v4821
    %5123 = vmatprep.subr.bf16.mxu0 0
    %5124 = vmatpush1.bf16.msra.mxu0 %v4822
    %5125 = vmatprep.subr.bf16.mxu0 0
    %5126 = vmatpush1.bf16.msra.mxu0 %v4823
    %5127 = vmatprep.subr.bf16.mxu0 0
    %5128 = vmatpush1.bf16.msra.mxu0 %v4824
    %5129 = vmatprep.mubr.bf16.mxu0 %v4040
    %5130 = vmatmul.mubr.bf16.gmra.mrb[0].mxu0 %v4039
    %v5131 = vpop.f32.mrb[0].mxu0
    %v5132 = vadd.f32 %v5092, %v5131
    %v5133 = vpop.f32.mrb[0].mxu0
    %v5134 = vpop.f32.mrb[0].mxu0
    %v5135 = vpop.f32.mrb[0].mxu0
    %5136 = vdwg.mxu0
    %5137 = vmatprep.subr.bf16.mxu0 0
    %5138 = vmatpush1.bf16.msra.mxu0 %v4825
    %5139 = vmatprep.subr.bf16.mxu0 0
    %5140 = vmatpush1.bf16.msra.mxu0 %v4826
    %5141 = vmatprep.subr.bf16.mxu0 0
    %5142 = vmatpush1.bf16.msra.mxu0 %v4827
    %5143 = vmatprep.subr.bf16.mxu0 0
    %5144 = vmatpush1.bf16.msra.mxu0 %v4828
    %5145 = vmatprep.subr.bf16.mxu0 0
    %5146 = vmatpush1.bf16.msra.mxu0 %v4829
    %5147 = vmatprep.subr.bf16.mxu0 0
    %5148 = vmatpush1.bf16.msra.mxu0 %v4830
    %5149 = vmatprep.subr.bf16.mxu0 0
    %5150 = vmatpush1.bf16.msra.mxu0 %v4831
    %5151 = vmatprep.subr.bf16.mxu0 0
    %5152 = vmatpush1.bf16.msra.mxu0 %v4832
    %5153 = vmatprep.subr.bf16.mxu0 0
    %5154 = vmatpush1.bf16.msra.mxu0 %v4833
    %5155 = vmatprep.subr.bf16.mxu0 0
    %5156 = vmatpush1.bf16.msra.mxu0 %v4834
    %5157 = vmatprep.subr.bf16.mxu0 0
    %5158 = vmatpush1.bf16.msra.mxu0 %v4835
    %5159 = vmatprep.subr.bf16.mxu0 0
    %5160 = vmatpush1.bf16.msra.mxu0 %v4836
    %5161 = vmatprep.subr.bf16.mxu0 0
    %5162 = vmatpush1.bf16.msra.mxu0 %v4837
    %5163 = vmatprep.subr.bf16.mxu0 0
    %5164 = vmatpush1.bf16.msra.mxu0 %v4838
    %5165 = vmatprep.subr.bf16.mxu0 0
    %5166 = vmatpush1.bf16.msra.mxu0 %v4839
    %5167 = vmatprep.subr.bf16.mxu0 0
    %5168 = vmatpush1.bf16.msra.mxu0 %v4840
    %5169 = vmatprep.mubr.bf16.mxu0 %v4042
    %5170 = vmatmul.mubr.bf16.gmra.mrb[0].mxu0 %v4041
    %v5171 = vpop.f32.mrb[0].mxu0
    %v5172 = vadd.f32 %v5132, %v5171
    %v5173 = vpop.f32.mrb[0].mxu0
    %v5174 = vpop.f32.mrb[0].mxu0
    %v5175 = vpop.f32.mrb[0].mxu0
    %5176 = vdwg.mxu0
    %5177 = vmatprep.subr.bf16.mxu0 0
    %5178 = vmatpush1.bf16.msra.mxu0 %v4841
    %5179 = vmatprep.subr.bf16.mxu0 0
    %5180 = vmatpush1.bf16.msra.mxu0 %v4842
    %5181 = vmatprep.subr.bf16.mxu0 0
    %5182 = vmatpush1.bf16.msra.mxu0 %v4843
    %5183 = vmatprep.subr.bf16.mxu0 0
    %5184 = vmatpush1.bf16.msra.mxu0 %v4844
    %5185 = vmatprep.subr.bf16.mxu0 0
    %5186 = vmatpush1.bf16.msra.mxu0 %v4845
    %5187 = vmatprep.subr.bf16.mxu0 0
    %5188 = vmatpush1.bf16.msra.mxu0 %v4846
    %5189 = vmatprep.subr.bf16.mxu0 0
    %5190 = vmatpush1.bf16.msra.mxu0 %v4847
    %5191 = vmatprep.subr.bf16.mxu0 0
    %5192 = vmatpush1.bf16.msra.mxu0 %v4848
    %5193 = vmatprep.subr.bf16.mxu0 0
    %5194 = vmatpush1.bf16.msra.mxu0 %v4849
    %5195 = vmatprep.subr.bf16.mxu0 0
    %5196 = vmatpush1.bf16.msra.mxu0 %v4850
    %5197 = vmatprep.subr.bf16.mxu0 0
    %5198 = vmatpush1.bf16.msra.mxu0 %v4851
    %5199 = vmatprep.subr.bf16.mxu0 0
    %5200 = vmatpush1.bf16.msra.mxu0 %v4852
    %5201 = vmatprep.subr.bf16.mxu0 0
    %5202 = vmatpush1.bf16.msra.mxu0 %v4853
    %5203 = vmatprep.subr.bf16.mxu0 0
    %5204 = vmatpush1.bf16.msra.mxu0 %v4854
    %5205 = vmatprep.subr.bf16.mxu0 0
    %5206 = vmatpush1.bf16.msra.mxu0 %v4855
    %5207 = vmatprep.subr.bf16.mxu0 0
    %5208 = vmatpush1.bf16.msra.mxu0 %v4856
    %5209 = vmatprep.mubr.bf16.mxu0 %v4044
    %5210 = vmatmul.mubr.bf16.gmra.mrb[0].mxu0 %v4043
    %v5211 = vpop.f32.mrb[0].mxu0
    %v5212 = vadd.f32 %v5172, %v5211
    %v5213 = vpop.f32.mrb[0].mxu0
    %v5214 = vpop.f32.mrb[0].mxu0
    %v5215 = vpop.f32.mrb[0].mxu0
    %5216 = vdwg.mxu0
    %5217 = vmatprep.subr.bf16.mxu0 0
    %5218 = vmatpush1.bf16.msra.mxu0 %v4857
    %5219 = vmatprep.subr.bf16.mxu0 0
    %5220 = vmatpush1.bf16.msra.mxu0 %v4858
    %5221 = vmatprep.subr.bf16.mxu0 0
    %5222 = vmatpush1.bf16.msra.mxu0 %v4859
    %5223 = vmatprep.subr.bf16.mxu0 0
    %5224 = vmatpush1.bf16.msra.mxu0 %v4860
    %5225 = vmatprep.subr.bf16.mxu0 0
    %5226 = vmatpush1.bf16.msra.mxu0 %v4861
    %5227 = vmatprep.subr.bf16.mxu0 0
    %5228 = vmatpush1.bf16.msra.mxu0 %v4862
    %5229 = vmatprep.subr.bf16.mxu0 0
    %5230 = vmatpush1.bf16.msra.mxu0 %v4863
    %5231 = vmatprep.subr.bf16.mxu0 0
    %5232 = vmatpush1.bf16.msra.mxu0 %v4864
    %5233 = vmatprep.subr.bf16.mxu0 0
    %5234 = vmatpush1.bf16.msra.mxu0 %v4865
    %5235 = vmatprep.subr.bf16.mxu0 0
    %5236 = vmatpush1.bf16.msra.mxu0 %v4866
    %5237 = vmatprep.subr.bf16.mxu0 0
    %5238 = vmatpush1.bf16.msra.mxu0 %v4867
    %5239 = vmatprep.subr.bf16.mxu0 0
    %5240 = vmatpush1.bf16.msra.mxu0 %v4868
    %5241 = vmatprep.subr.bf16.mxu0 0
    %5242 = vmatpush1.bf16.msra.mxu0 %v4869
    %5243 = vmatprep.subr.bf16.mxu0 0
    %5244 = vmatpush1.bf16.msra.mxu0 %v4870
    %5245 = vmatprep.subr.bf16.mxu0 0
    %5246 = vmatpush1.bf16.msra.mxu0 %v4871
    %5247 = vmatprep.subr.bf16.mxu0 0
    %5248 = vmatpush1.bf16.msra.mxu0 %v4872
    %5249 = vmatprep.mubr.bf16.mxu0 %v4046
    %5250 = vmatmul.mubr.bf16.gmra.mrb[0].mxu0 %v4045
    %v5251 = vpop.f32.mrb[0].mxu0
    %v5252 = vadd.f32 %v5212, %v5251
    %v5253 = vpop.f32.mrb[0].mxu0
    %v5254 = vpop.f32.mrb[0].mxu0
    %v5255 = vpop.f32.mrb[0].mxu0
    %5256 = vdwg.mxu0
    %5257 = vmatprep.subr.bf16.mxu0 0
    %5258 = vmatpush1.bf16.msra.mxu0 %v4873
    %5259 = vmatprep.subr.bf16.mxu0 0
    %5260 = vmatpush1.bf16.msra.mxu0 %v4874
    %5261 = vmatprep.subr.bf16.mxu0 0
    %5262 = vmatpush1.bf16.msra.mxu0 %v4875
    %5263 = vmatprep.subr.bf16.mxu0 0
    %5264 = vmatpush1.bf16.msra.mxu0 %v4876
    %5265 = vmatprep.subr.bf16.mxu0 0
    %5266 = vmatpush1.bf16.msra.mxu0 %v4877
    %5267 = vmatprep.subr.bf16.mxu0 0
    %5268 = vmatpush1.bf16.msra.mxu0 %v4878
    %5269 = vmatprep.subr.bf16.mxu0 0
    %5270 = vmatpush1.bf16.msra.mxu0 %v4879
    %5271 = vmatprep.subr.bf16.mxu0 0
    %5272 = vmatpush1.bf16.msra.mxu0 %v4880
    %5273 = vmatprep.subr.bf16.mxu0 0
    %5274 = vmatpush1.bf16.msra.mxu0 %v4881
    %5275 = vmatprep.subr.bf16.mxu0 0
    %5276 = vmatpush1.bf16.msra.mxu0 %v4882
    %5277 = vmatprep.subr.bf16.mxu0 0
    %5278 = vmatpush1.bf16.msra.mxu0 %v4883
    %5279 = vmatprep.subr.bf16.mxu0 0
    %5280 = vmatpush1.bf16.msra.mxu0 %v4884
    %5281 = vmatprep.subr.bf16.mxu0 0
    %5282 = vmatpush1.bf16.msra.mxu0 %v4885
    %5283 = vmatprep.subr.bf16.mxu0 0
    %5284 = vmatpush1.bf16.msra.mxu0 %v4886
    %5285 = vmatprep.subr.bf16.mxu0 0
    %5286 = vmatpush1.bf16.msra.mxu0 %v4887
    %5287 = vmatprep.subr.bf16.mxu0 0
    %5288 = vmatpush1.bf16.msra.mxu0 %v4888
    %5289 = vmatprep.mubr.bf16.mxu0 %v4048
    %5290 = vmatmul.mubr.bf16.gmra.mrb[0].mxu0 %v4047
    %v5291 = vpop.f32.mrb[0].mxu0
    %v5292 = vadd.f32 %v5252, %v5291
    %v5293 = vpop.f32.mrb[0].mxu0
    %v5294 = vpop.f32.mrb[0].mxu0
    %v5295 = vpop.f32.mrb[0].mxu0
    %5296 = vdwg.mxu0
    %5297 = vmatprep.subr.bf16.mxu0 0
    %5298 = vmatpush1.bf16.msra.mxu0 %v4889
    %5299 = vmatprep.subr.bf16.mxu0 0
    %5300 = vmatpush1.bf16.msra.mxu0 %v4890
    %5301 = vmatprep.subr.bf16.mxu0 0
    %5302 = vmatpush1.bf16.msra.mxu0 %v4891
    %5303 = vmatprep.subr.bf16.mxu0 0
    %5304 = vmatpush1.bf16.msra.mxu0 %v4892
    %5305 = vmatprep.subr.bf16.mxu0 0
    %5306 = vmatpush1.bf16.msra.mxu0 %v4893
    %5307 = vmatprep.subr.bf16.mxu0 0
    %5308 = vmatpush1.bf16.msra.mxu0 %v4894
    %5309 = vmatprep.subr.bf16.mxu0 0
    %5310 = vmatpush1.bf16.msra.mxu0 %v4895
    %5311 = vmatprep.subr.bf16.mxu0 0
    %5312 = vmatpush1.bf16.msra.mxu0 %v4896
    %5313 = vmatprep.subr.bf16.mxu0 0
    %5314 = vmatpush1.bf16.msra.mxu0 0
    %5315 = vmatprep.subr.bf16.mxu0 0
    %5316 = vmatpush1.bf16.msra.mxu0 0
    %5317 = vmatprep.subr.bf16.mxu0 0
    %5318 = vmatpush1.bf16.msra.mxu0 0
    %5319 = vmatprep.subr.bf16.mxu0 0
    %5320 = vmatpush1.bf16.msra.mxu0 0
    %5321 = vmatprep.subr.bf16.mxu0 0
    %5322 = vmatpush1.bf16.msra.mxu0 0
    %5323 = vmatprep.subr.bf16.mxu0 0
    %5324 = vmatpush1.bf16.msra.mxu0 0
    %5325 = vmatprep.subr.bf16.mxu0 0
    %5326 = vmatpush1.bf16.msra.mxu0 0
    %5327 = vmatprep.subr.bf16.mxu0 0
    %5328 = vmatpush1.bf16.msra.mxu0 0
    %5329 = vmatprep.mubr.bf16.mxu0 0
    %5330 = vmatmul.mubr.bf16.gmra.mrb[0].mxu0 %v4049
    %v5331 = vpop.f32.mrb[0].mxu0
    %v5332 = vadd.f32 %v5292, %v5331
    %v5333 = vpop.f32.mrb[0].mxu0
    %v5334 = vpop.f32.mrb[0].mxu0
    %v5335 = vpop.f32.mrb[0].mxu0
    %5336 = vdwg.mxu0
    %v5337 = vmax.f32 %v5332, 0.0
    %v5338 = vpack.c.bf16 %v5337, %v5337
    %v5339 = vld [vmem:[%s10] sm:$0xf]
    %v5340 = vld [vmem:[%s10 + $0x4] sm:$0xf]
    %v5341 = vld [vmem:[%s10 + $0x8] sm:$0xf]
    %v5342 = vld [vmem:[%s10 + $0xc] sm:$0xf]
    %v5343 = vld [vmem:[%s10 + $0x10] sm:$0xf]
    %v5344 = vld [vmem:[%s10 + $0x14] sm:$0xf]
    %v5345 = vld [vmem:[%s10 + $0x18] sm:$0xf]
    %v5346 = vld [vmem:[%s10 + $0x1c] sm:$0xf]
    %v5347 = vld [vmem:[%s10 + $0x20] sm:$0xf]
    %v5348 = vld [vmem:[%s10 + $0x24] sm:$0xf]
    %v5349 = vld [vmem:[%s10 + $0x28] sm:$0xf]
    %v5350 = vld [vmem:[%s10 + $0x2c] sm:$0xf]
    %v5351 = vld [vmem:[%s10 + $0x30] sm:$0xf]
    %v5352 = vld [vmem:[%s10 + $0x34] sm:$0xf]
    %v5353 = vld [vmem:[%s10 + $0x38] sm:$0xf]
    %v5354 = vld [vmem:[%s10 + $0x3c] sm:$0xf]
    %v5355 = vld [vmem:[%s11] sm:$0x1]
    %v5357 = vlaneseq
    %v5358 = vshrl.u32 %v5357, 7
    %v5359 = vsub.s32 0, %v5358
    %v5360 = vrot.slane %v5355, %v5359
    %v5378 = vunpack.c.l.b16 %v5339
    %v5379 = vunpack.c.l.b16 %v5340
    %v5380 = vunpack.c.l.b16 %v5341
    %v5381 = vunpack.c.l.b16 %v5342
    %v5382 = vunpack.c.l.b16 %v5343
    %v5383 = vunpack.c.l.b16 %v5344
    %v5384 = vunpack.c.l.b16 %v5345
    %v5385 = vunpack.c.l.b16 %v5346
    %v5386 = vunpack.c.l.b16 %v5347
    %v5387 = vunpack.c.l.b16 %v5348
    %v5388 = vunpack.c.l.b16 %v5349
    %v5389 = vunpack.c.l.b16 %v5350
    %v5390 = vunpack.c.l.b16 %v5351
    %v5391 = vunpack.c.l.b16 %v5352
    %v5392 = vunpack.c.l.b16 %v5353
    %v5393 = vunpack.c.l.b16 %v5354
    %v5394 = vpack.c.b16 %v5379, %v5378
    %v5395 = vpack.c.b16 %v5381, %v5380
    %v5396 = vpack.c.b16 %v5383, %v5382
    %v5397 = vpack.c.b16 %v5385, %v5384
    %v5398 = vpack.c.b16 %v5387, %v5386
    %v5399 = vpack.c.b16 %v5389, %v5388
    %v5400 = vpack.c.b16 %v5391, %v5390
    %v5401 = vpack.c.b16 %v5393, %v5392
    %5410 = vmatprep.subr.bf16.mxu0 0
    %5411 = vmatpush1.bf16.msra.mxu0 %v5394
    %5412 = vmatprep.subr.bf16.mxu0 0
    %5413 = vmatpush1.bf16.msra.mxu0 %v5395
    %5414 = vmatprep.subr.bf16.mxu0 0
    %5415 = vmatpush1.bf16.msra.mxu0 %v5396
    %5416 = vmatprep.subr.bf16.mxu0 0
    %5417 = vmatpush1.bf16.msra.mxu0 %v5397
    %5418 = vmatprep.subr.bf16.mxu0 0
    %5419 = vmatpush1.bf16.msra.mxu0 %v5398
    %5420 = vmatprep.subr.bf16.mxu0 0
    %5421 = vmatpush1.bf16.msra.mxu0 %v5399
    %5422 = vmatprep.subr.bf16.mxu0 0
    %5423 = vmatpush1.bf16.msra.mxu0 %v5400
    %5424 = vmatprep.subr.bf16.mxu0 0
    %5425 = vmatpush1.bf16.msra.mxu0 %v5401
    %5426 = vmatprep.subr.bf16.mxu0 0
    %5427 = vmatpush1.bf16.msra.mxu0 0
    %5428 = vmatprep.subr.bf16.mxu0 0
    %5429 = vmatpush1.bf16.msra.mxu0 0
    %5430 = vmatprep.subr.bf16.mxu0 0
    %5431 = vmatpush1.bf16.msra.mxu0 0
    %5432 = vmatprep.subr.bf16.mxu0 0
    %5433 = vmatpush1.bf16.msra.mxu0 0
    %5434 = vmatprep.subr.bf16.mxu0 0
    %5435 = vmatpush1.bf16.msra.mxu0 0
    %5436 = vmatprep.subr.bf16.mxu0 0
    %5437 = vmatpush1.bf16.msra.mxu0 0
    %5438 = vmatprep.subr.bf16.mxu0 0
    %5439 = vmatpush1.bf16.msra.mxu0 0
    %5440 = vmatprep.subr.bf16.mxu0 0
    %5441 = vmatpush1.bf16.msra.mxu0 0
    %5442 = vmatprep.mubr.bf16.mxu0 0
    %5443 = vmatmul.mubr.bf16.gmra.mrb[0].mxu0 %v5338
    %v5444 = vpop.f32.mrb[0].mxu0
    %v5445 = vadd.f32 %v5360, %v5444
    %v5446 = vpop.f32.mrb[0].mxu0
    %v5447 = vpop.f32.mrb[0].mxu0
    %v5448 = vpop.f32.mrb[0].mxu0
    %5449 = vdwg.mxu0
    %5450 = vst [vmem:[%s12] sm:$0xff] %v5445
    // Predicated region
    $region62: #{cnn_forward.1} parent=1 // pred_check
      _
    $region63: #{cnn_forward.1} parent=1 // pred_check_branch
      %5452 = sbr.rel (0) target = $region65
    $region64: #{cnn_forward.1} parent=1 // pred_region
      _
    $region65: #{cnn_forward.1} parent=1 // pred_fallthru
      _
    // Predicated region
    $region66: #{cnn_forward.1} parent=1 // pred_check
      _
    $region67: #{cnn_forward.1} parent=1 // pred_check_branch
      %5454 = sbr.rel (0) target = $region69
    $region68: #{cnn_forward.1} parent=1 // pred_region
      _
    $region69: #{cnn_forward.1} parent=1 // pred_fallthru
      _
    %5455 = vsyncpa [#allocation3], 1
    %5456 = vsyncpa [#allocation5], 1

</llo_original>
